<compile_context>
chip_gen: v5e
topology: v5e:2x2
jax: 0.10.0
libtpu: 0.0.40
codegen_flags: <defaults>
</compile_context>

<pallas_src>
import math

import jax
import jax.numpy as jnp
from jax.experimental import pallas as pl
from jax.experimental.pallas import tpu as pltpu

# ---------------- small synthetic BERT config (lane-dense) ----------------
VOCAB = 100
TYPE_VOCAB = 2
MAX_POS = 64
HIDDEN = 128            # fills all 128 lanes of a vreg
NUM_HEADS = 4
HEAD_DIM = HIDDEN // NUM_HEADS
INTERMEDIATE = 256
NUM_LAYERS = 2
NUM_CLASSES = 2
LN_EPS = 1e-12


# ---------------- in-kernel helpers ----------------
def _layernorm(x, g, b):
    mu = jnp.mean(x, axis=-1, keepdims=True)
    var = jnp.mean((x - mu) ** 2, axis=-1, keepdims=True)
    return (x - mu) * jax.lax.rsqrt(var + LN_EPS) * g + b


def _gelu(x):
    # TODO(synk): tanh-approx GELU; PyTorch/BERT exact erf-GELU differs by ~1e-3.
    c = math.sqrt(2.0 / math.pi)
    return 0.5 * x * (1.0 + jnp.tanh(c * (x + 0.044715 * x * x * x)))


def _bf16(x):
    return x.astype(jnp.bfloat16)


# ---------------- single fused kernel ----------------
def _bert_fused_kernel(emb_ref, mask_ref, eg_ref, eb_ref,
                       wq_ref, bq_ref, wk_ref, bk_ref, wv_ref, bv_ref,
                       wo_ref, bo_ref, l1g_ref, l1b_ref,
                       wi_ref, bi_ref, w2_ref, b2_ref, l2g_ref, l2b_ref,
                       wp_ref, bp_ref, wc_ref, bc_ref, out_ref):
    B = mask_ref.shape[0]
    S = mask_ref.shape[2]
    scale = 1.0 / math.sqrt(HEAD_DIM)

    # embedding LayerNorm on the full [B*S, H] token slab
    x = _layernorm(emb_ref[...], eg_ref[...], eb_ref[...])          # [B*S, H] f32
    mask = mask_ref[...]                                            # [B, 1, S] additive

    for l in range(NUM_LAYERS):                                     # static unroll; x stays on-chip
        xb = _bf16(x)
        # QKV projections on the whole batch (bf16 weights, f32 accumulate)
        q = (jnp.dot(xb, wq_ref[l], preferred_element_type=jnp.float32)
             + bq_ref[l]) * scale
        k = jnp.dot(xb, wk_ref[l], preferred_element_type=jnp.float32) + bk_ref[l]
        v = jnp.dot(xb, wv_ref[l], preferred_element_type=jnp.float32) + bv_ref[l]

        # attention (per example, per head; all tiny — static loops)
        ctx_rows = []
        for b in range(B):
            qb, kb, vb = q[b*S:(b+1)*S], k[b*S:(b+1)*S], v[b*S:(b+1)*S]
            mb = mask[b]                                            # [1, S]
            head_ctx = []
            for h in range(NUM_HEADS):
                sl = slice(h * HEAD_DIM, (h + 1) * HEAD_DIM)
                s_ = jnp.dot(qb[:, sl], kb[:, sl].T,
                             preferred_element_type=jnp.float32) + mb
                s_ = s_ - jnp.max(s_, axis=-1, keepdims=True)
                p = jnp.exp(s_)
                p = p * pl.reciprocal(jnp.sum(p, axis=-1, keepdims=True), approx=True)
                head_ctx.append(jnp.dot(p, vb[:, sl],
                                        preferred_element_type=jnp.float32))
            ctx_rows.append(jnp.concatenate(head_ctx, axis=-1))     # [S, H]
        ctx = jnp.concatenate(ctx_rows, axis=0)                     # [B*S, H]

        # single full-width output projection (K = H)
        attn = jnp.dot(_bf16(ctx), wo_ref[l],
                       preferred_element_type=jnp.float32) + bo_ref[l]
        # BERT-internal dropouts are identity in eval mode.
        h1 = _layernorm(x + attn, l1g_ref[l], l1b_ref[l])

        inter = _gelu(jnp.dot(_bf16(h1), wi_ref[l],
                              preferred_element_type=jnp.float32) + bi_ref[l])
        ffn = jnp.dot(_bf16(inter), w2_ref[l],
                      preferred_element_type=jnp.float32) + b2_ref[l]
        x = _layernorm(h1 + ffn, l2g_ref[l], l2b_ref[l])

    # pooler (tanh dense on [CLS]) + dropout(eval=identity) + fc head
    cls = jnp.concatenate([x[b*S:b*S+1, :] for b in range(B)], axis=0)  # [B, H]
    pooled = jnp.tanh(jnp.dot(_bf16(cls), wp_ref[...],
                              preferred_element_type=jnp.float32) + bp_ref[...])
    logits = jnp.dot(_bf16(pooled), wc_ref[...],
                     preferred_element_type=jnp.float32) + bc_ref[...]
    out_ref[...] = logits.astype(out_ref.dtype)


# ---------------- wrapper ----------------
def _vspec(x):
    n = x.ndim
    return pl.BlockSpec(x.shape, lambda i, _n=n: (0,) * _n)


def bert_classifier_forward(params, input_ids, attention_mask):
    B, S = input_ids.shape
    # Embedding lookups are glue (gather) in plain JAX.
    pos_ids = jnp.arange(S)
    emb = (params["word_emb"][input_ids]
           + params["pos_emb"][pos_ids][None, :, :]
           + params["type_emb"][0][None, None, :]).astype(jnp.float32)
    emb2 = emb.reshape(B * S, HIDDEN)                       # token slab for the kernel

    # Additive mask [B, 1, S]: 0 for real tokens, -1e4 for padding.
    mask_add = ((1.0 - attention_mask.astype(jnp.float32)) * -10000.0)[:, None, :]

    st = params["stacked"]
    inputs = [emb2, mask_add, params["emb_ln_g"], params["emb_ln_b"],
              st["wq"], st["bq"], st["wk"], st["bk"], st["wv"], st["bv"],
              st["wo"], st["bo"], st["ln1_g"], st["ln1_b"],
              st["wi"], st["bi"], st["wo2"], st["bo2"],
              st["ln2_g"], st["ln2_b"],
              params["wp"], params["bp"], params["wc"], params["bc"]]

    return pl.pallas_call(
        _bert_fused_kernel,
        out_shape=jax.ShapeDtypeStruct((B, NUM_CLASSES), jnp.float32),
        grid=(1,),
        in_specs=[_vspec(a) for a in inputs],
        out_specs=pl.BlockSpec((B, NUM_CLASSES), lambda i: (0, 0)),
        compiler_params=pltpu.CompilerParams(dimension_semantics=("arbitrary",)),
    )(*inputs)


# ---------------- parameter init (deterministic, synthetic) ----------------
def init_params(key):
    keys = iter(jax.random.split(key, 32))

    def dense(din, dout):
        w = (0.02 * jax.random.normal(next(keys), (din, dout), jnp.float32)
             ).astype(jnp.bfloat16)                          # bf16 weights for the MXU
        b = jnp.zeros((1, dout), jnp.float32)
        return w, b

    params = {
        "word_emb": 0.02 * jax.random.normal(next(keys), (VOCAB, HIDDEN), jnp.float32),
        "pos_emb": 0.02 * jax.random.normal(next(keys), (MAX_POS, HIDDEN), jnp.float32),
        "type_emb": 0.02 * jax.random.normal(next(keys), (TYPE_VOCAB, HIDDEN), jnp.float32),
        "emb_ln_g": jnp.ones((1, HIDDEN), jnp.float32),
        "emb_ln_b": jnp.zeros((1, HIDDEN), jnp.float32),
    }
    layers = []
    for _ in range(NUM_LAYERS):
        wq, bq = dense(HIDDEN, HIDDEN)
        wk, bk = dense(HIDDEN, HIDDEN)
        wv, bv = dense(HIDDEN, HIDDEN)
        wo, bo = dense(HIDDEN, HIDDEN)
        wi, bi = dense(HIDDEN, INTERMEDIATE)
        wo2, bo2 = dense(INTERMEDIATE, HIDDEN)
        layers.append(dict(
            wq=wq, bq=bq, wk=wk, bk=bk, wv=wv, bv=bv, wo=wo, bo=bo,
            ln1_g=jnp.ones((1, HIDDEN), jnp.float32),
            ln1_b=jnp.zeros((1, HIDDEN), jnp.float32),
            wi=wi, bi=bi, wo2=wo2, bo2=bo2,
            ln2_g=jnp.ones((1, HIDDEN), jnp.float32),
            ln2_b=jnp.zeros((1, HIDDEN), jnp.float32),
        ))
    # Stack per-layer params on a leading L axis so the fused kernel can index them.
    params["stacked"] = {k: jnp.stack([lp[k] for lp in layers], axis=0)
                         for k in layers[0]}
    params["wp"], params["bp"] = dense(HIDDEN, HIDDEN)          # BERT pooler
    params["wc"], params["bc"] = dense(HIDDEN, NUM_CLASSES)     # self.fc
    return params


if __name__ == "__main__":
    key = jax.random.PRNGKey(0)
    pkey, ikey = jax.random.split(key)
    params = init_params(pkey)

    B, S = 2, 16
    input_ids = jax.random.randint(ikey, (B, S), 0, VOCAB, dtype=jnp.int32)
    # example 0 fully valid, example 1 has 3 padding tokens
    attention_mask = (jnp.arange(S)[None, :] < jnp.array([[S], [S - 3]])).astype(jnp.float32)

    forward = jax.jit(bert_classifier_forward)
    logits = forward(params, input_ids, attention_mask)
    jax.block_until_ready(logits)
    assert logits.shape == (B, NUM_CLASSES)
    assert bool(jnp.all(jnp.isfinite(logits)))
    print("KERNEL_OK")
</pallas_src>

<mosaic_0001>
module attributes {stable_mosaic.version = 11 : i64} {
  func.func @_bert_fused_kernel(%arg0: i32, %arg1: memref<32x128xf32, #tpu.memory_space<vmem>>, %arg2: memref<2x1x16xf32, #tpu.memory_space<vmem>>, %arg3: memref<1x128xf32, #tpu.memory_space<vmem>>, %arg4: memref<1x128xf32, #tpu.memory_space<vmem>>, %arg5: memref<2x128x128xbf16, #tpu.memory_space<vmem>>, %arg6: memref<2x1x128xf32, #tpu.memory_space<vmem>>, %arg7: memref<2x128x128xbf16, #tpu.memory_space<vmem>>, %arg8: memref<2x1x128xf32, #tpu.memory_space<vmem>>, %arg9: memref<2x128x128xbf16, #tpu.memory_space<vmem>>, %arg10: memref<2x1x128xf32, #tpu.memory_space<vmem>>, %arg11: memref<2x128x128xbf16, #tpu.memory_space<vmem>>, %arg12: memref<2x1x128xf32, #tpu.memory_space<vmem>>, %arg13: memref<2x1x128xf32, #tpu.memory_space<vmem>>, %arg14: memref<2x1x128xf32, #tpu.memory_space<vmem>>, %arg15: memref<2x128x256xbf16, #tpu.memory_space<vmem>>, %arg16: memref<2x1x256xf32, #tpu.memory_space<vmem>>, %arg17: memref<2x256x128xbf16, #tpu.memory_space<vmem>>, %arg18: memref<2x1x128xf32, #tpu.memory_space<vmem>>, %arg19: memref<2x1x128xf32, #tpu.memory_space<vmem>>, %arg20: memref<2x1x128xf32, #tpu.memory_space<vmem>>, %arg21: memref<128x128xbf16, #tpu.memory_space<vmem>>, %arg22: memref<1x128xf32, #tpu.memory_space<vmem>>, %arg23: memref<128x2xbf16, #tpu.memory_space<vmem>>, %arg24: memref<1x2xf32, #tpu.memory_space<vmem>>, %arg25: memref<2x2xf32, #tpu.memory_space<vmem>>) attributes {dimension_semantics = [#tpu.dimension_semantics<arbitrary>], iteration_bounds = array<i64: 1>, scalar_prefetch = 0 : i64, scratch_operands = 0 : i64, tpu.core_type = #tpu.core_type<tc>, window_params = [{pipeline_mode = #tpu.pipeline_mode<synchronous>, transform_indices = @transform_0, window_bounds = array<i64: 32, 128>}, {pipeline_mode = #tpu.pipeline_mode<synchronous>, transform_indices = @transform_1, window_bounds = array<i64: 2, 1, 16>}, {pipeline_mode = #tpu.pipeline_mode<synchronous>, transform_indices = @transform_2, window_bounds = array<i64: 1, 128>}, {pipeline_mode = #tpu.pipeline_mode<synchronous>, transform_indices = @transform_3, window_bounds = array<i64: 1, 128>}, {pipeline_mode = #tpu.pipeline_mode<synchronous>, transform_indices = @transform_4, window_bounds = array<i64: 2, 128, 128>}, {pipeline_mode = #tpu.pipeline_mode<synchronous>, transform_indices = @transform_5, window_bounds = array<i64: 2, 1, 128>}, {pipeline_mode = #tpu.pipeline_mode<synchronous>, transform_indices = @transform_6, window_bounds = array<i64: 2, 128, 128>}, {pipeline_mode = #tpu.pipeline_mode<synchronous>, transform_indices = @transform_7, window_bounds = array<i64: 2, 1, 128>}, {pipeline_mode = #tpu.pipeline_mode<synchronous>, transform_indices = @transform_8, window_bounds = array<i64: 2, 128, 128>}, {pipeline_mode = #tpu.pipeline_mode<synchronous>, transform_indices = @transform_9, window_bounds = array<i64: 2, 1, 128>}, {pipeline_mode = #tpu.pipeline_mode<synchronous>, transform_indices = @transform_10, window_bounds = array<i64: 2, 128, 128>}, {pipeline_mode = #tpu.pipeline_mode<synchronous>, transform_indices = @transform_11, window_bounds = array<i64: 2, 1, 128>}, {pipeline_mode = #tpu.pipeline_mode<synchronous>, transform_indices = @transform_12, window_bounds = array<i64: 2, 1, 128>}, {pipeline_mode = #tpu.pipeline_mode<synchronous>, transform_indices = @transform_13, window_bounds = array<i64: 2, 1, 128>}, {pipeline_mode = #tpu.pipeline_mode<synchronous>, transform_indices = @transform_14, window_bounds = array<i64: 2, 128, 256>}, {pipeline_mode = #tpu.pipeline_mode<synchronous>, transform_indices = @transform_15, window_bounds = array<i64: 2, 1, 256>}, {pipeline_mode = #tpu.pipeline_mode<synchronous>, transform_indices = @transform_16, window_bounds = array<i64: 2, 256, 128>}, {pipeline_mode = #tpu.pipeline_mode<synchronous>, transform_indices = @transform_17, window_bounds = array<i64: 2, 1, 128>}, {pipeline_mode = #tpu.pipeline_mode<synchronous>, transform_indices = @transform_18, window_bounds = array<i64: 2, 1, 128>}, {pipeline_mode = #tpu.pipeline_mode<synchronous>, transform_indices = @transform_19, window_bounds = array<i64: 2, 1, 128>}, {pipeline_mode = #tpu.pipeline_mode<synchronous>, transform_indices = @transform_20, window_bounds = array<i64: 128, 128>}, {pipeline_mode = #tpu.pipeline_mode<synchronous>, transform_indices = @transform_21, window_bounds = array<i64: 1, 128>}, {pipeline_mode = #tpu.pipeline_mode<synchronous>, transform_indices = @transform_22, window_bounds = array<i64: 128, 2>}, {pipeline_mode = #tpu.pipeline_mode<synchronous>, transform_indices = @transform_23, window_bounds = array<i64: 1, 2>}, {pipeline_mode = #tpu.pipeline_mode<synchronous>, transform_indices = @transform_24, window_bounds = array<i64: 2, 2>}]} {
    %c0 = arith.constant 0 : index
    %c0_0 = arith.constant 0 : index
    %0 = vector.load %arg1[%c0, %c0_0] : memref<32x128xf32, #tpu.memory_space<vmem>>, vector<32x128xf32>
    %c0_1 = arith.constant 0 : index
    %c0_2 = arith.constant 0 : index
    %1 = vector.load %arg3[%c0_1, %c0_2] : memref<1x128xf32, #tpu.memory_space<vmem>>, vector<1x128xf32>
    %c0_3 = arith.constant 0 : index
    %c0_4 = arith.constant 0 : index
    %2 = vector.load %arg4[%c0_3, %c0_4] : memref<1x128xf32, #tpu.memory_space<vmem>>, vector<1x128xf32>
    %cst = arith.constant dense<0.000000e+00> : vector<32xf32>
    %3 = vector.multi_reduction <add>, %0, %cst [1] : vector<32x128xf32> to vector<32xf32>
    %4 = vector.shape_cast %3 : vector<32xf32> to vector<32x1xf32>
    %cst_5 = arith.constant 1.280000e+02 : f32
    %5 = vector.broadcast %cst_5 : f32 to vector<32x1xf32>
    %6 = arith.divf %4, %5 : vector<32x1xf32>
    %7 = vector.broadcast %6 : vector<32x1xf32> to vector<32x128xf32>
    %8 = arith.subf %0, %7 : vector<32x128xf32>
    %9 = arith.mulf %8, %8 : vector<32x128xf32>
    %cst_6 = arith.constant dense<0.000000e+00> : vector<32xf32>
    %10 = vector.multi_reduction <add>, %9, %cst_6 [1] : vector<32x128xf32> to vector<32xf32>
    %11 = vector.shape_cast %10 : vector<32xf32> to vector<32x1xf32>
    %cst_7 = arith.constant 1.280000e+02 : f32
    %12 = vector.broadcast %cst_7 : f32 to vector<32x1xf32>
    %13 = arith.divf %11, %12 : vector<32x1xf32>
    %14 = vector.broadcast %6 : vector<32x1xf32> to vector<32x128xf32>
    %15 = arith.subf %0, %14 : vector<32x128xf32>
    %cst_8 = arith.constant 9.99999996E-13 : f32
    %16 = vector.broadcast %cst_8 : f32 to vector<32x1xf32>
    %17 = arith.addf %13, %16 : vector<32x1xf32>
    %18 = math.rsqrt %17 : vector<32x1xf32>
    %19 = vector.broadcast %18 : vector<32x1xf32> to vector<32x128xf32>
    %20 = arith.mulf %15, %19 : vector<32x128xf32>
    %21 = vector.broadcast %1 : vector<1x128xf32> to vector<32x128xf32>
    %22 = arith.mulf %20, %21 : vector<32x128xf32>
    %23 = vector.broadcast %2 : vector<1x128xf32> to vector<32x128xf32>
    %24 = arith.addf %22, %23 : vector<32x128xf32>
    %c0_9 = arith.constant 0 : index
    %c0_10 = arith.constant 0 : index
    %c0_11 = arith.constant 0 : index
    %25 = vector.load %arg2[%c0_9, %c0_10, %c0_11] : memref<2x1x16xf32, #tpu.memory_space<vmem>>, vector<2x1x16xf32>
    %26 = arith.truncf %24 : vector<32x128xf32> to vector<32x128xbf16>
    %c0_12 = arith.constant 0 : index
    %c0_13 = arith.constant 0 : index
    %c0_14 = arith.constant 0 : index
    %27 = vector.load %arg5[%c0_12, %c0_13, %c0_14] : memref<2x128x128xbf16, #tpu.memory_space<vmem>>, vector<1x128x128xbf16>
    %28 = vector.shape_cast %27 : vector<1x128x128xbf16> to vector<128x128xbf16>
    %cst_15 = arith.constant dense<0.000000e+00> : vector<32x128xf32>
    %29 = tpu.matmul %26, %28, %cst_15 {dimension_numbers = #tpu.dot_dimension_numbers<[1], [0], [0], [1], [0, 0, 1, 1], [], []>} : vector<32x128xbf16>, vector<128x128xbf16>, vector<32x128xf32> -> vector<32x128xf32>
    %c0_16 = arith.constant 0 : index
    %c0_17 = arith.constant 0 : index
    %c0_18 = arith.constant 0 : index
    %30 = vector.load %arg6[%c0_16, %c0_17, %c0_18] : memref<2x1x128xf32, #tpu.memory_space<vmem>>, vector<1x1x128xf32>
    %31 = vector.shape_cast %30 : vector<1x1x128xf32> to vector<1x128xf32>
    %32 = vector.broadcast %31 : vector<1x128xf32> to vector<32x128xf32>
    %33 = arith.addf %29, %32 : vector<32x128xf32>
    %cst_19 = arith.constant 0.176776692 : f32
    %34 = vector.broadcast %cst_19 : f32 to vector<32x128xf32>
    %35 = arith.mulf %33, %34 : vector<32x128xf32>
    %c0_20 = arith.constant 0 : index
    %c0_21 = arith.constant 0 : index
    %c0_22 = arith.constant 0 : index
    %36 = vector.load %arg7[%c0_20, %c0_21, %c0_22] : memref<2x128x128xbf16, #tpu.memory_space<vmem>>, vector<1x128x128xbf16>
    %37 = vector.shape_cast %36 : vector<1x128x128xbf16> to vector<128x128xbf16>
    %cst_23 = arith.constant dense<0.000000e+00> : vector<32x128xf32>
    %38 = tpu.matmul %26, %37, %cst_23 {dimension_numbers = #tpu.dot_dimension_numbers<[1], [0], [0], [1], [0, 0, 1, 1], [], []>} : vector<32x128xbf16>, vector<128x128xbf16>, vector<32x128xf32> -> vector<32x128xf32>
    %c0_24 = arith.constant 0 : index
    %c0_25 = arith.constant 0 : index
    %c0_26 = arith.constant 0 : index
    %39 = vector.load %arg8[%c0_24, %c0_25, %c0_26] : memref<2x1x128xf32, #tpu.memory_space<vmem>>, vector<1x1x128xf32>
    %40 = vector.shape_cast %39 : vector<1x1x128xf32> to vector<1x128xf32>
    %41 = vector.broadcast %40 : vector<1x128xf32> to vector<32x128xf32>
    %42 = arith.addf %38, %41 : vector<32x128xf32>
    %c0_27 = arith.constant 0 : index
    %c0_28 = arith.constant 0 : index
    %c0_29 = arith.constant 0 : index
    %43 = vector.load %arg9[%c0_27, %c0_28, %c0_29] : memref<2x128x128xbf16, #tpu.memory_space<vmem>>, vector<1x128x128xbf16>
    %44 = vector.shape_cast %43 : vector<1x128x128xbf16> to vector<128x128xbf16>
    %cst_30 = arith.constant dense<0.000000e+00> : vector<32x128xf32>
    %45 = tpu.matmul %26, %44, %cst_30 {dimension_numbers = #tpu.dot_dimension_numbers<[1], [0], [0], [1], [0, 0, 1, 1], [], []>} : vector<32x128xbf16>, vector<128x128xbf16>, vector<32x128xf32> -> vector<32x128xf32>
    %c0_31 = arith.constant 0 : index
    %c0_32 = arith.constant 0 : index
    %c0_33 = arith.constant 0 : index
    %46 = vector.load %arg10[%c0_31, %c0_32, %c0_33] : memref<2x1x128xf32, #tpu.memory_space<vmem>>, vector<1x1x128xf32>
    %47 = vector.shape_cast %46 : vector<1x1x128xf32> to vector<1x128xf32>
    %48 = vector.broadcast %47 : vector<1x128xf32> to vector<32x128xf32>
    %49 = arith.addf %45, %48 : vector<32x128xf32>
    %50 = vector.extract_strided_slice %35 {offsets = [0, 0], sizes = [16, 128], strides = [1, 1]} : vector<32x128xf32> to vector<16x128xf32>
    %51 = vector.extract_strided_slice %42 {offsets = [0, 0], sizes = [16, 128], strides = [1, 1]} : vector<32x128xf32> to vector<16x128xf32>
    %52 = vector.extract_strided_slice %49 {offsets = [0, 0], sizes = [16, 128], strides = [1, 1]} : vector<32x128xf32> to vector<16x128xf32>
    %53 = vector.extract_strided_slice %25 {offsets = [0, 0, 0], sizes = [1, 1, 16], strides = [1, 1, 1]} : vector<2x1x16xf32> to vector<1x1x16xf32>
    %54 = vector.shape_cast %53 : vector<1x1x16xf32> to vector<1x16xf32>
    %55 = vector.extract_strided_slice %50 {offsets = [0, 0], sizes = [16, 32], strides = [1, 1]} : vector<16x128xf32> to vector<16x32xf32>
    %56 = vector.extract_strided_slice %51 {offsets = [0, 0], sizes = [16, 32], strides = [1, 1]} : vector<16x128xf32> to vector<16x32xf32>
    %57 = tpu.transpose %56, [1, 0] : vector<16x32xf32> -> vector<32x16xf32>
    %cst_34 = arith.constant dense<0.000000e+00> : vector<16x16xf32>
    %58 = tpu.matmul %55, %57, %cst_34 {dimension_numbers = #tpu.dot_dimension_numbers<[1], [0], [0], [1], [0, 0, 1, 1], [], []>} : vector<16x32xf32>, vector<32x16xf32>, vector<16x16xf32> -> vector<16x16xf32>
    %59 = vector.broadcast %54 : vector<1x16xf32> to vector<16x16xf32>
    %60 = arith.addf %58, %59 : vector<16x16xf32>
    %cst_35 = arith.constant dense<0xFF800000> : vector<16xf32>
    %61 = vector.multi_reduction <maximumf>, %60, %cst_35 [1] : vector<16x16xf32> to vector<16xf32>
    %62 = vector.shape_cast %61 : vector<16xf32> to vector<16x1xf32>
    %63 = vector.broadcast %62 : vector<16x1xf32> to vector<16x16xf32>
    %64 = arith.subf %60, %63 : vector<16x16xf32>
    %65 = math.exp %64 : vector<16x16xf32>
    %cst_36 = arith.constant dense<0.000000e+00> : vector<16xf32>
    %66 = vector.multi_reduction <add>, %65, %cst_36 [1] : vector<16x16xf32> to vector<16xf32>
    %67 = vector.shape_cast %66 : vector<16xf32> to vector<16x1xf32>
    %68 = tpu.reciprocal %67 {approx = true} : vector<16x1xf32> -> vector<16x1xf32>
    %69 = vector.broadcast %68 : vector<16x1xf32> to vector<16x16xf32>
    %70 = arith.mulf %65, %69 : vector<16x16xf32>
    %71 = vector.extract_strided_slice %52 {offsets = [0, 0], sizes = [16, 32], strides = [1, 1]} : vector<16x128xf32> to vector<16x32xf32>
    %cst_37 = arith.constant dense<0.000000e+00> : vector<16x32xf32>
    %72 = tpu.matmul %70, %71, %cst_37 {dimension_numbers = #tpu.dot_dimension_numbers<[1], [0], [0], [1], [0, 0, 1, 1], [], []>} : vector<16x16xf32>, vector<16x32xf32>, vector<16x32xf32> -> vector<16x32xf32>
    %73 = vector.extract_strided_slice %50 {offsets = [0, 32], sizes = [16, 32], strides = [1, 1]} : vector<16x128xf32> to vector<16x32xf32>
    %74 = vector.extract_strided_slice %51 {offsets = [0, 32], sizes = [16, 32], strides = [1, 1]} : vector<16x128xf32> to vector<16x32xf32>
    %75 = tpu.transpose %74, [1, 0] : vector<16x32xf32> -> vector<32x16xf32>
    %cst_38 = arith.constant dense<0.000000e+00> : vector<16x16xf32>
    %76 = tpu.matmul %73, %75, %cst_38 {dimension_numbers = #tpu.dot_dimension_numbers<[1], [0], [0], [1], [0, 0, 1, 1], [], []>} : vector<16x32xf32>, vector<32x16xf32>, vector<16x16xf32> -> vector<16x16xf32>
    %77 = vector.broadcast %54 : vector<1x16xf32> to vector<16x16xf32>
    %78 = arith.addf %76, %77 : vector<16x16xf32>
    %cst_39 = arith.constant dense<0xFF800000> : vector<16xf32>
    %79 = vector.multi_reduction <maximumf>, %78, %cst_39 [1] : vector<16x16xf32> to vector<16xf32>
    %80 = vector.shape_cast %79 : vector<16xf32> to vector<16x1xf32>
    %81 = vector.broadcast %80 : vector<16x1xf32> to vector<16x16xf32>
    %82 = arith.subf %78, %81 : vector<16x16xf32>
    %83 = math.exp %82 : vector<16x16xf32>
    %cst_40 = arith.constant dense<0.000000e+00> : vector<16xf32>
    %84 = vector.multi_reduction <add>, %83, %cst_40 [1] : vector<16x16xf32> to vector<16xf32>
    %85 = vector.shape_cast %84 : vector<16xf32> to vector<16x1xf32>
    %86 = tpu.reciprocal %85 {approx = true} : vector<16x1xf32> -> vector<16x1xf32>
    %87 = vector.broadcast %86 : vector<16x1xf32> to vector<16x16xf32>
    %88 = arith.mulf %83, %87 : vector<16x16xf32>
    %89 = vector.extract_strided_slice %52 {offsets = [0, 32], sizes = [16, 32], strides = [1, 1]} : vector<16x128xf32> to vector<16x32xf32>
    %cst_41 = arith.constant dense<0.000000e+00> : vector<16x32xf32>
    %90 = tpu.matmul %88, %89, %cst_41 {dimension_numbers = #tpu.dot_dimension_numbers<[1], [0], [0], [1], [0, 0, 1, 1], [], []>} : vector<16x16xf32>, vector<16x32xf32>, vector<16x32xf32> -> vector<16x32xf32>
    %91 = vector.extract_strided_slice %50 {offsets = [0, 64], sizes = [16, 32], strides = [1, 1]} : vector<16x128xf32> to vector<16x32xf32>
    %92 = vector.extract_strided_slice %51 {offsets = [0, 64], sizes = [16, 32], strides = [1, 1]} : vector<16x128xf32> to vector<16x32xf32>
    %93 = tpu.transpose %92, [1, 0] : vector<16x32xf32> -> vector<32x16xf32>
    %cst_42 = arith.constant dense<0.000000e+00> : vector<16x16xf32>
    %94 = tpu.matmul %91, %93, %cst_42 {dimension_numbers = #tpu.dot_dimension_numbers<[1], [0], [0], [1], [0, 0, 1, 1], [], []>} : vector<16x32xf32>, vector<32x16xf32>, vector<16x16xf32> -> vector<16x16xf32>
    %95 = vector.broadcast %54 : vector<1x16xf32> to vector<16x16xf32>
    %96 = arith.addf %94, %95 : vector<16x16xf32>
    %cst_43 = arith.constant dense<0xFF800000> : vector<16xf32>
    %97 = vector.multi_reduction <maximumf>, %96, %cst_43 [1] : vector<16x16xf32> to vector<16xf32>
    %98 = vector.shape_cast %97 : vector<16xf32> to vector<16x1xf32>
    %99 = vector.broadcast %98 : vector<16x1xf32> to vector<16x16xf32>
    %100 = arith.subf %96, %99 : vector<16x16xf32>
    %101 = math.exp %100 : vector<16x16xf32>
    %cst_44 = arith.constant dense<0.000000e+00> : vector<16xf32>
    %102 = vector.multi_reduction <add>, %101, %cst_44 [1] : vector<16x16xf32> to vector<16xf32>
    %103 = vector.shape_cast %102 : vector<16xf32> to vector<16x1xf32>
    %104 = tpu.reciprocal %103 {approx = true} : vector<16x1xf32> -> vector<16x1xf32>
    %105 = vector.broadcast %104 : vector<16x1xf32> to vector<16x16xf32>
    %106 = arith.mulf %101, %105 : vector<16x16xf32>
    %107 = vector.extract_strided_slice %52 {offsets = [0, 64], sizes = [16, 32], strides = [1, 1]} : vector<16x128xf32> to vector<16x32xf32>
    %cst_45 = arith.constant dense<0.000000e+00> : vector<16x32xf32>
    %108 = tpu.matmul %106, %107, %cst_45 {dimension_numbers = #tpu.dot_dimension_numbers<[1], [0], [0], [1], [0, 0, 1, 1], [], []>} : vector<16x16xf32>, vector<16x32xf32>, vector<16x32xf32> -> vector<16x32xf32>
    %109 = vector.extract_strided_slice %50 {offsets = [0, 96], sizes = [16, 32], strides = [1, 1]} : vector<16x128xf32> to vector<16x32xf32>
    %110 = vector.extract_strided_slice %51 {offsets = [0, 96], sizes = [16, 32], strides = [1, 1]} : vector<16x128xf32> to vector<16x32xf32>
    %111 = tpu.transpose %110, [1, 0] : vector<16x32xf32> -> vector<32x16xf32>
    %cst_46 = arith.constant dense<0.000000e+00> : vector<16x16xf32>
    %112 = tpu.matmul %109, %111, %cst_46 {dimension_numbers = #tpu.dot_dimension_numbers<[1], [0], [0], [1], [0, 0, 1, 1], [], []>} : vector<16x32xf32>, vector<32x16xf32>, vector<16x16xf32> -> vector<16x16xf32>
    %113 = vector.broadcast %54 : vector<1x16xf32> to vector<16x16xf32>
    %114 = arith.addf %112, %113 : vector<16x16xf32>
    %cst_47 = arith.constant dense<0xFF800000> : vector<16xf32>
    %115 = vector.multi_reduction <maximumf>, %114, %cst_47 [1] : vector<16x16xf32> to vector<16xf32>
    %116 = vector.shape_cast %115 : vector<16xf32> to vector<16x1xf32>
    %117 = vector.broadcast %116 : vector<16x1xf32> to vector<16x16xf32>
    %118 = arith.subf %114, %117 : vector<16x16xf32>
    %119 = math.exp %118 : vector<16x16xf32>
    %cst_48 = arith.constant dense<0.000000e+00> : vector<16xf32>
    %120 = vector.multi_reduction <add>, %119, %cst_48 [1] : vector<16x16xf32> to vector<16xf32>
    %121 = vector.shape_cast %120 : vector<16xf32> to vector<16x1xf32>
    %122 = tpu.reciprocal %121 {approx = true} : vector<16x1xf32> -> vector<16x1xf32>
    %123 = vector.broadcast %122 : vector<16x1xf32> to vector<16x16xf32>
    %124 = arith.mulf %119, %123 : vector<16x16xf32>
    %125 = vector.extract_strided_slice %52 {offsets = [0, 96], sizes = [16, 32], strides = [1, 1]} : vector<16x128xf32> to vector<16x32xf32>
    %cst_49 = arith.constant dense<0.000000e+00> : vector<16x32xf32>
    %126 = tpu.matmul %124, %125, %cst_49 {dimension_numbers = #tpu.dot_dimension_numbers<[1], [0], [0], [1], [0, 0, 1, 1], [], []>} : vector<16x16xf32>, vector<16x32xf32>, vector<16x32xf32> -> vector<16x32xf32>
    %127 = tpu.concatenate %72, %90, %108, %126 in 1 : vector<16x32xf32>, vector<16x32xf32>, vector<16x32xf32>, vector<16x32xf32> -> vector<16x128xf32>
    %128 = vector.extract_strided_slice %35 {offsets = [16, 0], sizes = [16, 128], strides = [1, 1]} : vector<32x128xf32> to vector<16x128xf32>
    %129 = vector.extract_strided_slice %42 {offsets = [16, 0], sizes = [16, 128], strides = [1, 1]} : vector<32x128xf32> to vector<16x128xf32>
    %130 = vector.extract_strided_slice %49 {offsets = [16, 0], sizes = [16, 128], strides = [1, 1]} : vector<32x128xf32> to vector<16x128xf32>
    %131 = vector.extract_strided_slice %25 {offsets = [1, 0, 0], sizes = [1, 1, 16], strides = [1, 1, 1]} : vector<2x1x16xf32> to vector<1x1x16xf32>
    %132 = vector.shape_cast %131 : vector<1x1x16xf32> to vector<1x16xf32>
    %133 = vector.extract_strided_slice %128 {offsets = [0, 0], sizes = [16, 32], strides = [1, 1]} : vector<16x128xf32> to vector<16x32xf32>
    %134 = vector.extract_strided_slice %129 {offsets = [0, 0], sizes = [16, 32], strides = [1, 1]} : vector<16x128xf32> to vector<16x32xf32>
    %135 = tpu.transpose %134, [1, 0] : vector<16x32xf32> -> vector<32x16xf32>
    %cst_50 = arith.constant dense<0.000000e+00> : vector<16x16xf32>
    %136 = tpu.matmul %133, %135, %cst_50 {dimension_numbers = #tpu.dot_dimension_numbers<[1], [0], [0], [1], [0, 0, 1, 1], [], []>} : vector<16x32xf32>, vector<32x16xf32>, vector<16x16xf32> -> vector<16x16xf32>
    %137 = vector.broadcast %132 : vector<1x16xf32> to vector<16x16xf32>
    %138 = arith.addf %136, %137 : vector<16x16xf32>
    %cst_51 = arith.constant dense<0xFF800000> : vector<16xf32>
    %139 = vector.multi_reduction <maximumf>, %138, %cst_51 [1] : vector<16x16xf32> to vector<16xf32>
    %140 = vector.shape_cast %139 : vector<16xf32> to vector<16x1xf32>
    %141 = vector.broadcast %140 : vector<16x1xf32> to vector<16x16xf32>
    %142 = arith.subf %138, %141 : vector<16x16xf32>
    %143 = math.exp %142 : vector<16x16xf32>
    %cst_52 = arith.constant dense<0.000000e+00> : vector<16xf32>
    %144 = vector.multi_reduction <add>, %143, %cst_52 [1] : vector<16x16xf32> to vector<16xf32>
    %145 = vector.shape_cast %144 : vector<16xf32> to vector<16x1xf32>
    %146 = tpu.reciprocal %145 {approx = true} : vector<16x1xf32> -> vector<16x1xf32>
    %147 = vector.broadcast %146 : vector<16x1xf32> to vector<16x16xf32>
    %148 = arith.mulf %143, %147 : vector<16x16xf32>
    %149 = vector.extract_strided_slice %130 {offsets = [0, 0], sizes = [16, 32], strides = [1, 1]} : vector<16x128xf32> to vector<16x32xf32>
    %cst_53 = arith.constant dense<0.000000e+00> : vector<16x32xf32>
    %150 = tpu.matmul %148, %149, %cst_53 {dimension_numbers = #tpu.dot_dimension_numbers<[1], [0], [0], [1], [0, 0, 1, 1], [], []>} : vector<16x16xf32>, vector<16x32xf32>, vector<16x32xf32> -> vector<16x32xf32>
    %151 = vector.extract_strided_slice %128 {offsets = [0, 32], sizes = [16, 32], strides = [1, 1]} : vector<16x128xf32> to vector<16x32xf32>
    %152 = vector.extract_strided_slice %129 {offsets = [0, 32], sizes = [16, 32], strides = [1, 1]} : vector<16x128xf32> to vector<16x32xf32>
    %153 = tpu.transpose %152, [1, 0] : vector<16x32xf32> -> vector<32x16xf32>
    %cst_54 = arith.constant dense<0.000000e+00> : vector<16x16xf32>
    %154 = tpu.matmul %151, %153, %cst_54 {dimension_numbers = #tpu.dot_dimension_numbers<[1], [0], [0], [1], [0, 0, 1, 1], [], []>} : vector<16x32xf32>, vector<32x16xf32>, vector<16x16xf32> -> vector<16x16xf32>
    %155 = vector.broadcast %132 : vector<1x16xf32> to vector<16x16xf32>
    %156 = arith.addf %154, %155 : vector<16x16xf32>
    %cst_55 = arith.constant dense<0xFF800000> : vector<16xf32>
    %157 = vector.multi_reduction <maximumf>, %156, %cst_55 [1] : vector<16x16xf32> to vector<16xf32>
    %158 = vector.shape_cast %157 : vector<16xf32> to vector<16x1xf32>
    %159 = vector.broadcast %158 : vector<16x1xf32> to vector<16x16xf32>
    %160 = arith.subf %156, %159 : vector<16x16xf32>
    %161 = math.exp %160 : vector<16x16xf32>
    %cst_56 = arith.constant dense<0.000000e+00> : vector<16xf32>
    %162 = vector.multi_reduction <add>, %161, %cst_56 [1] : vector<16x16xf32> to vector<16xf32>
    %163 = vector.shape_cast %162 : vector<16xf32> to vector<16x1xf32>
    %164 = tpu.reciprocal %163 {approx = true} : vector<16x1xf32> -> vector<16x1xf32>
    %165 = vector.broadcast %164 : vector<16x1xf32> to vector<16x16xf32>
    %166 = arith.mulf %161, %165 : vector<16x16xf32>
    %167 = vector.extract_strided_slice %130 {offsets = [0, 32], sizes = [16, 32], strides = [1, 1]} : vector<16x128xf32> to vector<16x32xf32>
    %cst_57 = arith.constant dense<0.000000e+00> : vector<16x32xf32>
    %168 = tpu.matmul %166, %167, %cst_57 {dimension_numbers = #tpu.dot_dimension_numbers<[1], [0], [0], [1], [0, 0, 1, 1], [], []>} : vector<16x16xf32>, vector<16x32xf32>, vector<16x32xf32> -> vector<16x32xf32>
    %169 = vector.extract_strided_slice %128 {offsets = [0, 64], sizes = [16, 32], strides = [1, 1]} : vector<16x128xf32> to vector<16x32xf32>
    %170 = vector.extract_strided_slice %129 {offsets = [0, 64], sizes = [16, 32], strides = [1, 1]} : vector<16x128xf32> to vector<16x32xf32>
    %171 = tpu.transpose %170, [1, 0] : vector<16x32xf32> -> vector<32x16xf32>
    %cst_58 = arith.constant dense<0.000000e+00> : vector<16x16xf32>
    %172 = tpu.matmul %169, %171, %cst_58 {dimension_numbers = #tpu.dot_dimension_numbers<[1], [0], [0], [1], [0, 0, 1, 1], [], []>} : vector<16x32xf32>, vector<32x16xf32>, vector<16x16xf32> -> vector<16x16xf32>
    %173 = vector.broadcast %132 : vector<1x16xf32> to vector<16x16xf32>
    %174 = arith.addf %172, %173 : vector<16x16xf32>
    %cst_59 = arith.constant dense<0xFF800000> : vector<16xf32>
    %175 = vector.multi_reduction <maximumf>, %174, %cst_59 [1] : vector<16x16xf32> to vector<16xf32>
    %176 = vector.shape_cast %175 : vector<16xf32> to vector<16x1xf32>
    %177 = vector.broadcast %176 : vector<16x1xf32> to vector<16x16xf32>
    %178 = arith.subf %174, %177 : vector<16x16xf32>
    %179 = math.exp %178 : vector<16x16xf32>
    %cst_60 = arith.constant dense<0.000000e+00> : vector<16xf32>
    %180 = vector.multi_reduction <add>, %179, %cst_60 [1] : vector<16x16xf32> to vector<16xf32>
    %181 = vector.shape_cast %180 : vector<16xf32> to vector<16x1xf32>
    %182 = tpu.reciprocal %181 {approx = true} : vector<16x1xf32> -> vector<16x1xf32>
    %183 = vector.broadcast %182 : vector<16x1xf32> to vector<16x16xf32>
    %184 = arith.mulf %179, %183 : vector<16x16xf32>
    %185 = vector.extract_strided_slice %130 {offsets = [0, 64], sizes = [16, 32], strides = [1, 1]} : vector<16x128xf32> to vector<16x32xf32>
    %cst_61 = arith.constant dense<0.000000e+00> : vector<16x32xf32>
    %186 = tpu.matmul %184, %185, %cst_61 {dimension_numbers = #tpu.dot_dimension_numbers<[1], [0], [0], [1], [0, 0, 1, 1], [], []>} : vector<16x16xf32>, vector<16x32xf32>, vector<16x32xf32> -> vector<16x32xf32>
    %187 = vector.extract_strided_slice %128 {offsets = [0, 96], sizes = [16, 32], strides = [1, 1]} : vector<16x128xf32> to vector<16x32xf32>
    %188 = vector.extract_strided_slice %129 {offsets = [0, 96], sizes = [16, 32], strides = [1, 1]} : vector<16x128xf32> to vector<16x32xf32>
    %189 = tpu.transpose %188, [1, 0] : vector<16x32xf32> -> vector<32x16xf32>
    %cst_62 = arith.constant dense<0.000000e+00> : vector<16x16xf32>
    %190 = tpu.matmul %187, %189, %cst_62 {dimension_numbers = #tpu.dot_dimension_numbers<[1], [0], [0], [1], [0, 0, 1, 1], [], []>} : vector<16x32xf32>, vector<32x16xf32>, vector<16x16xf32> -> vector<16x16xf32>
    %191 = vector.broadcast %132 : vector<1x16xf32> to vector<16x16xf32>
    %192 = arith.addf %190, %191 : vector<16x16xf32>
    %cst_63 = arith.constant dense<0xFF800000> : vector<16xf32>
    %193 = vector.multi_reduction <maximumf>, %192, %cst_63 [1] : vector<16x16xf32> to vector<16xf32>
    %194 = vector.shape_cast %193 : vector<16xf32> to vector<16x1xf32>
    %195 = vector.broadcast %194 : vector<16x1xf32> to vector<16x16xf32>
    %196 = arith.subf %192, %195 : vector<16x16xf32>
    %197 = math.exp %196 : vector<16x16xf32>
    %cst_64 = arith.constant dense<0.000000e+00> : vector<16xf32>
    %198 = vector.multi_reduction <add>, %197, %cst_64 [1] : vector<16x16xf32> to vector<16xf32>
    %199 = vector.shape_cast %198 : vector<16xf32> to vector<16x1xf32>
    %200 = tpu.reciprocal %199 {approx = true} : vector<16x1xf32> -> vector<16x1xf32>
    %201 = vector.broadcast %200 : vector<16x1xf32> to vector<16x16xf32>
    %202 = arith.mulf %197, %201 : vector<16x16xf32>
    %203 = vector.extract_strided_slice %130 {offsets = [0, 96], sizes = [16, 32], strides = [1, 1]} : vector<16x128xf32> to vector<16x32xf32>
    %cst_65 = arith.constant dense<0.000000e+00> : vector<16x32xf32>
    %204 = tpu.matmul %202, %203, %cst_65 {dimension_numbers = #tpu.dot_dimension_numbers<[1], [0], [0], [1], [0, 0, 1, 1], [], []>} : vector<16x16xf32>, vector<16x32xf32>, vector<16x32xf32> -> vector<16x32xf32>
    %205 = tpu.concatenate %150, %168, %186, %204 in 1 : vector<16x32xf32>, vector<16x32xf32>, vector<16x32xf32>, vector<16x32xf32> -> vector<16x128xf32>
    %206 = tpu.concatenate %127, %205 in 0 : vector<16x128xf32>, vector<16x128xf32> -> vector<32x128xf32>
    %207 = arith.truncf %206 : vector<32x128xf32> to vector<32x128xbf16>
    %c0_66 = arith.constant 0 : index
    %c0_67 = arith.constant 0 : index
    %c0_68 = arith.constant 0 : index
    %208 = vector.load %arg11[%c0_66, %c0_67, %c0_68] : memref<2x128x128xbf16, #tpu.memory_space<vmem>>, vector<1x128x128xbf16>
    %209 = vector.shape_cast %208 : vector<1x128x128xbf16> to vector<128x128xbf16>
    %cst_69 = arith.constant dense<0.000000e+00> : vector<32x128xf32>
    %210 = tpu.matmul %207, %209, %cst_69 {dimension_numbers = #tpu.dot_dimension_numbers<[1], [0], [0], [1], [0, 0, 1, 1], [], []>} : vector<32x128xbf16>, vector<128x128xbf16>, vector<32x128xf32> -> vector<32x128xf32>
    %c0_70 = arith.constant 0 : index
    %c0_71 = arith.constant 0 : index
    %c0_72 = arith.constant 0 : index
    %211 = vector.load %arg12[%c0_70, %c0_71, %c0_72] : memref<2x1x128xf32, #tpu.memory_space<vmem>>, vector<1x1x128xf32>
    %212 = vector.shape_cast %211 : vector<1x1x128xf32> to vector<1x128xf32>
    %213 = vector.broadcast %212 : vector<1x128xf32> to vector<32x128xf32>
    %214 = arith.addf %210, %213 : vector<32x128xf32>
    %215 = arith.addf %24, %214 : vector<32x128xf32>
    %c0_73 = arith.constant 0 : index
    %c0_74 = arith.constant 0 : index
    %c0_75 = arith.constant 0 : index
    %216 = vector.load %arg13[%c0_73, %c0_74, %c0_75] : memref<2x1x128xf32, #tpu.memory_space<vmem>>, vector<1x1x128xf32>
    %217 = vector.shape_cast %216 : vector<1x1x128xf32> to vector<1x128xf32>
    %c0_76 = arith.constant 0 : index
    %c0_77 = arith.constant 0 : index
    %c0_78 = arith.constant 0 : index
    %218 = vector.load %arg14[%c0_76, %c0_77, %c0_78] : memref<2x1x128xf32, #tpu.memory_space<vmem>>, vector<1x1x128xf32>
    %219 = vector.shape_cast %218 : vector<1x1x128xf32> to vector<1x128xf32>
    %cst_79 = arith.constant dense<0.000000e+00> : vector<32xf32>
    %220 = vector.multi_reduction <add>, %215, %cst_79 [1] : vector<32x128xf32> to vector<32xf32>
    %221 = vector.shape_cast %220 : vector<32xf32> to vector<32x1xf32>
    %cst_80 = arith.constant 1.280000e+02 : f32
    %222 = vector.broadcast %cst_80 : f32 to vector<32x1xf32>
    %223 = arith.divf %221, %222 : vector<32x1xf32>
    %224 = vector.broadcast %223 : vector<32x1xf32> to vector<32x128xf32>
    %225 = arith.subf %215, %224 : vector<32x128xf32>
    %226 = arith.mulf %225, %225 : vector<32x128xf32>
    %cst_81 = arith.constant dense<0.000000e+00> : vector<32xf32>
    %227 = vector.multi_reduction <add>, %226, %cst_81 [1] : vector<32x128xf32> to vector<32xf32>
    %228 = vector.shape_cast %227 : vector<32xf32> to vector<32x1xf32>
    %cst_82 = arith.constant 1.280000e+02 : f32
    %229 = vector.broadcast %cst_82 : f32 to vector<32x1xf32>
    %230 = arith.divf %228, %229 : vector<32x1xf32>
    %231 = vector.broadcast %223 : vector<32x1xf32> to vector<32x128xf32>
    %232 = arith.subf %215, %231 : vector<32x128xf32>
    %cst_83 = arith.constant 9.99999996E-13 : f32
    %233 = vector.broadcast %cst_83 : f32 to vector<32x1xf32>
    %234 = arith.addf %230, %233 : vector<32x1xf32>
    %235 = math.rsqrt %234 : vector<32x1xf32>
    %236 = vector.broadcast %235 : vector<32x1xf32> to vector<32x128xf32>
    %237 = arith.mulf %232, %236 : vector<32x128xf32>
    %238 = vector.broadcast %217 : vector<1x128xf32> to vector<32x128xf32>
    %239 = arith.mulf %237, %238 : vector<32x128xf32>
    %240 = vector.broadcast %219 : vector<1x128xf32> to vector<32x128xf32>
    %241 = arith.addf %239, %240 : vector<32x128xf32>
    %242 = arith.truncf %241 : vector<32x128xf32> to vector<32x128xbf16>
    %c0_84 = arith.constant 0 : index
    %c0_85 = arith.constant 0 : index
    %c0_86 = arith.constant 0 : index
    %243 = vector.load %arg15[%c0_84, %c0_85, %c0_86] : memref<2x128x256xbf16, #tpu.memory_space<vmem>>, vector<1x128x256xbf16>
    %244 = vector.shape_cast %243 : vector<1x128x256xbf16> to vector<128x256xbf16>
    %cst_87 = arith.constant dense<0.000000e+00> : vector<32x256xf32>
    %245 = tpu.matmul %242, %244, %cst_87 {dimension_numbers = #tpu.dot_dimension_numbers<[1], [0], [0], [1], [0, 0, 1, 1], [], []>} : vector<32x128xbf16>, vector<128x256xbf16>, vector<32x256xf32> -> vector<32x256xf32>
    %c0_88 = arith.constant 0 : index
    %c0_89 = arith.constant 0 : index
    %c0_90 = arith.constant 0 : index
    %246 = vector.load %arg16[%c0_88, %c0_89, %c0_90] : memref<2x1x256xf32, #tpu.memory_space<vmem>>, vector<1x1x256xf32>
    %247 = vector.shape_cast %246 : vector<1x1x256xf32> to vector<1x256xf32>
    %248 = vector.broadcast %247 : vector<1x256xf32> to vector<32x256xf32>
    %249 = arith.addf %245, %248 : vector<32x256xf32>
    %cst_91 = arith.constant 5.000000e-01 : f32
    %250 = vector.broadcast %cst_91 : f32 to vector<32x256xf32>
    %251 = arith.mulf %250, %249 : vector<32x256xf32>
    %cst_92 = arith.constant 4.471500e-02 : f32
    %252 = vector.broadcast %cst_92 : f32 to vector<32x256xf32>
    %253 = arith.mulf %252, %249 : vector<32x256xf32>
    %254 = arith.mulf %253, %249 : vector<32x256xf32>
    %255 = arith.mulf %254, %249 : vector<32x256xf32>
    %256 = arith.addf %249, %255 : vector<32x256xf32>
    %cst_93 = arith.constant 0.797884583 : f32
    %257 = vector.broadcast %cst_93 : f32 to vector<32x256xf32>
    %258 = arith.mulf %257, %256 : vector<32x256xf32>
    %259 = math.tanh %258 : vector<32x256xf32>
    %cst_94 = arith.constant 1.000000e+00 : f32
    %260 = vector.broadcast %cst_94 : f32 to vector<32x256xf32>
    %261 = arith.addf %260, %259 : vector<32x256xf32>
    %262 = arith.mulf %251, %261 : vector<32x256xf32>
    %263 = arith.truncf %262 : vector<32x256xf32> to vector<32x256xbf16>
    %c0_95 = arith.constant 0 : index
    %c0_96 = arith.constant 0 : index
    %c0_97 = arith.constant 0 : index
    %264 = vector.load %arg17[%c0_95, %c0_96, %c0_97] : memref<2x256x128xbf16, #tpu.memory_space<vmem>>, vector<1x256x128xbf16>
    %265 = vector.shape_cast %264 : vector<1x256x128xbf16> to vector<256x128xbf16>
    %cst_98 = arith.constant dense<0.000000e+00> : vector<32x128xf32>
    %266 = tpu.matmul %263, %265, %cst_98 {dimension_numbers = #tpu.dot_dimension_numbers<[1], [0], [0], [1], [0, 0, 1, 1], [], []>} : vector<32x256xbf16>, vector<256x128xbf16>, vector<32x128xf32> -> vector<32x128xf32>
    %c0_99 = arith.constant 0 : index
    %c0_100 = arith.constant 0 : index
    %c0_101 = arith.constant 0 : index
    %267 = vector.load %arg18[%c0_99, %c0_100, %c0_101] : memref<2x1x128xf32, #tpu.memory_space<vmem>>, vector<1x1x128xf32>
    %268 = vector.shape_cast %267 : vector<1x1x128xf32> to vector<1x128xf32>
    %269 = vector.broadcast %268 : vector<1x128xf32> to vector<32x128xf32>
    %270 = arith.addf %266, %269 : vector<32x128xf32>
    %271 = arith.addf %241, %270 : vector<32x128xf32>
    %c0_102 = arith.constant 0 : index
    %c0_103 = arith.constant 0 : index
    %c0_104 = arith.constant 0 : index
    %272 = vector.load %arg19[%c0_102, %c0_103, %c0_104] : memref<2x1x128xf32, #tpu.memory_space<vmem>>, vector<1x1x128xf32>
    %273 = vector.shape_cast %272 : vector<1x1x128xf32> to vector<1x128xf32>
    %c0_105 = arith.constant 0 : index
    %c0_106 = arith.constant 0 : index
    %c0_107 = arith.constant 0 : index
    %274 = vector.load %arg20[%c0_105, %c0_106, %c0_107] : memref<2x1x128xf32, #tpu.memory_space<vmem>>, vector<1x1x128xf32>
    %275 = vector.shape_cast %274 : vector<1x1x128xf32> to vector<1x128xf32>
    %cst_108 = arith.constant dense<0.000000e+00> : vector<32xf32>
    %276 = vector.multi_reduction <add>, %271, %cst_108 [1] : vector<32x128xf32> to vector<32xf32>
    %277 = vector.shape_cast %276 : vector<32xf32> to vector<32x1xf32>
    %cst_109 = arith.constant 1.280000e+02 : f32
    %278 = vector.broadcast %cst_109 : f32 to vector<32x1xf32>
    %279 = arith.divf %277, %278 : vector<32x1xf32>
    %280 = vector.broadcast %279 : vector<32x1xf32> to vector<32x128xf32>
    %281 = arith.subf %271, %280 : vector<32x128xf32>
    %282 = arith.mulf %281, %281 : vector<32x128xf32>
    %cst_110 = arith.constant dense<0.000000e+00> : vector<32xf32>
    %283 = vector.multi_reduction <add>, %282, %cst_110 [1] : vector<32x128xf32> to vector<32xf32>
    %284 = vector.shape_cast %283 : vector<32xf32> to vector<32x1xf32>
    %cst_111 = arith.constant 1.280000e+02 : f32
    %285 = vector.broadcast %cst_111 : f32 to vector<32x1xf32>
    %286 = arith.divf %284, %285 : vector<32x1xf32>
    %287 = vector.broadcast %279 : vector<32x1xf32> to vector<32x128xf32>
    %288 = arith.subf %271, %287 : vector<32x128xf32>
    %cst_112 = arith.constant 9.99999996E-13 : f32
    %289 = vector.broadcast %cst_112 : f32 to vector<32x1xf32>
    %290 = arith.addf %286, %289 : vector<32x1xf32>
    %291 = math.rsqrt %290 : vector<32x1xf32>
    %292 = vector.broadcast %291 : vector<32x1xf32> to vector<32x128xf32>
    %293 = arith.mulf %288, %292 : vector<32x128xf32>
    %294 = vector.broadcast %273 : vector<1x128xf32> to vector<32x128xf32>
    %295 = arith.mulf %293, %294 : vector<32x128xf32>
    %296 = vector.broadcast %275 : vector<1x128xf32> to vector<32x128xf32>
    %297 = arith.addf %295, %296 : vector<32x128xf32>
    %298 = arith.truncf %297 : vector<32x128xf32> to vector<32x128xbf16>
    %c1 = arith.constant 1 : index
    %c0_113 = arith.constant 0 : index
    %c0_114 = arith.constant 0 : index
    %299 = vector.load %arg5[%c1, %c0_113, %c0_114] : memref<2x128x128xbf16, #tpu.memory_space<vmem>>, vector<1x128x128xbf16>
    %300 = vector.shape_cast %299 : vector<1x128x128xbf16> to vector<128x128xbf16>
    %cst_115 = arith.constant dense<0.000000e+00> : vector<32x128xf32>
    %301 = tpu.matmul %298, %300, %cst_115 {dimension_numbers = #tpu.dot_dimension_numbers<[1], [0], [0], [1], [0, 0, 1, 1], [], []>} : vector<32x128xbf16>, vector<128x128xbf16>, vector<32x128xf32> -> vector<32x128xf32>
    %c1_116 = arith.constant 1 : index
    %c0_117 = arith.constant 0 : index
    %c0_118 = arith.constant 0 : index
    %302 = vector.load %arg6[%c1_116, %c0_117, %c0_118] : memref<2x1x128xf32, #tpu.memory_space<vmem>>, vector<1x1x128xf32>
    %303 = vector.shape_cast %302 : vector<1x1x128xf32> to vector<1x128xf32>
    %304 = vector.broadcast %303 : vector<1x128xf32> to vector<32x128xf32>
    %305 = arith.addf %301, %304 : vector<32x128xf32>
    %cst_119 = arith.constant 0.176776692 : f32
    %306 = vector.broadcast %cst_119 : f32 to vector<32x128xf32>
    %307 = arith.mulf %305, %306 : vector<32x128xf32>
    %c1_120 = arith.constant 1 : index
    %c0_121 = arith.constant 0 : index
    %c0_122 = arith.constant 0 : index
    %308 = vector.load %arg7[%c1_120, %c0_121, %c0_122] : memref<2x128x128xbf16, #tpu.memory_space<vmem>>, vector<1x128x128xbf16>
    %309 = vector.shape_cast %308 : vector<1x128x128xbf16> to vector<128x128xbf16>
    %cst_123 = arith.constant dense<0.000000e+00> : vector<32x128xf32>
    %310 = tpu.matmul %298, %309, %cst_123 {dimension_numbers = #tpu.dot_dimension_numbers<[1], [0], [0], [1], [0, 0, 1, 1], [], []>} : vector<32x128xbf16>, vector<128x128xbf16>, vector<32x128xf32> -> vector<32x128xf32>
    %c1_124 = arith.constant 1 : index
    %c0_125 = arith.constant 0 : index
    %c0_126 = arith.constant 0 : index
    %311 = vector.load %arg8[%c1_124, %c0_125, %c0_126] : memref<2x1x128xf32, #tpu.memory_space<vmem>>, vector<1x1x128xf32>
    %312 = vector.shape_cast %311 : vector<1x1x128xf32> to vector<1x128xf32>
    %313 = vector.broadcast %312 : vector<1x128xf32> to vector<32x128xf32>
    %314 = arith.addf %310, %313 : vector<32x128xf32>
    %c1_127 = arith.constant 1 : index
    %c0_128 = arith.constant 0 : index
    %c0_129 = arith.constant 0 : index
    %315 = vector.load %arg9[%c1_127, %c0_128, %c0_129] : memref<2x128x128xbf16, #tpu.memory_space<vmem>>, vector<1x128x128xbf16>
    %316 = vector.shape_cast %315 : vector<1x128x128xbf16> to vector<128x128xbf16>
    %cst_130 = arith.constant dense<0.000000e+00> : vector<32x128xf32>
    %317 = tpu.matmul %298, %316, %cst_130 {dimension_numbers = #tpu.dot_dimension_numbers<[1], [0], [0], [1], [0, 0, 1, 1], [], []>} : vector<32x128xbf16>, vector<128x128xbf16>, vector<32x128xf32> -> vector<32x128xf32>
    %c1_131 = arith.constant 1 : index
    %c0_132 = arith.constant 0 : index
    %c0_133 = arith.constant 0 : index
    %318 = vector.load %arg10[%c1_131, %c0_132, %c0_133] : memref<2x1x128xf32, #tpu.memory_space<vmem>>, vector<1x1x128xf32>
    %319 = vector.shape_cast %318 : vector<1x1x128xf32> to vector<1x128xf32>
    %320 = vector.broadcast %319 : vector<1x128xf32> to vector<32x128xf32>
    %321 = arith.addf %317, %320 : vector<32x128xf32>
    %322 = vector.extract_strided_slice %307 {offsets = [0, 0], sizes = [16, 128], strides = [1, 1]} : vector<32x128xf32> to vector<16x128xf32>
    %323 = vector.extract_strided_slice %314 {offsets = [0, 0], sizes = [16, 128], strides = [1, 1]} : vector<32x128xf32> to vector<16x128xf32>
    %324 = vector.extract_strided_slice %321 {offsets = [0, 0], sizes = [16, 128], strides = [1, 1]} : vector<32x128xf32> to vector<16x128xf32>
    %325 = vector.extract_strided_slice %25 {offsets = [0, 0, 0], sizes = [1, 1, 16], strides = [1, 1, 1]} : vector<2x1x16xf32> to vector<1x1x16xf32>
    %326 = vector.shape_cast %325 : vector<1x1x16xf32> to vector<1x16xf32>
    %327 = vector.extract_strided_slice %322 {offsets = [0, 0], sizes = [16, 32], strides = [1, 1]} : vector<16x128xf32> to vector<16x32xf32>
    %328 = vector.extract_strided_slice %323 {offsets = [0, 0], sizes = [16, 32], strides = [1, 1]} : vector<16x128xf32> to vector<16x32xf32>
    %329 = tpu.transpose %328, [1, 0] : vector<16x32xf32> -> vector<32x16xf32>
    %cst_134 = arith.constant dense<0.000000e+00> : vector<16x16xf32>
    %330 = tpu.matmul %327, %329, %cst_134 {dimension_numbers = #tpu.dot_dimension_numbers<[1], [0], [0], [1], [0, 0, 1, 1], [], []>} : vector<16x32xf32>, vector<32x16xf32>, vector<16x16xf32> -> vector<16x16xf32>
    %331 = vector.broadcast %326 : vector<1x16xf32> to vector<16x16xf32>
    %332 = arith.addf %330, %331 : vector<16x16xf32>
    %cst_135 = arith.constant dense<0xFF800000> : vector<16xf32>
    %333 = vector.multi_reduction <maximumf>, %332, %cst_135 [1] : vector<16x16xf32> to vector<16xf32>
    %334 = vector.shape_cast %333 : vector<16xf32> to vector<16x1xf32>
    %335 = vector.broadcast %334 : vector<16x1xf32> to vector<16x16xf32>
    %336 = arith.subf %332, %335 : vector<16x16xf32>
    %337 = math.exp %336 : vector<16x16xf32>
    %cst_136 = arith.constant dense<0.000000e+00> : vector<16xf32>
    %338 = vector.multi_reduction <add>, %337, %cst_136 [1] : vector<16x16xf32> to vector<16xf32>
    %339 = vector.shape_cast %338 : vector<16xf32> to vector<16x1xf32>
    %340 = tpu.reciprocal %339 {approx = true} : vector<16x1xf32> -> vector<16x1xf32>
    %341 = vector.broadcast %340 : vector<16x1xf32> to vector<16x16xf32>
    %342 = arith.mulf %337, %341 : vector<16x16xf32>
    %343 = vector.extract_strided_slice %324 {offsets = [0, 0], sizes = [16, 32], strides = [1, 1]} : vector<16x128xf32> to vector<16x32xf32>
    %cst_137 = arith.constant dense<0.000000e+00> : vector<16x32xf32>
    %344 = tpu.matmul %342, %343, %cst_137 {dimension_numbers = #tpu.dot_dimension_numbers<[1], [0], [0], [1], [0, 0, 1, 1], [], []>} : vector<16x16xf32>, vector<16x32xf32>, vector<16x32xf32> -> vector<16x32xf32>
    %345 = vector.extract_strided_slice %322 {offsets = [0, 32], sizes = [16, 32], strides = [1, 1]} : vector<16x128xf32> to vector<16x32xf32>
    %346 = vector.extract_strided_slice %323 {offsets = [0, 32], sizes = [16, 32], strides = [1, 1]} : vector<16x128xf32> to vector<16x32xf32>
    %347 = tpu.transpose %346, [1, 0] : vector<16x32xf32> -> vector<32x16xf32>
    %cst_138 = arith.constant dense<0.000000e+00> : vector<16x16xf32>
    %348 = tpu.matmul %345, %347, %cst_138 {dimension_numbers = #tpu.dot_dimension_numbers<[1], [0], [0], [1], [0, 0, 1, 1], [], []>} : vector<16x32xf32>, vector<32x16xf32>, vector<16x16xf32> -> vector<16x16xf32>
    %349 = vector.broadcast %326 : vector<1x16xf32> to vector<16x16xf32>
    %350 = arith.addf %348, %349 : vector<16x16xf32>
    %cst_139 = arith.constant dense<0xFF800000> : vector<16xf32>
    %351 = vector.multi_reduction <maximumf>, %350, %cst_139 [1] : vector<16x16xf32> to vector<16xf32>
    %352 = vector.shape_cast %351 : vector<16xf32> to vector<16x1xf32>
    %353 = vector.broadcast %352 : vector<16x1xf32> to vector<16x16xf32>
    %354 = arith.subf %350, %353 : vector<16x16xf32>
    %355 = math.exp %354 : vector<16x16xf32>
    %cst_140 = arith.constant dense<0.000000e+00> : vector<16xf32>
    %356 = vector.multi_reduction <add>, %355, %cst_140 [1] : vector<16x16xf32> to vector<16xf32>
    %357 = vector.shape_cast %356 : vector<16xf32> to vector<16x1xf32>
    %358 = tpu.reciprocal %357 {approx = true} : vector<16x1xf32> -> vector<16x1xf32>
    %359 = vector.broadcast %358 : vector<16x1xf32> to vector<16x16xf32>
    %360 = arith.mulf %355, %359 : vector<16x16xf32>
    %361 = vector.extract_strided_slice %324 {offsets = [0, 32], sizes = [16, 32], strides = [1, 1]} : vector<16x128xf32> to vector<16x32xf32>
    %cst_141 = arith.constant dense<0.000000e+00> : vector<16x32xf32>
    %362 = tpu.matmul %360, %361, %cst_141 {dimension_numbers = #tpu.dot_dimension_numbers<[1], [0], [0], [1], [0, 0, 1, 1], [], []>} : vector<16x16xf32>, vector<16x32xf32>, vector<16x32xf32> -> vector<16x32xf32>
    %363 = vector.extract_strided_slice %322 {offsets = [0, 64], sizes = [16, 32], strides = [1, 1]} : vector<16x128xf32> to vector<16x32xf32>
    %364 = vector.extract_strided_slice %323 {offsets = [0, 64], sizes = [16, 32], strides = [1, 1]} : vector<16x128xf32> to vector<16x32xf32>
    %365 = tpu.transpose %364, [1, 0] : vector<16x32xf32> -> vector<32x16xf32>
    %cst_142 = arith.constant dense<0.000000e+00> : vector<16x16xf32>
    %366 = tpu.matmul %363, %365, %cst_142 {dimension_numbers = #tpu.dot_dimension_numbers<[1], [0], [0], [1], [0, 0, 1, 1], [], []>} : vector<16x32xf32>, vector<32x16xf32>, vector<16x16xf32> -> vector<16x16xf32>
    %367 = vector.broadcast %326 : vector<1x16xf32> to vector<16x16xf32>
    %368 = arith.addf %366, %367 : vector<16x16xf32>
    %cst_143 = arith.constant dense<0xFF800000> : vector<16xf32>
    %369 = vector.multi_reduction <maximumf>, %368, %cst_143 [1] : vector<16x16xf32> to vector<16xf32>
    %370 = vector.shape_cast %369 : vector<16xf32> to vector<16x1xf32>
    %371 = vector.broadcast %370 : vector<16x1xf32> to vector<16x16xf32>
    %372 = arith.subf %368, %371 : vector<16x16xf32>
    %373 = math.exp %372 : vector<16x16xf32>
    %cst_144 = arith.constant dense<0.000000e+00> : vector<16xf32>
    %374 = vector.multi_reduction <add>, %373, %cst_144 [1] : vector<16x16xf32> to vector<16xf32>
    %375 = vector.shape_cast %374 : vector<16xf32> to vector<16x1xf32>
    %376 = tpu.reciprocal %375 {approx = true} : vector<16x1xf32> -> vector<16x1xf32>
    %377 = vector.broadcast %376 : vector<16x1xf32> to vector<16x16xf32>
    %378 = arith.mulf %373, %377 : vector<16x16xf32>
    %379 = vector.extract_strided_slice %324 {offsets = [0, 64], sizes = [16, 32], strides = [1, 1]} : vector<16x128xf32> to vector<16x32xf32>
    %cst_145 = arith.constant dense<0.000000e+00> : vector<16x32xf32>
    %380 = tpu.matmul %378, %379, %cst_145 {dimension_numbers = #tpu.dot_dimension_numbers<[1], [0], [0], [1], [0, 0, 1, 1], [], []>} : vector<16x16xf32>, vector<16x32xf32>, vector<16x32xf32> -> vector<16x32xf32>
    %381 = vector.extract_strided_slice %322 {offsets = [0, 96], sizes = [16, 32], strides = [1, 1]} : vector<16x128xf32> to vector<16x32xf32>
    %382 = vector.extract_strided_slice %323 {offsets = [0, 96], sizes = [16, 32], strides = [1, 1]} : vector<16x128xf32> to vector<16x32xf32>
    %383 = tpu.transpose %382, [1, 0] : vector<16x32xf32> -> vector<32x16xf32>
    %cst_146 = arith.constant dense<0.000000e+00> : vector<16x16xf32>
    %384 = tpu.matmul %381, %383, %cst_146 {dimension_numbers = #tpu.dot_dimension_numbers<[1], [0], [0], [1], [0, 0, 1, 1], [], []>} : vector<16x32xf32>, vector<32x16xf32>, vector<16x16xf32> -> vector<16x16xf32>
    %385 = vector.broadcast %326 : vector<1x16xf32> to vector<16x16xf32>
    %386 = arith.addf %384, %385 : vector<16x16xf32>
    %cst_147 = arith.constant dense<0xFF800000> : vector<16xf32>
    %387 = vector.multi_reduction <maximumf>, %386, %cst_147 [1] : vector<16x16xf32> to vector<16xf32>
    %388 = vector.shape_cast %387 : vector<16xf32> to vector<16x1xf32>
    %389 = vector.broadcast %388 : vector<16x1xf32> to vector<16x16xf32>
    %390 = arith.subf %386, %389 : vector<16x16xf32>
    %391 = math.exp %390 : vector<16x16xf32>
    %cst_148 = arith.constant dense<0.000000e+00> : vector<16xf32>
    %392 = vector.multi_reduction <add>, %391, %cst_148 [1] : vector<16x16xf32> to vector<16xf32>
    %393 = vector.shape_cast %392 : vector<16xf32> to vector<16x1xf32>
    %394 = tpu.reciprocal %393 {approx = true} : vector<16x1xf32> -> vector<16x1xf32>
    %395 = vector.broadcast %394 : vector<16x1xf32> to vector<16x16xf32>
    %396 = arith.mulf %391, %395 : vector<16x16xf32>
    %397 = vector.extract_strided_slice %324 {offsets = [0, 96], sizes = [16, 32], strides = [1, 1]} : vector<16x128xf32> to vector<16x32xf32>
    %cst_149 = arith.constant dense<0.000000e+00> : vector<16x32xf32>
    %398 = tpu.matmul %396, %397, %cst_149 {dimension_numbers = #tpu.dot_dimension_numbers<[1], [0], [0], [1], [0, 0, 1, 1], [], []>} : vector<16x16xf32>, vector<16x32xf32>, vector<16x32xf32> -> vector<16x32xf32>
    %399 = tpu.concatenate %344, %362, %380, %398 in 1 : vector<16x32xf32>, vector<16x32xf32>, vector<16x32xf32>, vector<16x32xf32> -> vector<16x128xf32>
    %400 = vector.extract_strided_slice %307 {offsets = [16, 0], sizes = [16, 128], strides = [1, 1]} : vector<32x128xf32> to vector<16x128xf32>
    %401 = vector.extract_strided_slice %314 {offsets = [16, 0], sizes = [16, 128], strides = [1, 1]} : vector<32x128xf32> to vector<16x128xf32>
    %402 = vector.extract_strided_slice %321 {offsets = [16, 0], sizes = [16, 128], strides = [1, 1]} : vector<32x128xf32> to vector<16x128xf32>
    %403 = vector.extract_strided_slice %25 {offsets = [1, 0, 0], sizes = [1, 1, 16], strides = [1, 1, 1]} : vector<2x1x16xf32> to vector<1x1x16xf32>
    %404 = vector.shape_cast %403 : vector<1x1x16xf32> to vector<1x16xf32>
    %405 = vector.extract_strided_slice %400 {offsets = [0, 0], sizes = [16, 32], strides = [1, 1]} : vector<16x128xf32> to vector<16x32xf32>
    %406 = vector.extract_strided_slice %401 {offsets = [0, 0], sizes = [16, 32], strides = [1, 1]} : vector<16x128xf32> to vector<16x32xf32>
    %407 = tpu.transpose %406, [1, 0] : vector<16x32xf32> -> vector<32x16xf32>
    %cst_150 = arith.constant dense<0.000000e+00> : vector<16x16xf32>
    %408 = tpu.matmul %405, %407, %cst_150 {dimension_numbers = #tpu.dot_dimension_numbers<[1], [0], [0], [1], [0, 0, 1, 1], [], []>} : vector<16x32xf32>, vector<32x16xf32>, vector<16x16xf32> -> vector<16x16xf32>
    %409 = vector.broadcast %404 : vector<1x16xf32> to vector<16x16xf32>
    %410 = arith.addf %408, %409 : vector<16x16xf32>
    %cst_151 = arith.constant dense<0xFF800000> : vector<16xf32>
    %411 = vector.multi_reduction <maximumf>, %410, %cst_151 [1] : vector<16x16xf32> to vector<16xf32>
    %412 = vector.shape_cast %411 : vector<16xf32> to vector<16x1xf32>
    %413 = vector.broadcast %412 : vector<16x1xf32> to vector<16x16xf32>
    %414 = arith.subf %410, %413 : vector<16x16xf32>
    %415 = math.exp %414 : vector<16x16xf32>
    %cst_152 = arith.constant dense<0.000000e+00> : vector<16xf32>
    %416 = vector.multi_reduction <add>, %415, %cst_152 [1] : vector<16x16xf32> to vector<16xf32>
    %417 = vector.shape_cast %416 : vector<16xf32> to vector<16x1xf32>
    %418 = tpu.reciprocal %417 {approx = true} : vector<16x1xf32> -> vector<16x1xf32>
    %419 = vector.broadcast %418 : vector<16x1xf32> to vector<16x16xf32>
    %420 = arith.mulf %415, %419 : vector<16x16xf32>
    %421 = vector.extract_strided_slice %402 {offsets = [0, 0], sizes = [16, 32], strides = [1, 1]} : vector<16x128xf32> to vector<16x32xf32>
    %cst_153 = arith.constant dense<0.000000e+00> : vector<16x32xf32>
    %422 = tpu.matmul %420, %421, %cst_153 {dimension_numbers = #tpu.dot_dimension_numbers<[1], [0], [0], [1], [0, 0, 1, 1], [], []>} : vector<16x16xf32>, vector<16x32xf32>, vector<16x32xf32> -> vector<16x32xf32>
    %423 = vector.extract_strided_slice %400 {offsets = [0, 32], sizes = [16, 32], strides = [1, 1]} : vector<16x128xf32> to vector<16x32xf32>
    %424 = vector.extract_strided_slice %401 {offsets = [0, 32], sizes = [16, 32], strides = [1, 1]} : vector<16x128xf32> to vector<16x32xf32>
    %425 = tpu.transpose %424, [1, 0] : vector<16x32xf32> -> vector<32x16xf32>
    %cst_154 = arith.constant dense<0.000000e+00> : vector<16x16xf32>
    %426 = tpu.matmul %423, %425, %cst_154 {dimension_numbers = #tpu.dot_dimension_numbers<[1], [0], [0], [1], [0, 0, 1, 1], [], []>} : vector<16x32xf32>, vector<32x16xf32>, vector<16x16xf32> -> vector<16x16xf32>
    %427 = vector.broadcast %404 : vector<1x16xf32> to vector<16x16xf32>
    %428 = arith.addf %426, %427 : vector<16x16xf32>
    %cst_155 = arith.constant dense<0xFF800000> : vector<16xf32>
    %429 = vector.multi_reduction <maximumf>, %428, %cst_155 [1] : vector<16x16xf32> to vector<16xf32>
    %430 = vector.shape_cast %429 : vector<16xf32> to vector<16x1xf32>
    %431 = vector.broadcast %430 : vector<16x1xf32> to vector<16x16xf32>
    %432 = arith.subf %428, %431 : vector<16x16xf32>
    %433 = math.exp %432 : vector<16x16xf32>
    %cst_156 = arith.constant dense<0.000000e+00> : vector<16xf32>
    %434 = vector.multi_reduction <add>, %433, %cst_156 [1] : vector<16x16xf32> to vector<16xf32>
    %435 = vector.shape_cast %434 : vector<16xf32> to vector<16x1xf32>
    %436 = tpu.reciprocal %435 {approx = true} : vector<16x1xf32> -> vector<16x1xf32>
    %437 = vector.broadcast %436 : vector<16x1xf32> to vector<16x16xf32>
    %438 = arith.mulf %433, %437 : vector<16x16xf32>
    %439 = vector.extract_strided_slice %402 {offsets = [0, 32], sizes = [16, 32], strides = [1, 1]} : vector<16x128xf32> to vector<16x32xf32>
    %cst_157 = arith.constant dense<0.000000e+00> : vector<16x32xf32>
    %440 = tpu.matmul %438, %439, %cst_157 {dimension_numbers = #tpu.dot_dimension_numbers<[1], [0], [0], [1], [0, 0, 1, 1], [], []>} : vector<16x16xf32>, vector<16x32xf32>, vector<16x32xf32> -> vector<16x32xf32>
    %441 = vector.extract_strided_slice %400 {offsets = [0, 64], sizes = [16, 32], strides = [1, 1]} : vector<16x128xf32> to vector<16x32xf32>
    %442 = vector.extract_strided_slice %401 {offsets = [0, 64], sizes = [16, 32], strides = [1, 1]} : vector<16x128xf32> to vector<16x32xf32>
    %443 = tpu.transpose %442, [1, 0] : vector<16x32xf32> -> vector<32x16xf32>
    %cst_158 = arith.constant dense<0.000000e+00> : vector<16x16xf32>
    %444 = tpu.matmul %441, %443, %cst_158 {dimension_numbers = #tpu.dot_dimension_numbers<[1], [0], [0], [1], [0, 0, 1, 1], [], []>} : vector<16x32xf32>, vector<32x16xf32>, vector<16x16xf32> -> vector<16x16xf32>
    %445 = vector.broadcast %404 : vector<1x16xf32> to vector<16x16xf32>
    %446 = arith.addf %444, %445 : vector<16x16xf32>
    %cst_159 = arith.constant dense<0xFF800000> : vector<16xf32>
    %447 = vector.multi_reduction <maximumf>, %446, %cst_159 [1] : vector<16x16xf32> to vector<16xf32>
    %448 = vector.shape_cast %447 : vector<16xf32> to vector<16x1xf32>
    %449 = vector.broadcast %448 : vector<16x1xf32> to vector<16x16xf32>
    %450 = arith.subf %446, %449 : vector<16x16xf32>
    %451 = math.exp %450 : vector<16x16xf32>
    %cst_160 = arith.constant dense<0.000000e+00> : vector<16xf32>
    %452 = vector.multi_reduction <add>, %451, %cst_160 [1] : vector<16x16xf32> to vector<16xf32>
    %453 = vector.shape_cast %452 : vector<16xf32> to vector<16x1xf32>
    %454 = tpu.reciprocal %453 {approx = true} : vector<16x1xf32> -> vector<16x1xf32>
    %455 = vector.broadcast %454 : vector<16x1xf32> to vector<16x16xf32>
    %456 = arith.mulf %451, %455 : vector<16x16xf32>
    %457 = vector.extract_strided_slice %402 {offsets = [0, 64], sizes = [16, 32], strides = [1, 1]} : vector<16x128xf32> to vector<16x32xf32>
    %cst_161 = arith.constant dense<0.000000e+00> : vector<16x32xf32>
    %458 = tpu.matmul %456, %457, %cst_161 {dimension_numbers = #tpu.dot_dimension_numbers<[1], [0], [0], [1], [0, 0, 1, 1], [], []>} : vector<16x16xf32>, vector<16x32xf32>, vector<16x32xf32> -> vector<16x32xf32>
    %459 = vector.extract_strided_slice %400 {offsets = [0, 96], sizes = [16, 32], strides = [1, 1]} : vector<16x128xf32> to vector<16x32xf32>
    %460 = vector.extract_strided_slice %401 {offsets = [0, 96], sizes = [16, 32], strides = [1, 1]} : vector<16x128xf32> to vector<16x32xf32>
    %461 = tpu.transpose %460, [1, 0] : vector<16x32xf32> -> vector<32x16xf32>
    %cst_162 = arith.constant dense<0.000000e+00> : vector<16x16xf32>
    %462 = tpu.matmul %459, %461, %cst_162 {dimension_numbers = #tpu.dot_dimension_numbers<[1], [0], [0], [1], [0, 0, 1, 1], [], []>} : vector<16x32xf32>, vector<32x16xf32>, vector<16x16xf32> -> vector<16x16xf32>
    %463 = vector.broadcast %404 : vector<1x16xf32> to vector<16x16xf32>
    %464 = arith.addf %462, %463 : vector<16x16xf32>
    %cst_163 = arith.constant dense<0xFF800000> : vector<16xf32>
    %465 = vector.multi_reduction <maximumf>, %464, %cst_163 [1] : vector<16x16xf32> to vector<16xf32>
    %466 = vector.shape_cast %465 : vector<16xf32> to vector<16x1xf32>
    %467 = vector.broadcast %466 : vector<16x1xf32> to vector<16x16xf32>
    %468 = arith.subf %464, %467 : vector<16x16xf32>
    %469 = math.exp %468 : vector<16x16xf32>
    %cst_164 = arith.constant dense<0.000000e+00> : vector<16xf32>
    %470 = vector.multi_reduction <add>, %469, %cst_164 [1] : vector<16x16xf32> to vector<16xf32>
    %471 = vector.shape_cast %470 : vector<16xf32> to vector<16x1xf32>
    %472 = tpu.reciprocal %471 {approx = true} : vector<16x1xf32> -> vector<16x1xf32>
    %473 = vector.broadcast %472 : vector<16x1xf32> to vector<16x16xf32>
    %474 = arith.mulf %469, %473 : vector<16x16xf32>
    %475 = vector.extract_strided_slice %402 {offsets = [0, 96], sizes = [16, 32], strides = [1, 1]} : vector<16x128xf32> to vector<16x32xf32>
    %cst_165 = arith.constant dense<0.000000e+00> : vector<16x32xf32>
    %476 = tpu.matmul %474, %475, %cst_165 {dimension_numbers = #tpu.dot_dimension_numbers<[1], [0], [0], [1], [0, 0, 1, 1], [], []>} : vector<16x16xf32>, vector<16x32xf32>, vector<16x32xf32> -> vector<16x32xf32>
    %477 = tpu.concatenate %422, %440, %458, %476 in 1 : vector<16x32xf32>, vector<16x32xf32>, vector<16x32xf32>, vector<16x32xf32> -> vector<16x128xf32>
    %478 = tpu.concatenate %399, %477 in 0 : vector<16x128xf32>, vector<16x128xf32> -> vector<32x128xf32>
    %479 = arith.truncf %478 : vector<32x128xf32> to vector<32x128xbf16>
    %c1_166 = arith.constant 1 : index
    %c0_167 = arith.constant 0 : index
    %c0_168 = arith.constant 0 : index
    %480 = vector.load %arg11[%c1_166, %c0_167, %c0_168] : memref<2x128x128xbf16, #tpu.memory_space<vmem>>, vector<1x128x128xbf16>
    %481 = vector.shape_cast %480 : vector<1x128x128xbf16> to vector<128x128xbf16>
    %cst_169 = arith.constant dense<0.000000e+00> : vector<32x128xf32>
    %482 = tpu.matmul %479, %481, %cst_169 {dimension_numbers = #tpu.dot_dimension_numbers<[1], [0], [0], [1], [0, 0, 1, 1], [], []>} : vector<32x128xbf16>, vector<128x128xbf16>, vector<32x128xf32> -> vector<32x128xf32>
    %c1_170 = arith.constant 1 : index
    %c0_171 = arith.constant 0 : index
    %c0_172 = arith.constant 0 : index
    %483 = vector.load %arg12[%c1_170, %c0_171, %c0_172] : memref<2x1x128xf32, #tpu.memory_space<vmem>>, vector<1x1x128xf32>
    %484 = vector.shape_cast %483 : vector<1x1x128xf32> to vector<1x128xf32>
    %485 = vector.broadcast %484 : vector<1x128xf32> to vector<32x128xf32>
    %486 = arith.addf %482, %485 : vector<32x128xf32>
    %487 = arith.addf %297, %486 : vector<32x128xf32>
    %c1_173 = arith.constant 1 : index
    %c0_174 = arith.constant 0 : index
    %c0_175 = arith.constant 0 : index
    %488 = vector.load %arg13[%c1_173, %c0_174, %c0_175] : memref<2x1x128xf32, #tpu.memory_space<vmem>>, vector<1x1x128xf32>
    %489 = vector.shape_cast %488 : vector<1x1x128xf32> to vector<1x128xf32>
    %c1_176 = arith.constant 1 : index
    %c0_177 = arith.constant 0 : index
    %c0_178 = arith.constant 0 : index
    %490 = vector.load %arg14[%c1_176, %c0_177, %c0_178] : memref<2x1x128xf32, #tpu.memory_space<vmem>>, vector<1x1x128xf32>
    %491 = vector.shape_cast %490 : vector<1x1x128xf32> to vector<1x128xf32>
    %cst_179 = arith.constant dense<0.000000e+00> : vector<32xf32>
    %492 = vector.multi_reduction <add>, %487, %cst_179 [1] : vector<32x128xf32> to vector<32xf32>
    %493 = vector.shape_cast %492 : vector<32xf32> to vector<32x1xf32>
    %cst_180 = arith.constant 1.280000e+02 : f32
    %494 = vector.broadcast %cst_180 : f32 to vector<32x1xf32>
    %495 = arith.divf %493, %494 : vector<32x1xf32>
    %496 = vector.broadcast %495 : vector<32x1xf32> to vector<32x128xf32>
    %497 = arith.subf %487, %496 : vector<32x128xf32>
    %498 = arith.mulf %497, %497 : vector<32x128xf32>
    %cst_181 = arith.constant dense<0.000000e+00> : vector<32xf32>
    %499 = vector.multi_reduction <add>, %498, %cst_181 [1] : vector<32x128xf32> to vector<32xf32>
    %500 = vector.shape_cast %499 : vector<32xf32> to vector<32x1xf32>
    %cst_182 = arith.constant 1.280000e+02 : f32
    %501 = vector.broadcast %cst_182 : f32 to vector<32x1xf32>
    %502 = arith.divf %500, %501 : vector<32x1xf32>
    %503 = vector.broadcast %495 : vector<32x1xf32> to vector<32x128xf32>
    %504 = arith.subf %487, %503 : vector<32x128xf32>
    %cst_183 = arith.constant 9.99999996E-13 : f32
    %505 = vector.broadcast %cst_183 : f32 to vector<32x1xf32>
    %506 = arith.addf %502, %505 : vector<32x1xf32>
    %507 = math.rsqrt %506 : vector<32x1xf32>
    %508 = vector.broadcast %507 : vector<32x1xf32> to vector<32x128xf32>
    %509 = arith.mulf %504, %508 : vector<32x128xf32>
    %510 = vector.broadcast %489 : vector<1x128xf32> to vector<32x128xf32>
    %511 = arith.mulf %509, %510 : vector<32x128xf32>
    %512 = vector.broadcast %491 : vector<1x128xf32> to vector<32x128xf32>
    %513 = arith.addf %511, %512 : vector<32x128xf32>
    %514 = arith.truncf %513 : vector<32x128xf32> to vector<32x128xbf16>
    %c1_184 = arith.constant 1 : index
    %c0_185 = arith.constant 0 : index
    %c0_186 = arith.constant 0 : index
    %515 = vector.load %arg15[%c1_184, %c0_185, %c0_186] : memref<2x128x256xbf16, #tpu.memory_space<vmem>>, vector<1x128x256xbf16>
    %516 = vector.shape_cast %515 : vector<1x128x256xbf16> to vector<128x256xbf16>
    %cst_187 = arith.constant dense<0.000000e+00> : vector<32x256xf32>
    %517 = tpu.matmul %514, %516, %cst_187 {dimension_numbers = #tpu.dot_dimension_numbers<[1], [0], [0], [1], [0, 0, 1, 1], [], []>} : vector<32x128xbf16>, vector<128x256xbf16>, vector<32x256xf32> -> vector<32x256xf32>
    %c1_188 = arith.constant 1 : index
    %c0_189 = arith.constant 0 : index
    %c0_190 = arith.constant 0 : index
    %518 = vector.load %arg16[%c1_188, %c0_189, %c0_190] : memref<2x1x256xf32, #tpu.memory_space<vmem>>, vector<1x1x256xf32>
    %519 = vector.shape_cast %518 : vector<1x1x256xf32> to vector<1x256xf32>
    %520 = vector.broadcast %519 : vector<1x256xf32> to vector<32x256xf32>
    %521 = arith.addf %517, %520 : vector<32x256xf32>
    %cst_191 = arith.constant 5.000000e-01 : f32
    %522 = vector.broadcast %cst_191 : f32 to vector<32x256xf32>
    %523 = arith.mulf %522, %521 : vector<32x256xf32>
    %cst_192 = arith.constant 4.471500e-02 : f32
    %524 = vector.broadcast %cst_192 : f32 to vector<32x256xf32>
    %525 = arith.mulf %524, %521 : vector<32x256xf32>
    %526 = arith.mulf %525, %521 : vector<32x256xf32>
    %527 = arith.mulf %526, %521 : vector<32x256xf32>
    %528 = arith.addf %521, %527 : vector<32x256xf32>
    %cst_193 = arith.constant 0.797884583 : f32
    %529 = vector.broadcast %cst_193 : f32 to vector<32x256xf32>
    %530 = arith.mulf %529, %528 : vector<32x256xf32>
    %531 = math.tanh %530 : vector<32x256xf32>
    %cst_194 = arith.constant 1.000000e+00 : f32
    %532 = vector.broadcast %cst_194 : f32 to vector<32x256xf32>
    %533 = arith.addf %532, %531 : vector<32x256xf32>
    %534 = arith.mulf %523, %533 : vector<32x256xf32>
    %535 = arith.truncf %534 : vector<32x256xf32> to vector<32x256xbf16>
    %c1_195 = arith.constant 1 : index
    %c0_196 = arith.constant 0 : index
    %c0_197 = arith.constant 0 : index
    %536 = vector.load %arg17[%c1_195, %c0_196, %c0_197] : memref<2x256x128xbf16, #tpu.memory_space<vmem>>, vector<1x256x128xbf16>
    %537 = vector.shape_cast %536 : vector<1x256x128xbf16> to vector<256x128xbf16>
    %cst_198 = arith.constant dense<0.000000e+00> : vector<32x128xf32>
    %538 = tpu.matmul %535, %537, %cst_198 {dimension_numbers = #tpu.dot_dimension_numbers<[1], [0], [0], [1], [0, 0, 1, 1], [], []>} : vector<32x256xbf16>, vector<256x128xbf16>, vector<32x128xf32> -> vector<32x128xf32>
    %c1_199 = arith.constant 1 : index
    %c0_200 = arith.constant 0 : index
    %c0_201 = arith.constant 0 : index
    %539 = vector.load %arg18[%c1_199, %c0_200, %c0_201] : memref<2x1x128xf32, #tpu.memory_space<vmem>>, vector<1x1x128xf32>
    %540 = vector.shape_cast %539 : vector<1x1x128xf32> to vector<1x128xf32>
    %541 = vector.broadcast %540 : vector<1x128xf32> to vector<32x128xf32>
    %542 = arith.addf %538, %541 : vector<32x128xf32>
    %543 = arith.addf %513, %542 : vector<32x128xf32>
    %c1_202 = arith.constant 1 : index
    %c0_203 = arith.constant 0 : index
    %c0_204 = arith.constant 0 : index
    %544 = vector.load %arg19[%c1_202, %c0_203, %c0_204] : memref<2x1x128xf32, #tpu.memory_space<vmem>>, vector<1x1x128xf32>
    %545 = vector.shape_cast %544 : vector<1x1x128xf32> to vector<1x128xf32>
    %c1_205 = arith.constant 1 : index
    %c0_206 = arith.constant 0 : index
    %c0_207 = arith.constant 0 : index
    %546 = vector.load %arg20[%c1_205, %c0_206, %c0_207] : memref<2x1x128xf32, #tpu.memory_space<vmem>>, vector<1x1x128xf32>
    %547 = vector.shape_cast %546 : vector<1x1x128xf32> to vector<1x128xf32>
    %cst_208 = arith.constant dense<0.000000e+00> : vector<32xf32>
    %548 = vector.multi_reduction <add>, %543, %cst_208 [1] : vector<32x128xf32> to vector<32xf32>
    %549 = vector.shape_cast %548 : vector<32xf32> to vector<32x1xf32>
    %cst_209 = arith.constant 1.280000e+02 : f32
    %550 = vector.broadcast %cst_209 : f32 to vector<32x1xf32>
    %551 = arith.divf %549, %550 : vector<32x1xf32>
    %552 = vector.broadcast %551 : vector<32x1xf32> to vector<32x128xf32>
    %553 = arith.subf %543, %552 : vector<32x128xf32>
    %554 = arith.mulf %553, %553 : vector<32x128xf32>
    %cst_210 = arith.constant dense<0.000000e+00> : vector<32xf32>
    %555 = vector.multi_reduction <add>, %554, %cst_210 [1] : vector<32x128xf32> to vector<32xf32>
    %556 = vector.shape_cast %555 : vector<32xf32> to vector<32x1xf32>
    %cst_211 = arith.constant 1.280000e+02 : f32
    %557 = vector.broadcast %cst_211 : f32 to vector<32x1xf32>
    %558 = arith.divf %556, %557 : vector<32x1xf32>
    %559 = vector.broadcast %551 : vector<32x1xf32> to vector<32x128xf32>
    %560 = arith.subf %543, %559 : vector<32x128xf32>
    %cst_212 = arith.constant 9.99999996E-13 : f32
    %561 = vector.broadcast %cst_212 : f32 to vector<32x1xf32>
    %562 = arith.addf %558, %561 : vector<32x1xf32>
    %563 = math.rsqrt %562 : vector<32x1xf32>
    %564 = vector.broadcast %563 : vector<32x1xf32> to vector<32x128xf32>
    %565 = arith.mulf %560, %564 : vector<32x128xf32>
    %566 = vector.broadcast %545 : vector<1x128xf32> to vector<32x128xf32>
    %567 = arith.mulf %565, %566 : vector<32x128xf32>
    %568 = vector.broadcast %547 : vector<1x128xf32> to vector<32x128xf32>
    %569 = arith.addf %567, %568 : vector<32x128xf32>
    %570 = vector.extract_strided_slice %569 {offsets = [0, 0], sizes = [1, 128], strides = [1, 1]} : vector<32x128xf32> to vector<1x128xf32>
    %571 = vector.extract_strided_slice %569 {offsets = [16, 0], sizes = [1, 128], strides = [1, 1]} : vector<32x128xf32> to vector<1x128xf32>
    %572 = tpu.concatenate %570, %571 in 0 : vector<1x128xf32>, vector<1x128xf32> -> vector<2x128xf32>
    %573 = arith.truncf %572 : vector<2x128xf32> to vector<2x128xbf16>
    %c0_213 = arith.constant 0 : index
    %c0_214 = arith.constant 0 : index
    %574 = vector.load %arg21[%c0_213, %c0_214] : memref<128x128xbf16, #tpu.memory_space<vmem>>, vector<128x128xbf16>
    %cst_215 = arith.constant dense<0.000000e+00> : vector<2x128xf32>
    %575 = tpu.matmul %573, %574, %cst_215 {dimension_numbers = #tpu.dot_dimension_numbers<[1], [0], [0], [1], [0, 0, 1, 1], [], []>} : vector<2x128xbf16>, vector<128x128xbf16>, vector<2x128xf32> -> vector<2x128xf32>
    %c0_216 = arith.constant 0 : index
    %c0_217 = arith.constant 0 : index
    %576 = vector.load %arg22[%c0_216, %c0_217] : memref<1x128xf32, #tpu.memory_space<vmem>>, vector<1x128xf32>
    %577 = vector.broadcast %576 : vector<1x128xf32> to vector<2x128xf32>
    %578 = arith.addf %575, %577 : vector<2x128xf32>
    %579 = math.tanh %578 : vector<2x128xf32>
    %580 = arith.truncf %579 : vector<2x128xf32> to vector<2x128xbf16>
    %c0_218 = arith.constant 0 : index
    %c0_219 = arith.constant 0 : index
    %581 = vector.load %arg23[%c0_218, %c0_219] : memref<128x2xbf16, #tpu.memory_space<vmem>>, vector<128x2xbf16>
    %cst_220 = arith.constant dense<0.000000e+00> : vector<2x2xf32>
    %582 = tpu.matmul %580, %581, %cst_220 {dimension_numbers = #tpu.dot_dimension_numbers<[1], [0], [0], [1], [0, 0, 1, 1], [], []>} : vector<2x128xbf16>, vector<128x2xbf16>, vector<2x2xf32> -> vector<2x2xf32>
    %c0_221 = arith.constant 0 : index
    %c0_222 = arith.constant 0 : index
    %583 = vector.load %arg24[%c0_221, %c0_222] : memref<1x2xf32, #tpu.memory_space<vmem>>, vector<1x2xf32>
    %584 = vector.broadcast %583 : vector<1x2xf32> to vector<2x2xf32>
    %585 = arith.addf %582, %584 : vector<2x2xf32>
    %c0_223 = arith.constant 0 : index
    %c0_224 = arith.constant 0 : index
    %586 = vector.load %arg25[%c0_223, %c0_224] : memref<2x2xf32, #tpu.memory_space<vmem>>, vector<2x2xf32>
    tpu.vector_store %arg25[%c0_223, %c0_224], %585 {strides = array<i32>} : memref<2x2xf32, #tpu.memory_space<vmem>>, vector<2x2xf32>,
    return
  }
  func.func @transform_0(%arg0: i32) -> (i32, i32) {
    %c0_i32 = arith.constant 0 : i32
    %c0_i32_0 = arith.constant 0 : i32
    %c0_i32_1 = arith.constant 0 : i32
    return %c0_i32, %c0_i32_0 : i32, i32
  }
  func.func @transform_1(%arg0: i32) -> (i32, i32, i32) {
    %c0_i32 = arith.constant 0 : i32
    %c0_i32_0 = arith.constant 0 : i32
    %c0_i32_1 = arith.constant 0 : i32
    %c0_i32_2 = arith.constant 0 : i32
    return %c0_i32, %c0_i32_0, %c0_i32_1 : i32, i32, i32
  }
  func.func @transform_2(%arg0: i32) -> (i32, i32) {
    %c0_i32 = arith.constant 0 : i32
    %c0_i32_0 = arith.constant 0 : i32
    %c0_i32_1 = arith.constant 0 : i32
    return %c0_i32, %c0_i32_0 : i32, i32
  }
  func.func @transform_3(%arg0: i32) -> (i32, i32) {
    %c0_i32 = arith.constant 0 : i32
    %c0_i32_0 = arith.constant 0 : i32
    %c0_i32_1 = arith.constant 0 : i32
    return %c0_i32, %c0_i32_0 : i32, i32
  }
  func.func @transform_4(%arg0: i32) -> (i32, i32, i32) {
    %c0_i32 = arith.constant 0 : i32
    %c0_i32_0 = arith.constant 0 : i32
    %c0_i32_1 = arith.constant 0 : i32
    %c0_i32_2 = arith.constant 0 : i32
    return %c0_i32, %c0_i32_0, %c0_i32_1 : i32, i32, i32
  }
  func.func @transform_5(%arg0: i32) -> (i32, i32, i32) {
    %c0_i32 = arith.constant 0 : i32
    %c0_i32_0 = arith.constant 0 : i32
    %c0_i32_1 = arith.constant 0 : i32
    %c0_i32_2 = arith.constant 0 : i32
    return %c0_i32, %c0_i32_0, %c0_i32_1 : i32, i32, i32
  }
  func.func @transform_6(%arg0: i32) -> (i32, i32, i32) {
    %c0_i32 = arith.constant 0 : i32
    %c0_i32_0 = arith.constant 0 : i32
    %c0_i32_1 = arith.constant 0 : i32
    %c0_i32_2 = arith.constant 0 : i32
    return %c0_i32, %c0_i32_0, %c0_i32_1 : i32, i32, i32
  }
  func.func @transform_7(%arg0: i32) -> (i32, i32, i32) {
    %c0_i32 = arith.constant 0 : i32
    %c0_i32_0 = arith.constant 0 : i32
    %c0_i32_1 = arith.constant 0 : i32
    %c0_i32_2 = arith.constant 0 : i32
    return %c0_i32, %c0_i32_0, %c0_i32_1 : i32, i32, i32
  }
  func.func @transform_8(%arg0: i32) -> (i32, i32, i32) {
    %c0_i32 = arith.constant 0 : i32
    %c0_i32_0 = arith.constant 0 : i32
    %c0_i32_1 = arith.constant 0 : i32
    %c0_i32_2 = arith.constant 0 : i32
    return %c0_i32, %c0_i32_0, %c0_i32_1 : i32, i32, i32
  }
  func.func @transform_9(%arg0: i32) -> (i32, i32, i32) {
    %c0_i32 = arith.constant 0 : i32
    %c0_i32_0 = arith.constant 0 : i32
    %c0_i32_1 = arith.constant 0 : i32
    %c0_i32_2 = arith.constant 0 : i32
    return %c0_i32, %c0_i32_0, %c0_i32_1 : i32, i32, i32
  }
  func.func @transform_10(%arg0: i32) -> (i32, i32, i32) {
    %c0_i32 = arith.constant 0 : i32
    %c0_i32_0 = arith.constant 0 : i32
    %c0_i32_1 = arith.constant 0 : i32
    %c0_i32_2 = arith.constant 0 : i32
    return %c0_i32, %c0_i32_0, %c0_i32_1 : i32, i32, i32
  }
  func.func @transform_11(%arg0: i32) -> (i32, i32, i32) {
    %c0_i32 = arith.constant 0 : i32
    %c0_i32_0 = arith.constant 0 : i32
    %c0_i32_1 = arith.constant 0 : i32
    %c0_i32_2 = arith.constant 0 : i32
    return %c0_i32, %c0_i32_0, %c0_i32_1 : i32, i32, i32
  }
  func.func @transform_12(%arg0: i32) -> (i32, i32, i32) {
    %c0_i32 = arith.constant 0 : i32
    %c0_i32_0 = arith.constant 0 : i32
    %c0_i32_1 = arith.constant 0 : i32
    %c0_i32_2 = arith.constant 0 : i32
    return %c0_i32, %c0_i32_0, %c0_i32_1 : i32, i32, i32
  }
  func.func @transform_13(%arg0: i32) -> (i32, i32, i32) {
    %c0_i32 = arith.constant 0 : i32
    %c0_i32_0 = arith.constant 0 : i32
    %c0_i32_1 = arith.constant 0 : i32
    %c0_i32_2 = arith.constant 0 : i32
    return %c0_i32, %c0_i32_0, %c0_i32_1 : i32, i32, i32
  }
  func.func @transform_14(%arg0: i32) -> (i32, i32, i32) {
    %c0_i32 = arith.constant 0 : i32
    %c0_i32_0 = arith.constant 0 : i32
    %c0_i32_1 = arith.constant 0 : i32
    %c0_i32_2 = arith.constant 0 : i32
    return %c0_i32, %c0_i32_0, %c0_i32_1 : i32, i32, i32
  }
  func.func @transform_15(%arg0: i32) -> (i32, i32, i32) {
    %c0_i32 = arith.constant 0 : i32
    %c0_i32_0 = arith.constant 0 : i32
    %c0_i32_1 = arith.constant 0 : i32
    %c0_i32_2 = arith.constant 0 : i32
    return %c0_i32, %c0_i32_0, %c0_i32_1 : i32, i32, i32
  }
  func.func @transform_16(%arg0: i32) -> (i32, i32, i32) {
    %c0_i32 = arith.constant 0 : i32
    %c0_i32_0 = arith.constant 0 : i32
    %c0_i32_1 = arith.constant 0 : i32
    %c0_i32_2 = arith.constant 0 : i32
    return %c0_i32, %c0_i32_0, %c0_i32_1 : i32, i32, i32
  }
  func.func @transform_17(%arg0: i32) -> (i32, i32, i32) {
    %c0_i32 = arith.constant 0 : i32
    %c0_i32_0 = arith.constant 0 : i32
    %c0_i32_1 = arith.constant 0 : i32
    %c0_i32_2 = arith.constant 0 : i32
    return %c0_i32, %c0_i32_0, %c0_i32_1 : i32, i32, i32
  }
  func.func @transform_18(%arg0: i32) -> (i32, i32, i32) {
    %c0_i32 = arith.constant 0 : i32
    %c0_i32_0 = arith.constant 0 : i32
    %c0_i32_1 = arith.constant 0 : i32
    %c0_i32_2 = arith.constant 0 : i32
    return %c0_i32, %c0_i32_0, %c0_i32_1 : i32, i32, i32
  }
  func.func @transform_19(%arg0: i32) -> (i32, i32, i32) {
    %c0_i32 = arith.constant 0 : i32
    %c0_i32_0 = arith.constant 0 : i32
    %c0_i32_1 = arith.constant 0 : i32
    %c0_i32_2 = arith.constant 0 : i32
    return %c0_i32, %c0_i32_0, %c0_i32_1 : i32, i32, i32
  }
  func.func @transform_20(%arg0: i32) -> (i32, i32) {
    %c0_i32 = arith.constant 0 : i32
    %c0_i32_0 = arith.constant 0 : i32
    %c0_i32_1 = arith.constant 0 : i32
    return %c0_i32, %c0_i32_0 : i32, i32
  }
  func.func @transform_21(%arg0: i32) -> (i32, i32) {
    %c0_i32 = arith.constant 0 : i32
    %c0_i32_0 = arith.constant 0 : i32
    %c0_i32_1 = arith.constant 0 : i32
    return %c0_i32, %c0_i32_0 : i32, i32
  }
  func.func @transform_22(%arg0: i32) -> (i32, i32) {
    %c0_i32 = arith.constant 0 : i32
    %c0_i32_0 = arith.constant 0 : i32
    %c0_i32_1 = arith.constant 0 : i32
    return %c0_i32, %c0_i32_0 : i32, i32
  }
  func.func @transform_23(%arg0: i32) -> (i32, i32) {
    %c0_i32 = arith.constant 0 : i32
    %c0_i32_0 = arith.constant 0 : i32
    %c0_i32_1 = arith.constant 0 : i32
    return %c0_i32, %c0_i32_0 : i32, i32
  }
  func.func @transform_24(%arg0: i32) -> (i32, i32) {
    %c0_i32 = arith.constant 0 : i32
    %c0_i32_0 = arith.constant 0 : i32
    %c0_i32_1 = arith.constant 0 : i32
    return %c0_i32, %c0_i32_0 : i32, i32
  }
}

</mosaic_0001>

<llo_original>
// kernel: bert_classifier_forward.1
$region0: #{bert_classifier_forward.1}
  #allocation0 [shape = 'u32[]', space=smem, size = 0x4, offset = 0x4, fixed_abs, tag = 'smem constant byte address 0x4 - core index']
  #allocation1 [shape = 'u32[72,128]{1,0:T(1,128)}', space=vmem, size = 0x9000, scoped, tag = 'internal scratch']
  %s0 = inlined_call_operand.vmem [shape: f32[32,128], index: 0, kind: input, shape index: {}]
  %s1 = inlined_call_operand.vmem [shape: f32[2,1,16], index: 1, kind: input, shape index: {}]
  %s2 = inlined_call_operand.vmem [shape: f32[1,128], index: 2, kind: input, shape index: {}]
  %s3 = inlined_call_operand.vmem [shape: f32[1,128], index: 3, kind: input, shape index: {}]
  %s4 = inlined_call_operand.vmem [shape: bf16[2,128,128], index: 4, kind: input, shape index: {}]
  %s5 = inlined_call_operand.vmem [shape: f32[2,1,128], index: 5, kind: input, shape index: {}]
  %s6 = inlined_call_operand.hbm [shape: bf16[2,128,128], index: 6, kind: input, shape index: {}]
  %s7 = inlined_call_operand.vmem [shape: f32[2,1,128], index: 7, kind: input, shape index: {}]
  %s8 = inlined_call_operand.hbm [shape: bf16[2,128,128], index: 8, kind: input, shape index: {}]
  %s9 = inlined_call_operand.vmem [shape: f32[2,1,128], index: 9, kind: input, shape index: {}]
  %s10 = inlined_call_operand.hbm [shape: bf16[2,128,128], index: 10, kind: input, shape index: {}]
  %s11 = inlined_call_operand.vmem [shape: f32[2,1,128], index: 11, kind: input, shape index: {}]
  %s12 = inlined_call_operand.vmem [shape: f32[2,1,128], index: 12, kind: input, shape index: {}]
  %s13 = inlined_call_operand.vmem [shape: f32[2,1,128], index: 13, kind: input, shape index: {}]
  %s14 = inlined_call_operand.vmem [shape: bf16[2,128,256], index: 14, kind: input, shape index: {}]
  %s15 = inlined_call_operand.vmem [shape: f32[2,1,256], index: 15, kind: input, shape index: {}]
  %s16 = inlined_call_operand.vmem [shape: bf16[2,256,128], index: 16, kind: input, shape index: {}]
  %s17 = inlined_call_operand.vmem [shape: f32[2,1,128], index: 17, kind: input, shape index: {}]
  %s18 = inlined_call_operand.vmem [shape: f32[2,1,128], index: 18, kind: input, shape index: {}]
  %s19 = inlined_call_operand.vmem [shape: f32[2,1,128], index: 19, kind: input, shape index: {}]
  %s20 = inlined_call_operand.hbm [shape: bf16[128,128], index: 20, kind: input, shape index: {}]
  %s21 = inlined_call_operand.vmem [shape: f32[1,128], index: 21, kind: input, shape index: {}]
  %s22 = inlined_call_operand.vmem [shape: bf16[128,2], index: 22, kind: input, shape index: {}]
  %s23 = inlined_call_operand.vmem [shape: f32[1,2], index: 23, kind: input, shape index: {}]
  %s24 = inlined_call_operand.hbm [shape: f32[2,2], index: 24, kind: output, shape index: {}]
  %s25 = sld [smem:[#allocation0]]
  $region122: #{bert_classifier_forward.1} parent=0
    _
  %s27 = ssub.s32 1, %s25
  %s28 = scalar_select 0, %s27, %s25
  $region1: #{bert_classifier_forward.1} parent=0
    #allocation2 [shape = 'u8[65536]{0}', space=vmem, size = 0x10000, scoped, tag = 'input window, operand 6, single buffered']
    #allocation3 [shape = 's32[1]{0}', space=sflag, size = 0x4, scoped, tag = 'scoped memory for bert_classifier_forward.1']
    #allocation4 [shape = 's32[1]{0}', space=sflag, size = 0x4, scoped, tag = 'scoped memory for bert_classifier_forward.1']
    #allocation5 [shape = 'u8[65536]{0}', space=vmem, size = 0x10000, scoped, tag = 'input window, operand 8, single buffered']
    #allocation6 [shape = 's32[1]{0}', space=sflag, size = 0x4, scoped, tag = 'scoped memory for bert_classifier_forward.1']
    #allocation7 [shape = 'u8[65536]{0}', space=vmem, size = 0x10000, scoped, tag = 'input window, operand 10, single buffered']
    #allocation8 [shape = 'u8[32768]{0}', space=vmem, size = 0x8000, scoped, tag = 'input window, operand 20, single buffered']
    #allocation9 [shape = 's32[1]{0}', space=sflag, size = 0x4, scoped, tag = 'scoped memory for bert_classifier_forward.1']
    #allocation10 [shape = 'u8[1024]{0}', space=vmem, size = 0x400, scoped, tag = 'output window, operand 0, single buffered']
    %29 = vsyncpa [#allocation3], 0
    %30 = vsyncpa [#allocation6], 0
    %31 = vsyncpa [#allocation9], 0
    %32 = vsyncpa [#allocation4], 0
    // Predicated region
    $region2: #{bert_classifier_forward.1} parent=1 // pred_check
      _
    $region3: #{bert_classifier_forward.1} parent=1 // pred_check_branch
      %34 = sbr.rel (0) target = $region5
    $region4: #{bert_classifier_forward.1} parent=1 // pred_region
      _
    $region5: #{bert_classifier_forward.1} parent=1 // pred_fallthru
      _
    // Predicated region
    $region6: #{bert_classifier_forward.1} parent=1 // pred_check
      _
    $region7: #{bert_classifier_forward.1} parent=1 // pred_check_branch
      %36 = sbr.rel (0) target = $region9
    $region8: #{bert_classifier_forward.1} parent=1 // pred_region
      _
    $region9: #{bert_classifier_forward.1} parent=1 // pred_fallthru
      _
    // Predicated region
    $region10: #{bert_classifier_forward.1} parent=1 // pred_check
      _
    $region11: #{bert_classifier_forward.1} parent=1 // pred_check_branch
      %38 = sbr.rel (0) target = $region13
    $region12: #{bert_classifier_forward.1} parent=1 // pred_region
      _
    $region13: #{bert_classifier_forward.1} parent=1 // pred_fallthru
      _
    // Predicated region
    $region14: #{bert_classifier_forward.1} parent=1 // pred_check
      _
    $region15: #{bert_classifier_forward.1} parent=1 // pred_check_branch
      %40 = sbr.rel (0) target = $region17
    $region16: #{bert_classifier_forward.1} parent=1 // pred_region
      _
    $region17: #{bert_classifier_forward.1} parent=1 // pred_fallthru
      _
    // Predicated region
    $region18: #{bert_classifier_forward.1} parent=1 // pred_check
      _
    $region19: #{bert_classifier_forward.1} parent=1 // pred_check_branch
      %42 = sbr.rel (0) target = $region21
    $region20: #{bert_classifier_forward.1} parent=1 // pred_region
      _
    $region21: #{bert_classifier_forward.1} parent=1 // pred_fallthru
      _
    // Predicated region
    $region22: #{bert_classifier_forward.1} parent=1 // pred_check
      _
    $region23: #{bert_classifier_forward.1} parent=1 // pred_check_branch
      %44 = sbr.rel (0) target = $region25
    $region24: #{bert_classifier_forward.1} parent=1 // pred_region
      _
    $region25: #{bert_classifier_forward.1} parent=1 // pred_fallthru
      _
    // Predicated region
    $region26: #{bert_classifier_forward.1} parent=1 // pred_check
      _
    $region27: #{bert_classifier_forward.1} parent=1 // pred_check_branch
      %46 = sbr.rel (0) target = $region29
    $region28: #{bert_classifier_forward.1} parent=1 // pred_region
      %48 = vsyncadd [#allocation3], 0
      %s49 = sshll.u32 %s6, 4
      %s50 = int_to_ptr.hbm [resolvable:$true] %s49
      %s51 = sshll.u32 [#allocation2], 4
      %s52 = int_to_ptr.vmem [resolvable:$true] %s51
      %57 = dma.hbm_to_vmem [thread:$0]  %s50, 2048, %s52, [#allocation3], 64, 64, 4
    $region29: #{bert_classifier_forward.1} parent=1 // pred_fallthru
      _
    // Predicated region
    $region30: #{bert_classifier_forward.1} parent=1 // pred_check
      _
    $region31: #{bert_classifier_forward.1} parent=1 // pred_check_branch
      %59 = sbr.rel (0) target = $region33
    $region32: #{bert_classifier_forward.1} parent=1 // pred_region
      _
    $region33: #{bert_classifier_forward.1} parent=1 // pred_fallthru
      _
    // Predicated region
    $region34: #{bert_classifier_forward.1} parent=1 // pred_check
      _
    $region35: #{bert_classifier_forward.1} parent=1 // pred_check_branch
      %61 = sbr.rel (0) target = $region37
    $region36: #{bert_classifier_forward.1} parent=1 // pred_region
      %63 = vsyncadd [#allocation6], 0
      %s64 = sshll.u32 %s8, 4
      %s65 = int_to_ptr.hbm [resolvable:$true] %s64
      %s66 = sshll.u32 [#allocation5], 4
      %s67 = int_to_ptr.vmem [resolvable:$true] %s66
      %72 = dma.hbm_to_vmem [thread:$0]  %s65, 2048, %s67, [#allocation6], 64, 64, 4
    $region37: #{bert_classifier_forward.1} parent=1 // pred_fallthru
      _
    // Predicated region
    $region38: #{bert_classifier_forward.1} parent=1 // pred_check
      _
    $region39: #{bert_classifier_forward.1} parent=1 // pred_check_branch
      %74 = sbr.rel (0) target = $region41
    $region40: #{bert_classifier_forward.1} parent=1 // pred_region
      _
    $region41: #{bert_classifier_forward.1} parent=1 // pred_fallthru
      _
    // Predicated region
    $region42: #{bert_classifier_forward.1} parent=1 // pred_check
      _
    $region43: #{bert_classifier_forward.1} parent=1 // pred_check_branch
      %76 = sbr.rel (0) target = $region45
    $region44: #{bert_classifier_forward.1} parent=1 // pred_region
      %78 = vsyncadd [#allocation6], 0
      %s79 = sshll.u32 %s10, 4
      %s80 = int_to_ptr.hbm [resolvable:$true] %s79
      %s81 = sshll.u32 [#allocation7], 4
      %s82 = int_to_ptr.vmem [resolvable:$true] %s81
      %87 = dma.hbm_to_vmem [thread:$0]  %s80, 2048, %s82, [#allocation6], 64, 64, 4
    $region45: #{bert_classifier_forward.1} parent=1 // pred_fallthru
      _
    // Predicated region
    $region46: #{bert_classifier_forward.1} parent=1 // pred_check
      _
    $region47: #{bert_classifier_forward.1} parent=1 // pred_check_branch
      %89 = sbr.rel (0) target = $region49
    $region48: #{bert_classifier_forward.1} parent=1 // pred_region
      _
    $region49: #{bert_classifier_forward.1} parent=1 // pred_fallthru
      _
    // Predicated region
    $region50: #{bert_classifier_forward.1} parent=1 // pred_check
      _
    $region51: #{bert_classifier_forward.1} parent=1 // pred_check_branch
      %91 = sbr.rel (0) target = $region53
    $region52: #{bert_classifier_forward.1} parent=1 // pred_region
      _
    $region53: #{bert_classifier_forward.1} parent=1 // pred_fallthru
      _
    // Predicated region
    $region54: #{bert_classifier_forward.1} parent=1 // pred_check
      _
    $region55: #{bert_classifier_forward.1} parent=1 // pred_check_branch
      %93 = sbr.rel (0) target = $region57
    $region56: #{bert_classifier_forward.1} parent=1 // pred_region
      _
    $region57: #{bert_classifier_forward.1} parent=1 // pred_fallthru
      _
    // Predicated region
    $region58: #{bert_classifier_forward.1} parent=1 // pred_check
      _
    $region59: #{bert_classifier_forward.1} parent=1 // pred_check_branch
      %95 = sbr.rel (0) target = $region61
    $region60: #{bert_classifier_forward.1} parent=1 // pred_region
      _
    $region61: #{bert_classifier_forward.1} parent=1 // pred_fallthru
      _
    // Predicated region
    $region62: #{bert_classifier_forward.1} parent=1 // pred_check
      _
    $region63: #{bert_classifier_forward.1} parent=1 // pred_check_branch
      %97 = sbr.rel (0) target = $region65
    $region64: #{bert_classifier_forward.1} parent=1 // pred_region
      _
    $region65: #{bert_classifier_forward.1} parent=1 // pred_fallthru
      _
    // Predicated region
    $region66: #{bert_classifier_forward.1} parent=1 // pred_check
      _
    $region67: #{bert_classifier_forward.1} parent=1 // pred_check_branch
      %99 = sbr.rel (0) target = $region69
    $region68: #{bert_classifier_forward.1} parent=1 // pred_region
      _
    $region69: #{bert_classifier_forward.1} parent=1 // pred_fallthru
      _
    // Predicated region
    $region70: #{bert_classifier_forward.1} parent=1 // pred_check
      _
    $region71: #{bert_classifier_forward.1} parent=1 // pred_check_branch
      %101 = sbr.rel (0) target = $region73
    $region72: #{bert_classifier_forward.1} parent=1 // pred_region
      _
    $region73: #{bert_classifier_forward.1} parent=1 // pred_fallthru
      _
    // Predicated region
    $region74: #{bert_classifier_forward.1} parent=1 // pred_check
      _
    $region75: #{bert_classifier_forward.1} parent=1 // pred_check_branch
      %103 = sbr.rel (0) target = $region77
    $region76: #{bert_classifier_forward.1} parent=1 // pred_region
      _
    $region77: #{bert_classifier_forward.1} parent=1 // pred_fallthru
      _
    // Predicated region
    $region78: #{bert_classifier_forward.1} parent=1 // pred_check
      _
    $region79: #{bert_classifier_forward.1} parent=1 // pred_check_branch
      %105 = sbr.rel (0) target = $region81
    $region80: #{bert_classifier_forward.1} parent=1 // pred_region
      _
    $region81: #{bert_classifier_forward.1} parent=1 // pred_fallthru
      _
    // Predicated region
    $region82: #{bert_classifier_forward.1} parent=1 // pred_check
      _
    $region83: #{bert_classifier_forward.1} parent=1 // pred_check_branch
      %107 = sbr.rel (0) target = $region85
    $region84: #{bert_classifier_forward.1} parent=1 // pred_region
      %109 = vsyncadd [#allocation9], 0
      %s110 = sshll.u32 %s20, 4
      %s111 = int_to_ptr.hbm [resolvable:$true] %s110
      %s112 = sshll.u32 [#allocation8], 4
      %s113 = int_to_ptr.vmem [resolvable:$true] %s112
      %118 = dma.hbm_to_vmem [thread:$0]  %s111, 1024, %s113, [#allocation9], 64, 64, 4
    $region85: #{bert_classifier_forward.1} parent=1 // pred_fallthru
      _
    // Predicated region
    $region86: #{bert_classifier_forward.1} parent=1 // pred_check
      _
    $region87: #{bert_classifier_forward.1} parent=1 // pred_check_branch
      %120 = sbr.rel (0) target = $region89
    $region88: #{bert_classifier_forward.1} parent=1 // pred_region
      _
    $region89: #{bert_classifier_forward.1} parent=1 // pred_fallthru
      _
    // Predicated region
    $region90: #{bert_classifier_forward.1} parent=1 // pred_check
      _
    $region91: #{bert_classifier_forward.1} parent=1 // pred_check_branch
      %122 = sbr.rel (0) target = $region93
    $region92: #{bert_classifier_forward.1} parent=1 // pred_region
      _
    $region93: #{bert_classifier_forward.1} parent=1 // pred_fallthru
      _
    // Predicated region
    $region94: #{bert_classifier_forward.1} parent=1 // pred_check
      _
    $region95: #{bert_classifier_forward.1} parent=1 // pred_check_branch
      %124 = sbr.rel (0) target = $region97
    $region96: #{bert_classifier_forward.1} parent=1 // pred_region
      _
    $region97: #{bert_classifier_forward.1} parent=1 // pred_fallthru
      _
    // Predicated region
    $region98: #{bert_classifier_forward.1} parent=1 // pred_check
      _
    $region99: #{bert_classifier_forward.1} parent=1 // pred_check_branch
      %126 = sbr.rel (0) target = $region101
    $region100: #{bert_classifier_forward.1} parent=1 // pred_region
      %128 = dma.done [#allocation3], 2048
    $region101: #{bert_classifier_forward.1} parent=1 // pred_fallthru
      _
    // Predicated region
    $region102: #{bert_classifier_forward.1} parent=1 // pred_check
      _
    $region103: #{bert_classifier_forward.1} parent=1 // pred_check_branch
      %130 = sbr.rel (0) target = $region105
    $region104: #{bert_classifier_forward.1} parent=1 // pred_region
      %132 = dma.done [#allocation6], 2048
    $region105: #{bert_classifier_forward.1} parent=1 // pred_fallthru
      _
    // Predicated region
    $region106: #{bert_classifier_forward.1} parent=1 // pred_check
      _
    $region107: #{bert_classifier_forward.1} parent=1 // pred_check_branch
      %134 = sbr.rel (0) target = $region109
    $region108: #{bert_classifier_forward.1} parent=1 // pred_region
      %136 = dma.done [#allocation6], 2048
    $region109: #{bert_classifier_forward.1} parent=1 // pred_fallthru
      _
    // Predicated region
    $region110: #{bert_classifier_forward.1} parent=1 // pred_check
      _
    $region111: #{bert_classifier_forward.1} parent=1 // pred_check_branch
      %138 = sbr.rel (0) target = $region113
    $region112: #{bert_classifier_forward.1} parent=1 // pred_region
      %140 = dma.done [#allocation9], 1024
    $region113: #{bert_classifier_forward.1} parent=1 // pred_fallthru
      _
    %v141 = vld [vmem:[%s0] sm:$0xff]
    %v142 = vld [vmem:[%s0 + $0x8] sm:$0xff]
    %v143 = vld [vmem:[%s0 + $0x10] sm:$0xff]
    %v144 = vld [vmem:[%s0 + $0x18] sm:$0xff]
    %v145 = vld [vmem:[%s2] sm:$0x1]
    %v146 = vld [vmem:[%s3] sm:$0x1]
    %147 = vadd.xlane.f32.xlu0 %v141
    %v148 = vpop.xlane.xlu0 %147
    %149 = vadd.xlane.f32.xlu0 %v142
    %v150 = vpop.xlane.xlu0 %149
    %151 = vadd.xlane.f32.xlu0 %v143
    %v152 = vpop.xlane.xlu0 %151
    %153 = vadd.xlane.f32.xlu0 %v144
    %v154 = vpop.xlane.xlu0 %153
    %v155 = vrcp.pop 128.0
    %v156 = vmul.f32 128.0, %v155
    %v157 = vsub.f32 1.0, %v156
    %v158 = vmul.f32 %v155, %v157
    %v159 = vadd.f32 %v155, %v158
    %vm160 = vweird.f32 %v155
    %v161 = vsel %vm160, %v155, %v159
    %v162 = vmul.f32 %v148, %v161
    %v163 = vmul.f32 %v150, %v161
    %v164 = vmul.f32 %v152, %v161
    %v165 = vmul.f32 %v154, %v161
    %v166 = vsub.f32 %v141, %v162
    %v167 = vsub.f32 %v142, %v163
    %v168 = vsub.f32 %v143, %v164
    %v169 = vsub.f32 %v144, %v165
    %v170 = vmul.f32 %v166, %v166
    %v171 = vmul.f32 %v167, %v167
    %v172 = vmul.f32 %v168, %v168
    %v173 = vmul.f32 %v169, %v169
    %174 = vadd.xlane.f32.xlu0 %v170
    %v175 = vpop.xlane.xlu0 %174
    %176 = vadd.xlane.f32.xlu0 %v171
    %v177 = vpop.xlane.xlu0 %176
    %178 = vadd.xlane.f32.xlu0 %v172
    %v179 = vpop.xlane.xlu0 %178
    %180 = vadd.xlane.f32.xlu0 %v173
    %v181 = vpop.xlane.xlu0 %180
    %v182 = vmul.f32 %v175, %v161
    %v183 = vmul.f32 %v177, %v161
    %v184 = vmul.f32 %v179, %v161
    %v185 = vmul.f32 %v181, %v161
    %v186 = vadd.f32 %v182, 1e-12
    %v187 = vadd.f32 %v183, 1e-12
    %v188 = vadd.f32 %v184, 1e-12
    %v189 = vadd.f32 %v185, 1e-12
    %v190 = vrsqrt.pop %v186
    %v191 = vmul.f32 %v190, %v186
    %v192 = vmul.f32 %v191, %v190
    %v193 = vmul.f32 0.5, %v192
    %v194 = vsub.f32 1.5, %v193
    %v195 = vmul.f32 %v190, %v194
    %vm196 = vweird.f32 %v186
    %vm197 = vweird.f32 %v190
    %vm198 = vmor %vm196, %vm197
    %v199 = vsel %vm198, %v190, %v195
    %v200 = vrsqrt.pop %v187
    %v201 = vmul.f32 %v200, %v187
    %v202 = vmul.f32 %v201, %v200
    %v203 = vmul.f32 0.5, %v202
    %v204 = vsub.f32 1.5, %v203
    %v205 = vmul.f32 %v200, %v204
    %vm206 = vweird.f32 %v187
    %vm207 = vweird.f32 %v200
    %vm208 = vmor %vm206, %vm207
    %v209 = vsel %vm208, %v200, %v205
    %v210 = vrsqrt.pop %v188
    %v211 = vmul.f32 %v210, %v188
    %v212 = vmul.f32 %v211, %v210
    %v213 = vmul.f32 0.5, %v212
    %v214 = vsub.f32 1.5, %v213
    %v215 = vmul.f32 %v210, %v214
    %vm216 = vweird.f32 %v188
    %vm217 = vweird.f32 %v210
    %vm218 = vmor %vm216, %vm217
    %v219 = vsel %vm218, %v210, %v215
    %v220 = vrsqrt.pop %v189
    %v221 = vmul.f32 %v220, %v189
    %v222 = vmul.f32 %v221, %v220
    %v223 = vmul.f32 0.5, %v222
    %v224 = vsub.f32 1.5, %v223
    %v225 = vmul.f32 %v220, %v224
    %vm226 = vweird.f32 %v189
    %vm227 = vweird.f32 %v220
    %vm228 = vmor %vm226, %vm227
    %v229 = vsel %vm228, %v220, %v225
    %v230 = vmul.f32 %v166, %v199
    %v231 = vmul.f32 %v167, %v209
    %v232 = vmul.f32 %v168, %v219
    %v233 = vmul.f32 %v169, %v229
    %v235 = vperm.slane %v145, 0
    %v237 = vmul.f32 %v230, %v235
    %v238 = vmul.f32 %v231, %v235
    %v239 = vmul.f32 %v232, %v235
    %v240 = vmul.f32 %v233, %v235
    %v242 = vperm.slane %v146, 0
    %v244 = vadd.f32 %v237, %v242
    %v245 = vadd.f32 %v238, %v242
    %v246 = vadd.f32 %v239, %v242
    %v247 = vadd.f32 %v240, %v242
    %v248 = vld [vmem:[%s1] sm:$0x1]
    %v249 = vld [vmem:[%s1 + $0x1] sm:$0x1]
    %v250 = vpack.c.bf16 %v245, %v244
    %v251 = vpack.c.bf16 %v247, %v246
    %v252 = vld [vmem:[%s4] sm:$0xf]
    %v253 = vld [vmem:[%s4 + $0x4] sm:$0xf]
    %v254 = vld [vmem:[%s4 + $0x8] sm:$0xf]
    %v255 = vld [vmem:[%s4 + $0xc] sm:$0xf]
    %v256 = vld [vmem:[%s4 + $0x10] sm:$0xf]
    %v257 = vld [vmem:[%s4 + $0x14] sm:$0xf]
    %v258 = vld [vmem:[%s4 + $0x18] sm:$0xf]
    %v259 = vld [vmem:[%s4 + $0x1c] sm:$0xf]
    %v260 = vld [vmem:[%s4 + $0x20] sm:$0xf]
    %v261 = vld [vmem:[%s4 + $0x24] sm:$0xf]
    %v262 = vld [vmem:[%s4 + $0x28] sm:$0xf]
    %v263 = vld [vmem:[%s4 + $0x2c] sm:$0xf]
    %v264 = vld [vmem:[%s4 + $0x30] sm:$0xf]
    %v265 = vld [vmem:[%s4 + $0x34] sm:$0xf]
    %v266 = vld [vmem:[%s4 + $0x38] sm:$0xf]
    %v267 = vld [vmem:[%s4 + $0x3c] sm:$0xf]
    %v268 = vld [vmem:[%s5] sm:$0x1]
    %v270 = vperm.slane %v268, 0
    %v288 = vunpack.c.l.b16 %v252
    %v289 = vunpack.c.l.b16 %v253
    %v290 = vunpack.c.l.b16 %v254
    %v291 = vunpack.c.l.b16 %v255
    %v292 = vunpack.c.l.b16 %v256
    %v293 = vunpack.c.l.b16 %v257
    %v294 = vunpack.c.l.b16 %v258
    %v295 = vunpack.c.l.b16 %v259
    %v296 = vunpack.c.l.b16 %v260
    %v297 = vunpack.c.l.b16 %v261
    %v298 = vunpack.c.l.b16 %v262
    %v299 = vunpack.c.l.b16 %v263
    %v300 = vunpack.c.l.b16 %v264
    %v301 = vunpack.c.l.b16 %v265
    %v302 = vunpack.c.l.b16 %v266
    %v303 = vunpack.c.l.b16 %v267
    %v304 = vpack.c.b16 %v289, %v288
    %v305 = vpack.c.b16 %v291, %v290
    %v306 = vpack.c.b16 %v293, %v292
    %v307 = vpack.c.b16 %v295, %v294
    %v308 = vpack.c.b16 %v297, %v296
    %v309 = vpack.c.b16 %v299, %v298
    %v310 = vpack.c.b16 %v301, %v300
    %v311 = vpack.c.b16 %v303, %v302
    %320 = vmatpush.bf16.msra.mxu0 %v311
    %321 = vmatpush.bf16.msra.mxu0 %v310
    %322 = vmatpush.bf16.msra.mxu0 %v309
    %323 = vmatpush.bf16.msra.mxu0 %v308
    %324 = vmatpush.bf16.msra.mxu0 %v307
    %325 = vmatpush.bf16.msra.mxu0 %v306
    %326 = vmatpush.bf16.msra.mxu0 %v305
    %327 = vmatpush.bf16.msra.mxu0 %v304
    %328 = vmatmul.bf16.gmra.mxu0 %v250
    %v329 = vpop.f32.mrf.mxu0
    %v330 = vadd.f32 %v270, %v329
    %v331 = vpop.f32.mrf.mxu0
    %v332 = vadd.f32 %v270, %v331
    %333 = vmatmul.bf16.gmra.mxu0 %v251
    %v334 = vpop.f32.mrf.mxu0
    %v335 = vadd.f32 %v270, %v334
    %v336 = vpop.f32.mrf.mxu0
    %v337 = vadd.f32 %v270, %v336
    %338 = vdwg.mxu0
    %v339 = vmul.f32 %v330, 0.17677669
    %v340 = vmul.f32 %v332, 0.17677669
    %v341 = vmul.f32 %v335, 0.17677669
    %v342 = vmul.f32 %v337, 0.17677669
    %v343 = vld [vmem:[#allocation2] sm:$0xf]
    %v344 = vld [vmem:[#allocation2 + $0x4] sm:$0xf]
    %v345 = vld [vmem:[#allocation2 + $0x8] sm:$0xf]
    %v346 = vld [vmem:[#allocation2 + $0xc] sm:$0xf]
    %v347 = vld [vmem:[#allocation2 + $0x10] sm:$0xf]
    %v348 = vld [vmem:[#allocation2 + $0x14] sm:$0xf]
    %v349 = vld [vmem:[#allocation2 + $0x18] sm:$0xf]
    %v350 = vld [vmem:[#allocation2 + $0x1c] sm:$0xf]
    %v351 = vld [vmem:[#allocation2 + $0x20] sm:$0xf]
    %v352 = vld [vmem:[#allocation2 + $0x24] sm:$0xf]
    %v353 = vld [vmem:[#allocation2 + $0x28] sm:$0xf]
    %v354 = vld [vmem:[#allocation2 + $0x2c] sm:$0xf]
    %v355 = vld [vmem:[#allocation2 + $0x30] sm:$0xf]
    %v356 = vld [vmem:[#allocation2 + $0x34] sm:$0xf]
    %v357 = vld [vmem:[#allocation2 + $0x38] sm:$0xf]
    %v358 = vld [vmem:[#allocation2 + $0x3c] sm:$0xf]
    %v359 = vld [vmem:[%s7] sm:$0x1]
    %v361 = vperm.slane %v359, 0
    %v379 = vunpack.c.l.b16 %v343
    %v380 = vunpack.c.l.b16 %v344
    %v381 = vunpack.c.l.b16 %v345
    %v382 = vunpack.c.l.b16 %v346
    %v383 = vunpack.c.l.b16 %v347
    %v384 = vunpack.c.l.b16 %v348
    %v385 = vunpack.c.l.b16 %v349
    %v386 = vunpack.c.l.b16 %v350
    %v387 = vunpack.c.l.b16 %v351
    %v388 = vunpack.c.l.b16 %v352
    %v389 = vunpack.c.l.b16 %v353
    %v390 = vunpack.c.l.b16 %v354
    %v391 = vunpack.c.l.b16 %v355
    %v392 = vunpack.c.l.b16 %v356
    %v393 = vunpack.c.l.b16 %v357
    %v394 = vunpack.c.l.b16 %v358
    %v395 = vpack.c.b16 %v380, %v379
    %v396 = vpack.c.b16 %v382, %v381
    %v397 = vpack.c.b16 %v384, %v383
    %v398 = vpack.c.b16 %v386, %v385
    %v399 = vpack.c.b16 %v388, %v387
    %v400 = vpack.c.b16 %v390, %v389
    %v401 = vpack.c.b16 %v392, %v391
    %v402 = vpack.c.b16 %v394, %v393
    %411 = vmatpush.bf16.msra.mxu0 %v402
    %412 = vmatpush.bf16.msra.mxu0 %v401
    %413 = vmatpush.bf16.msra.mxu0 %v400
    %414 = vmatpush.bf16.msra.mxu0 %v399
    %415 = vmatpush.bf16.msra.mxu0 %v398
    %416 = vmatpush.bf16.msra.mxu0 %v397
    %417 = vmatpush.bf16.msra.mxu0 %v396
    %418 = vmatpush.bf16.msra.mxu0 %v395
    %419 = vmatmul.bf16.gmra.mxu0 %v250
    %v420 = vpop.f32.mrf.mxu0
    %v421 = vadd.f32 %v361, %v420
    %v422 = vpop.f32.mrf.mxu0
    %v423 = vadd.f32 %v361, %v422
    %424 = vmatmul.bf16.gmra.mxu0 %v251
    %v425 = vpop.f32.mrf.mxu0
    %v426 = vadd.f32 %v361, %v425
    %v427 = vpop.f32.mrf.mxu0
    %v428 = vadd.f32 %v361, %v427
    %429 = vdwg.mxu0
    %v430 = vld [vmem:[#allocation5] sm:$0xf]
    %v431 = vld [vmem:[#allocation5 + $0x4] sm:$0xf]
    %v432 = vld [vmem:[#allocation5 + $0x8] sm:$0xf]
    %v433 = vld [vmem:[#allocation5 + $0xc] sm:$0xf]
    %v434 = vld [vmem:[#allocation5 + $0x10] sm:$0xf]
    %v435 = vld [vmem:[#allocation5 + $0x14] sm:$0xf]
    %v436 = vld [vmem:[#allocation5 + $0x18] sm:$0xf]
    %v437 = vld [vmem:[#allocation5 + $0x1c] sm:$0xf]
    %v438 = vld [vmem:[#allocation5 + $0x20] sm:$0xf]
    %v439 = vld [vmem:[#allocation5 + $0x24] sm:$0xf]
    %v440 = vld [vmem:[#allocation5 + $0x28] sm:$0xf]
    %v441 = vld [vmem:[#allocation5 + $0x2c] sm:$0xf]
    %v442 = vld [vmem:[#allocation5 + $0x30] sm:$0xf]
    %v443 = vld [vmem:[#allocation5 + $0x34] sm:$0xf]
    %v444 = vld [vmem:[#allocation5 + $0x38] sm:$0xf]
    %v445 = vld [vmem:[#allocation5 + $0x3c] sm:$0xf]
    %v446 = vld [vmem:[%s9] sm:$0x1]
    %v448 = vperm.slane %v446, 0
    %v466 = vunpack.c.l.b16 %v430
    %v467 = vunpack.c.l.b16 %v431
    %v468 = vunpack.c.l.b16 %v432
    %v469 = vunpack.c.l.b16 %v433
    %v470 = vunpack.c.l.b16 %v434
    %v471 = vunpack.c.l.b16 %v435
    %v472 = vunpack.c.l.b16 %v436
    %v473 = vunpack.c.l.b16 %v437
    %v474 = vunpack.c.l.b16 %v438
    %v475 = vunpack.c.l.b16 %v439
    %v476 = vunpack.c.l.b16 %v440
    %v477 = vunpack.c.l.b16 %v441
    %v478 = vunpack.c.l.b16 %v442
    %v479 = vunpack.c.l.b16 %v443
    %v480 = vunpack.c.l.b16 %v444
    %v481 = vunpack.c.l.b16 %v445
    %v482 = vpack.c.b16 %v467, %v466
    %v483 = vpack.c.b16 %v469, %v468
    %v484 = vpack.c.b16 %v471, %v470
    %v485 = vpack.c.b16 %v473, %v472
    %v486 = vpack.c.b16 %v475, %v474
    %v487 = vpack.c.b16 %v477, %v476
    %v488 = vpack.c.b16 %v479, %v478
    %v489 = vpack.c.b16 %v481, %v480
    %498 = vmatpush.bf16.msra.mxu0 %v489
    %499 = vmatpush.bf16.msra.mxu0 %v488
    %500 = vmatpush.bf16.msra.mxu0 %v487
    %501 = vmatpush.bf16.msra.mxu0 %v486
    %502 = vmatpush.bf16.msra.mxu0 %v485
    %503 = vmatpush.bf16.msra.mxu0 %v484
    %504 = vmatpush.bf16.msra.mxu0 %v483
    %505 = vmatpush.bf16.msra.mxu0 %v482
    %506 = vmatmul.bf16.gmra.mxu0 %v250
    %v507 = vpop.f32.mrf.mxu0
    %v508 = vadd.f32 %v448, %v507
    %v509 = vpop.f32.mrf.mxu0
    %v510 = vadd.f32 %v448, %v509
    %511 = vmatmul.bf16.gmra.mxu0 %v251
    %v512 = vpop.f32.mrf.mxu0
    %v513 = vadd.f32 %v448, %v512
    %v514 = vpop.f32.mrf.mxu0
    %v515 = vadd.f32 %v448, %v514
    %516 = vdwg.mxu0
    %v518 = vperm.slane %v248, 0
    %vm520 = vcmask 261120
    %v522 = vsel %vm520, %v339, 0
    %v525 = vsel %vm520, %v340, 0
    %v528 = vsel %vm520, %v421, 0
    %v531 = vsel %vm520, %v423, 0
    %533 = vmatpush.xpose.msra.mxu0 0.0
    %534 = vmatpush.xpose.msra.mxu0 0.0
    %535 = vmatpush.xpose.msra.mxu0 0.0
    %536 = vmatpush.xpose.msra.mxu0 0.0
    %537 = vmatpush.xpose.msra.mxu0 0.0
    %538 = vmatpush.xpose.msra.mxu0 0.0
    %539 = vmatpush.xpose.msra.mxu0 0.0
    %540 = vmatpush.xpose.msra.mxu0 0.0
    %541 = vmatpush.xpose.msra.mxu0 0.0
    %542 = vmatpush.xpose.msra.mxu0 0.0
    %543 = vmatpush.xpose.msra.mxu0 0.0
    %544 = vmatpush.xpose.msra.mxu0 0.0
    %545 = vmatpush.xpose.msra.mxu0 0.0
    %546 = vmatpush.xpose.msra.mxu0 0.0
    %547 = vmatpush.xpose.msra.mxu0 %v531
    %548 = vmatpush.xpose.msra.mxu0 %v528
    %549 = vmatmul.f32.gmra.mxu0 %v522
    %v550 = vpop.f32.mrf.mxu0
    %v551 = vadd.f32 %v518, %v550
    %552 = vmatmul.f32.gmra.mxu0 %v525
    %v553 = vpop.f32.mrf.mxu0
    %v554 = vadd.f32 %v518, %v553
    %555 = vdwg.mxu0
    %vm556 = vcmask 130048
    %v557 = vsel %vm556, %v551, -inf
    %558 = vmax.xlane.f32.xlu0 %v557
    %v559 = vpop.xlane.xlu0 %558
    %v560 = vsel %vm556, %v554, -inf
    %561 = vmax.xlane.f32.xlu0 %v560
    %v562 = vpop.xlane.xlu0 %561
    %v563 = vsub.f32 %v551, %v559
    %v564 = vsub.f32 %v554, %v562
    %v565 = vmul.f32 %v563, 1.442695
    %v566 = vpow.pop %v565
    %v567 = vmul.f32 %v564, 1.442695
    %v568 = vpow.pop %v567
    %v569 = vsel %vm556, %v566, 0.0
    %570 = vadd.xlane.f32.xlu0 %v569
    %v571 = vpop.xlane.xlu0 %570
    %v572 = vsel %vm556, %v568, 0.0
    %573 = vadd.xlane.f32.xlu0 %v572
    %v574 = vpop.xlane.xlu0 %573
    %v575 = vrcp.pop %v571
    %v576 = vrcp.pop %v574
    %v577 = vmul.f32 %v566, %v575
    %v578 = vmul.f32 %v568, %v576
    %v580 = vsel %vm556, %v577, 0
    %v583 = vsel %vm556, %v578, 0
    %585 = vmatpush.msra.mxu0 0.0
    %586 = vmatpush.msra.mxu0 0.0
    %587 = vmatpush.msra.mxu0 0.0
    %588 = vmatpush.msra.mxu0 0.0
    %589 = vmatpush.msra.mxu0 0.0
    %590 = vmatpush.msra.mxu0 0.0
    %591 = vmatpush.msra.mxu0 0.0
    %592 = vmatpush.msra.mxu0 0.0
    %593 = vmatpush.msra.mxu0 0.0
    %594 = vmatpush.msra.mxu0 0.0
    %595 = vmatpush.msra.mxu0 0.0
    %596 = vmatpush.msra.mxu0 0.0
    %597 = vmatpush.msra.mxu0 0.0
    %598 = vmatpush.msra.mxu0 0.0
    %599 = vmatpush.msra.mxu0 %v510
    %600 = vmatpush.msra.mxu0 %v508
    %601 = vmatmul.f32.gmra.mxu0 %v580
    %v602 = vpop.f32.mrf.mxu0
    %v603 = vadd.f32 0.0, %v602
    %604 = vmatmul.f32.gmra.mxu0 %v583
    %v605 = vpop.f32.mrf.mxu0
    %v606 = vadd.f32 0.0, %v605
    %607 = vdwg.mxu0
    %608 = vrot.lane.b32.xlu0 %v339, 96
    %v609 = vpop.permute.xlu0 %608
    %610 = vrot.lane.b32.xlu0 %v340, 96
    %v611 = vpop.permute.xlu0 %610
    %612 = vrot.lane.b32.xlu0 %v421, 96
    %v613 = vpop.permute.xlu0 %612
    %614 = vrot.lane.b32.xlu0 %v423, 96
    %v615 = vpop.permute.xlu0 %614
    %v616 = vsel %vm520, %v609, 0
    %v618 = vsel %vm520, %v611, 0
    %v620 = vsel %vm520, %v613, 0
    %v622 = vsel %vm520, %v615, 0
    %624 = vmatpush.xpose.msra.mxu0 0.0
    %625 = vmatpush.xpose.msra.mxu0 0.0
    %626 = vmatpush.xpose.msra.mxu0 0.0
    %627 = vmatpush.xpose.msra.mxu0 0.0
    %628 = vmatpush.xpose.msra.mxu0 0.0
    %629 = vmatpush.xpose.msra.mxu0 0.0
    %630 = vmatpush.xpose.msra.mxu0 0.0
    %631 = vmatpush.xpose.msra.mxu0 0.0
    %632 = vmatpush.xpose.msra.mxu0 0.0
    %633 = vmatpush.xpose.msra.mxu0 0.0
    %634 = vmatpush.xpose.msra.mxu0 0.0
    %635 = vmatpush.xpose.msra.mxu0 0.0
    %636 = vmatpush.xpose.msra.mxu0 0.0
    %637 = vmatpush.xpose.msra.mxu0 0.0
    %638 = vmatpush.xpose.msra.mxu0 %v622
    %639 = vmatpush.xpose.msra.mxu0 %v620
    %640 = vmatmul.f32.gmra.mxu0 %v616
    %v641 = vpop.f32.mrf.mxu0
    %v642 = vadd.f32 %v518, %v641
    %643 = vmatmul.f32.gmra.mxu0 %v618
    %v644 = vpop.f32.mrf.mxu0
    %v645 = vadd.f32 %v518, %v644
    %646 = vdwg.mxu0
    %v647 = vsel %vm556, %v642, -inf
    %648 = vmax.xlane.f32.xlu0 %v647
    %v649 = vpop.xlane.xlu0 %648
    %v650 = vsel %vm556, %v645, -inf
    %651 = vmax.xlane.f32.xlu0 %v650
    %v652 = vpop.xlane.xlu0 %651
    %v653 = vsub.f32 %v642, %v649
    %v654 = vsub.f32 %v645, %v652
    %v655 = vmul.f32 %v653, 1.442695
    %v656 = vpow.pop %v655
    %v657 = vmul.f32 %v654, 1.442695
    %v658 = vpow.pop %v657
    %v659 = vsel %vm556, %v656, 0.0
    %660 = vadd.xlane.f32.xlu0 %v659
    %v661 = vpop.xlane.xlu0 %660
    %v662 = vsel %vm556, %v658, 0.0
    %663 = vadd.xlane.f32.xlu0 %v662
    %v664 = vpop.xlane.xlu0 %663
    %v665 = vrcp.pop %v661
    %v666 = vrcp.pop %v664
    %v667 = vmul.f32 %v656, %v665
    %v668 = vmul.f32 %v658, %v666
    %671 = vrot.lane.b32.xlu0 %v508, 96
    %v672 = vpop.permute.xlu0 %671
    %673 = vrot.lane.b32.xlu0 %v510, 96
    %v674 = vpop.permute.xlu0 %673
    %v678 = vsel %vm556, %v667, 0
    %v681 = vsel %vm556, %v668, 0
    %683 = vmatpush.msra.mxu0 0.0
    %684 = vmatpush.msra.mxu0 0.0
    %685 = vmatpush.msra.mxu0 0.0
    %686 = vmatpush.msra.mxu0 0.0
    %687 = vmatpush.msra.mxu0 0.0
    %688 = vmatpush.msra.mxu0 0.0
    %689 = vmatpush.msra.mxu0 0.0
    %690 = vmatpush.msra.mxu0 0.0
    %691 = vmatpush.msra.mxu0 0.0
    %692 = vmatpush.msra.mxu0 0.0
    %693 = vmatpush.msra.mxu0 0.0
    %694 = vmatpush.msra.mxu0 0.0
    %695 = vmatpush.msra.mxu0 0.0
    %696 = vmatpush.msra.mxu0 0.0
    %697 = vmatpush.msra.mxu0 %v674
    %698 = vmatpush.msra.mxu0 %v672
    %699 = vmatmul.f32.gmra.mxu0 %v678
    %v700 = vpop.f32.mrf.mxu0
    %v701 = vadd.f32 0.0, %v700
    %702 = vmatmul.f32.gmra.mxu0 %v681
    %v703 = vpop.f32.mrf.mxu0
    %v704 = vadd.f32 0.0, %v703
    %705 = vdwg.mxu0
    %706 = vrot.lane.b32.xlu0 %v339, 64
    %v707 = vpop.permute.xlu0 %706
    %708 = vrot.lane.b32.xlu0 %v340, 64
    %v709 = vpop.permute.xlu0 %708
    %710 = vrot.lane.b32.xlu0 %v421, 64
    %v711 = vpop.permute.xlu0 %710
    %712 = vrot.lane.b32.xlu0 %v423, 64
    %v713 = vpop.permute.xlu0 %712
    %v714 = vsel %vm520, %v707, 0
    %v716 = vsel %vm520, %v709, 0
    %v718 = vsel %vm520, %v711, 0
    %v720 = vsel %vm520, %v713, 0
    %722 = vmatpush.xpose.msra.mxu0 0.0
    %723 = vmatpush.xpose.msra.mxu0 0.0
    %724 = vmatpush.xpose.msra.mxu0 0.0
    %725 = vmatpush.xpose.msra.mxu0 0.0
    %726 = vmatpush.xpose.msra.mxu0 0.0
    %727 = vmatpush.xpose.msra.mxu0 0.0
    %728 = vmatpush.xpose.msra.mxu0 0.0
    %729 = vmatpush.xpose.msra.mxu0 0.0
    %730 = vmatpush.xpose.msra.mxu0 0.0
    %731 = vmatpush.xpose.msra.mxu0 0.0
    %732 = vmatpush.xpose.msra.mxu0 0.0
    %733 = vmatpush.xpose.msra.mxu0 0.0
    %734 = vmatpush.xpose.msra.mxu0 0.0
    %735 = vmatpush.xpose.msra.mxu0 0.0
    %736 = vmatpush.xpose.msra.mxu0 %v720
    %737 = vmatpush.xpose.msra.mxu0 %v718
    %738 = vmatmul.f32.gmra.mxu0 %v714
    %v739 = vpop.f32.mrf.mxu0
    %v740 = vadd.f32 %v518, %v739
    %741 = vmatmul.f32.gmra.mxu0 %v716
    %v742 = vpop.f32.mrf.mxu0
    %v743 = vadd.f32 %v518, %v742
    %744 = vdwg.mxu0
    %v745 = vsel %vm556, %v740, -inf
    %746 = vmax.xlane.f32.xlu0 %v745
    %v747 = vpop.xlane.xlu0 %746
    %v748 = vsel %vm556, %v743, -inf
    %749 = vmax.xlane.f32.xlu0 %v748
    %v750 = vpop.xlane.xlu0 %749
    %v751 = vsub.f32 %v740, %v747
    %v752 = vsub.f32 %v743, %v750
    %v753 = vmul.f32 %v751, 1.442695
    %v754 = vpow.pop %v753
    %v755 = vmul.f32 %v752, 1.442695
    %v756 = vpow.pop %v755
    %v757 = vsel %vm556, %v754, 0.0
    %758 = vadd.xlane.f32.xlu0 %v757
    %v759 = vpop.xlane.xlu0 %758
    %v760 = vsel %vm556, %v756, 0.0
    %761 = vadd.xlane.f32.xlu0 %v760
    %v762 = vpop.xlane.xlu0 %761
    %v763 = vrcp.pop %v759
    %v764 = vrcp.pop %v762
    %v765 = vmul.f32 %v754, %v763
    %v766 = vmul.f32 %v756, %v764
    %767 = vrot.lane.b32.xlu0 %v508, 64
    %v768 = vpop.permute.xlu0 %767
    %769 = vrot.lane.b32.xlu0 %v510, 64
    %v770 = vpop.permute.xlu0 %769
    %v774 = vsel %vm556, %v765, 0
    %v777 = vsel %vm556, %v766, 0
    %779 = vmatpush.msra.mxu0 0.0
    %780 = vmatpush.msra.mxu0 0.0
    %781 = vmatpush.msra.mxu0 0.0
    %782 = vmatpush.msra.mxu0 0.0
    %783 = vmatpush.msra.mxu0 0.0
    %784 = vmatpush.msra.mxu0 0.0
    %785 = vmatpush.msra.mxu0 0.0
    %786 = vmatpush.msra.mxu0 0.0
    %787 = vmatpush.msra.mxu0 0.0
    %788 = vmatpush.msra.mxu0 0.0
    %789 = vmatpush.msra.mxu0 0.0
    %790 = vmatpush.msra.mxu0 0.0
    %791 = vmatpush.msra.mxu0 0.0
    %792 = vmatpush.msra.mxu0 0.0
    %793 = vmatpush.msra.mxu0 %v770
    %794 = vmatpush.msra.mxu0 %v768
    %795 = vmatmul.f32.gmra.mxu0 %v774
    %v796 = vpop.f32.mrf.mxu0
    %v797 = vadd.f32 0.0, %v796
    %798 = vmatmul.f32.gmra.mxu0 %v777
    %v799 = vpop.f32.mrf.mxu0
    %v800 = vadd.f32 0.0, %v799
    %801 = vdwg.mxu0
    %802 = vrot.lane.b32.xlu0 %v339, 32
    %v803 = vpop.permute.xlu0 %802
    %804 = vrot.lane.b32.xlu0 %v340, 32
    %v805 = vpop.permute.xlu0 %804
    %806 = vrot.lane.b32.xlu0 %v421, 32
    %v807 = vpop.permute.xlu0 %806
    %808 = vrot.lane.b32.xlu0 %v423, 32
    %v809 = vpop.permute.xlu0 %808
    %v810 = vsel %vm520, %v803, 0
    %v812 = vsel %vm520, %v805, 0
    %v814 = vsel %vm520, %v807, 0
    %v816 = vsel %vm520, %v809, 0
    %818 = vmatpush.xpose.msra.mxu0 0.0
    %819 = vmatpush.xpose.msra.mxu0 0.0
    %820 = vmatpush.xpose.msra.mxu0 0.0
    %821 = vmatpush.xpose.msra.mxu0 0.0
    %822 = vmatpush.xpose.msra.mxu0 0.0
    %823 = vmatpush.xpose.msra.mxu0 0.0
    %824 = vmatpush.xpose.msra.mxu0 0.0
    %825 = vmatpush.xpose.msra.mxu0 0.0
    %826 = vmatpush.xpose.msra.mxu0 0.0
    %827 = vmatpush.xpose.msra.mxu0 0.0
    %828 = vmatpush.xpose.msra.mxu0 0.0
    %829 = vmatpush.xpose.msra.mxu0 0.0
    %830 = vmatpush.xpose.msra.mxu0 0.0
    %831 = vmatpush.xpose.msra.mxu0 0.0
    %832 = vmatpush.xpose.msra.mxu0 %v816
    %833 = vmatpush.xpose.msra.mxu0 %v814
    %834 = vmatmul.f32.gmra.mxu0 %v810
    %v835 = vpop.f32.mrf.mxu0
    %v836 = vadd.f32 %v518, %v835
    %837 = vmatmul.f32.gmra.mxu0 %v812
    %v838 = vpop.f32.mrf.mxu0
    %v839 = vadd.f32 %v518, %v838
    %840 = vdwg.mxu0
    %v841 = vsel %vm556, %v836, -inf
    %842 = vmax.xlane.f32.xlu0 %v841
    %v843 = vpop.xlane.xlu0 %842
    %v844 = vsel %vm556, %v839, -inf
    %845 = vmax.xlane.f32.xlu0 %v844
    %v846 = vpop.xlane.xlu0 %845
    %v847 = vsub.f32 %v836, %v843
    %v848 = vsub.f32 %v839, %v846
    %v849 = vmul.f32 %v847, 1.442695
    %v850 = vpow.pop %v849
    %v851 = vmul.f32 %v848, 1.442695
    %v852 = vpow.pop %v851
    %v853 = vsel %vm556, %v850, 0.0
    %854 = vadd.xlane.f32.xlu0 %v853
    %v855 = vpop.xlane.xlu0 %854
    %v856 = vsel %vm556, %v852, 0.0
    %857 = vadd.xlane.f32.xlu0 %v856
    %v858 = vpop.xlane.xlu0 %857
    %v859 = vrcp.pop %v855
    %v860 = vrcp.pop %v858
    %v861 = vmul.f32 %v850, %v859
    %v862 = vmul.f32 %v852, %v860
    %863 = vrot.lane.b32.xlu0 %v508, 32
    %v864 = vpop.permute.xlu0 %863
    %865 = vrot.lane.b32.xlu0 %v510, 32
    %v866 = vpop.permute.xlu0 %865
    %v870 = vsel %vm556, %v861, 0
    %v873 = vsel %vm556, %v862, 0
    %875 = vmatpush.msra.mxu0 0.0
    %876 = vmatpush.msra.mxu0 0.0
    %877 = vmatpush.msra.mxu0 0.0
    %878 = vmatpush.msra.mxu0 0.0
    %879 = vmatpush.msra.mxu0 0.0
    %880 = vmatpush.msra.mxu0 0.0
    %881 = vmatpush.msra.mxu0 0.0
    %882 = vmatpush.msra.mxu0 0.0
    %883 = vmatpush.msra.mxu0 0.0
    %884 = vmatpush.msra.mxu0 0.0
    %885 = vmatpush.msra.mxu0 0.0
    %886 = vmatpush.msra.mxu0 0.0
    %887 = vmatpush.msra.mxu0 0.0
    %888 = vmatpush.msra.mxu0 0.0
    %889 = vmatpush.msra.mxu0 %v866
    %890 = vmatpush.msra.mxu0 %v864
    %891 = vmatmul.f32.gmra.mxu0 %v870
    %v892 = vpop.f32.mrf.mxu0
    %v893 = vadd.f32 0.0, %v892
    %894 = vmatmul.f32.gmra.mxu0 %v873
    %v895 = vpop.f32.mrf.mxu0
    %v896 = vadd.f32 0.0, %v895
    %897 = vdwg.mxu0
    %900 = vrot.lane.b32.xlu0 %v701, 32
    %v901 = vpop.permute.xlu0 %900
    %902 = vrot.lane.b32.xlu0 %v704, 32
    %v903 = vpop.permute.xlu0 %902
    %908 = vrot.lane.b32.xlu0 %v797, 64
    %v909 = vpop.permute.xlu0 %908
    %910 = vrot.lane.b32.xlu0 %v800, 64
    %v911 = vpop.permute.xlu0 %910
    %916 = vrot.lane.b32.xlu0 %v893, 96
    %v917 = vpop.permute.xlu0 %916
    %918 = vrot.lane.b32.xlu0 %v896, 96
    %v919 = vpop.permute.xlu0 %918
    %v922 = vsel %vm520, %v603, %v901
    %v923 = vsel %vm520, %v606, %v903
    %vm924 = vcmask 523264
    %v925 = vsel %vm924, %v922, %v909
    %v926 = vsel %vm924, %v923, %v911
    %vm927 = vcmask 785408
    %v928 = vsel %vm927, %v925, %v917
    %v929 = vsel %vm927, %v926, %v919
    %v931 = vperm.slane %v249, 0
    %v934 = vsel %vm520, %v341, 0
    %v937 = vsel %vm520, %v342, 0
    %v940 = vsel %vm520, %v426, 0
    %v943 = vsel %vm520, %v428, 0
    %945 = vmatpush.xpose.msra.mxu0 0.0
    %946 = vmatpush.xpose.msra.mxu0 0.0
    %947 = vmatpush.xpose.msra.mxu0 0.0
    %948 = vmatpush.xpose.msra.mxu0 0.0
    %949 = vmatpush.xpose.msra.mxu0 0.0
    %950 = vmatpush.xpose.msra.mxu0 0.0
    %951 = vmatpush.xpose.msra.mxu0 0.0
    %952 = vmatpush.xpose.msra.mxu0 0.0
    %953 = vmatpush.xpose.msra.mxu0 0.0
    %954 = vmatpush.xpose.msra.mxu0 0.0
    %955 = vmatpush.xpose.msra.mxu0 0.0
    %956 = vmatpush.xpose.msra.mxu0 0.0
    %957 = vmatpush.xpose.msra.mxu0 0.0
    %958 = vmatpush.xpose.msra.mxu0 0.0
    %959 = vmatpush.xpose.msra.mxu0 %v943
    %960 = vmatpush.xpose.msra.mxu0 %v940
    %961 = vmatmul.f32.gmra.mxu0 %v934
    %v962 = vpop.f32.mrf.mxu0
    %v963 = vadd.f32 %v931, %v962
    %964 = vmatmul.f32.gmra.mxu0 %v937
    %v965 = vpop.f32.mrf.mxu0
    %v966 = vadd.f32 %v931, %v965
    %967 = vdwg.mxu0
    %v968 = vsel %vm556, %v963, -inf
    %969 = vmax.xlane.f32.xlu0 %v968
    %v970 = vpop.xlane.xlu0 %969
    %v971 = vsel %vm556, %v966, -inf
    %972 = vmax.xlane.f32.xlu0 %v971
    %v973 = vpop.xlane.xlu0 %972
    %v974 = vsub.f32 %v963, %v970
    %v975 = vsub.f32 %v966, %v973
    %v976 = vmul.f32 %v974, 1.442695
    %v977 = vpow.pop %v976
    %v978 = vmul.f32 %v975, 1.442695
    %v979 = vpow.pop %v978
    %v980 = vsel %vm556, %v977, 0.0
    %981 = vadd.xlane.f32.xlu0 %v980
    %v982 = vpop.xlane.xlu0 %981
    %v983 = vsel %vm556, %v979, 0.0
    %984 = vadd.xlane.f32.xlu0 %v983
    %v985 = vpop.xlane.xlu0 %984
    %v986 = vrcp.pop %v982
    %v987 = vrcp.pop %v985
    %v988 = vmul.f32 %v977, %v986
    %v989 = vmul.f32 %v979, %v987
    %v991 = vsel %vm556, %v988, 0
    %v994 = vsel %vm556, %v989, 0
    %996 = vmatpush.msra.mxu0 0.0
    %997 = vmatpush.msra.mxu0 0.0
    %998 = vmatpush.msra.mxu0 0.0
    %999 = vmatpush.msra.mxu0 0.0
    %1000 = vmatpush.msra.mxu0 0.0
    %1001 = vmatpush.msra.mxu0 0.0
    %1002 = vmatpush.msra.mxu0 0.0
    %1003 = vmatpush.msra.mxu0 0.0
    %1004 = vmatpush.msra.mxu0 0.0
    %1005 = vmatpush.msra.mxu0 0.0
    %1006 = vmatpush.msra.mxu0 0.0
    %1007 = vmatpush.msra.mxu0 0.0
    %1008 = vmatpush.msra.mxu0 0.0
    %1009 = vmatpush.msra.mxu0 0.0
    %1010 = vmatpush.msra.mxu0 %v515
    %1011 = vmatpush.msra.mxu0 %v513
    %1012 = vmatmul.f32.gmra.mxu0 %v991
    %v1013 = vpop.f32.mrf.mxu0
    %v1014 = vadd.f32 0.0, %v1013
    %1015 = vmatmul.f32.gmra.mxu0 %v994
    %v1016 = vpop.f32.mrf.mxu0
    %v1017 = vadd.f32 0.0, %v1016
    %1018 = vdwg.mxu0
    %1019 = vrot.lane.b32.xlu0 %v341, 96
    %v1020 = vpop.permute.xlu0 %1019
    %1021 = vrot.lane.b32.xlu0 %v342, 96
    %v1022 = vpop.permute.xlu0 %1021
    %1023 = vrot.lane.b32.xlu0 %v426, 96
    %v1024 = vpop.permute.xlu0 %1023
    %1025 = vrot.lane.b32.xlu0 %v428, 96
    %v1026 = vpop.permute.xlu0 %1025
    %v1027 = vsel %vm520, %v1020, 0
    %v1029 = vsel %vm520, %v1022, 0
    %v1031 = vsel %vm520, %v1024, 0
    %v1033 = vsel %vm520, %v1026, 0
    %1035 = vmatpush.xpose.msra.mxu0 0.0
    %1036 = vmatpush.xpose.msra.mxu0 0.0
    %1037 = vmatpush.xpose.msra.mxu0 0.0
    %1038 = vmatpush.xpose.msra.mxu0 0.0
    %1039 = vmatpush.xpose.msra.mxu0 0.0
    %1040 = vmatpush.xpose.msra.mxu0 0.0
    %1041 = vmatpush.xpose.msra.mxu0 0.0
    %1042 = vmatpush.xpose.msra.mxu0 0.0
    %1043 = vmatpush.xpose.msra.mxu0 0.0
    %1044 = vmatpush.xpose.msra.mxu0 0.0
    %1045 = vmatpush.xpose.msra.mxu0 0.0
    %1046 = vmatpush.xpose.msra.mxu0 0.0
    %1047 = vmatpush.xpose.msra.mxu0 0.0
    %1048 = vmatpush.xpose.msra.mxu0 0.0
    %1049 = vmatpush.xpose.msra.mxu0 %v1033
    %1050 = vmatpush.xpose.msra.mxu0 %v1031
    %1051 = vmatmul.f32.gmra.mxu0 %v1027
    %v1052 = vpop.f32.mrf.mxu0
    %v1053 = vadd.f32 %v931, %v1052
    %1054 = vmatmul.f32.gmra.mxu0 %v1029
    %v1055 = vpop.f32.mrf.mxu0
    %v1056 = vadd.f32 %v931, %v1055
    %1057 = vdwg.mxu0
    %v1058 = vsel %vm556, %v1053, -inf
    %1059 = vmax.xlane.f32.xlu0 %v1058
    %v1060 = vpop.xlane.xlu0 %1059
    %v1061 = vsel %vm556, %v1056, -inf
    %1062 = vmax.xlane.f32.xlu0 %v1061
    %v1063 = vpop.xlane.xlu0 %1062
    %v1064 = vsub.f32 %v1053, %v1060
    %v1065 = vsub.f32 %v1056, %v1063
    %v1066 = vmul.f32 %v1064, 1.442695
    %v1067 = vpow.pop %v1066
    %v1068 = vmul.f32 %v1065, 1.442695
    %v1069 = vpow.pop %v1068
    %v1070 = vsel %vm556, %v1067, 0.0
    %1071 = vadd.xlane.f32.xlu0 %v1070
    %v1072 = vpop.xlane.xlu0 %1071
    %v1073 = vsel %vm556, %v1069, 0.0
    %1074 = vadd.xlane.f32.xlu0 %v1073
    %v1075 = vpop.xlane.xlu0 %1074
    %v1076 = vrcp.pop %v1072
    %v1077 = vrcp.pop %v1075
    %v1078 = vmul.f32 %v1067, %v1076
    %v1079 = vmul.f32 %v1069, %v1077
    %1082 = vrot.lane.b32.xlu0 %v513, 96
    %v1083 = vpop.permute.xlu0 %1082
    %1084 = vrot.lane.b32.xlu0 %v515, 96
    %v1085 = vpop.permute.xlu0 %1084
    %v1089 = vsel %vm556, %v1078, 0
    %v1092 = vsel %vm556, %v1079, 0
    %1094 = vmatpush.msra.mxu0 0.0
    %1095 = vmatpush.msra.mxu0 0.0
    %1096 = vmatpush.msra.mxu0 0.0
    %1097 = vmatpush.msra.mxu0 0.0
    %1098 = vmatpush.msra.mxu0 0.0
    %1099 = vmatpush.msra.mxu0 0.0
    %1100 = vmatpush.msra.mxu0 0.0
    %1101 = vmatpush.msra.mxu0 0.0
    %1102 = vmatpush.msra.mxu0 0.0
    %1103 = vmatpush.msra.mxu0 0.0
    %1104 = vmatpush.msra.mxu0 0.0
    %1105 = vmatpush.msra.mxu0 0.0
    %1106 = vmatpush.msra.mxu0 0.0
    %1107 = vmatpush.msra.mxu0 0.0
    %1108 = vmatpush.msra.mxu0 %v1085
    %1109 = vmatpush.msra.mxu0 %v1083
    %1110 = vmatmul.f32.gmra.mxu0 %v1089
    %v1111 = vpop.f32.mrf.mxu0
    %v1112 = vadd.f32 0.0, %v1111
    %1113 = vmatmul.f32.gmra.mxu0 %v1092
    %v1114 = vpop.f32.mrf.mxu0
    %v1115 = vadd.f32 0.0, %v1114
    %1116 = vdwg.mxu0
    %1117 = vrot.lane.b32.xlu0 %v341, 64
    %v1118 = vpop.permute.xlu0 %1117
    %1119 = vrot.lane.b32.xlu0 %v342, 64
    %v1120 = vpop.permute.xlu0 %1119
    %1121 = vrot.lane.b32.xlu0 %v426, 64
    %v1122 = vpop.permute.xlu0 %1121
    %1123 = vrot.lane.b32.xlu0 %v428, 64
    %v1124 = vpop.permute.xlu0 %1123
    %v1125 = vsel %vm520, %v1118, 0
    %v1127 = vsel %vm520, %v1120, 0
    %v1129 = vsel %vm520, %v1122, 0
    %v1131 = vsel %vm520, %v1124, 0
    %1133 = vmatpush.xpose.msra.mxu0 0.0
    %1134 = vmatpush.xpose.msra.mxu0 0.0
    %1135 = vmatpush.xpose.msra.mxu0 0.0
    %1136 = vmatpush.xpose.msra.mxu0 0.0
    %1137 = vmatpush.xpose.msra.mxu0 0.0
    %1138 = vmatpush.xpose.msra.mxu0 0.0
    %1139 = vmatpush.xpose.msra.mxu0 0.0
    %1140 = vmatpush.xpose.msra.mxu0 0.0
    %1141 = vmatpush.xpose.msra.mxu0 0.0
    %1142 = vmatpush.xpose.msra.mxu0 0.0
    %1143 = vmatpush.xpose.msra.mxu0 0.0
    %1144 = vmatpush.xpose.msra.mxu0 0.0
    %1145 = vmatpush.xpose.msra.mxu0 0.0
    %1146 = vmatpush.xpose.msra.mxu0 0.0
    %1147 = vmatpush.xpose.msra.mxu0 %v1131
    %1148 = vmatpush.xpose.msra.mxu0 %v1129
    %1149 = vmatmul.f32.gmra.mxu0 %v1125
    %v1150 = vpop.f32.mrf.mxu0
    %v1151 = vadd.f32 %v931, %v1150
    %1152 = vmatmul.f32.gmra.mxu0 %v1127
    %v1153 = vpop.f32.mrf.mxu0
    %v1154 = vadd.f32 %v931, %v1153
    %1155 = vdwg.mxu0
    %v1156 = vsel %vm556, %v1151, -inf
    %1157 = vmax.xlane.f32.xlu0 %v1156
    %v1158 = vpop.xlane.xlu0 %1157
    %v1159 = vsel %vm556, %v1154, -inf
    %1160 = vmax.xlane.f32.xlu0 %v1159
    %v1161 = vpop.xlane.xlu0 %1160
    %v1162 = vsub.f32 %v1151, %v1158
    %v1163 = vsub.f32 %v1154, %v1161
    %v1164 = vmul.f32 %v1162, 1.442695
    %v1165 = vpow.pop %v1164
    %v1166 = vmul.f32 %v1163, 1.442695
    %v1167 = vpow.pop %v1166
    %v1168 = vsel %vm556, %v1165, 0.0
    %1169 = vadd.xlane.f32.xlu0 %v1168
    %v1170 = vpop.xlane.xlu0 %1169
    %v1171 = vsel %vm556, %v1167, 0.0
    %1172 = vadd.xlane.f32.xlu0 %v1171
    %v1173 = vpop.xlane.xlu0 %1172
    %v1174 = vrcp.pop %v1170
    %v1175 = vrcp.pop %v1173
    %v1176 = vmul.f32 %v1165, %v1174
    %v1177 = vmul.f32 %v1167, %v1175
    %1178 = vrot.lane.b32.xlu0 %v513, 64
    %v1179 = vpop.permute.xlu0 %1178
    %1180 = vrot.lane.b32.xlu0 %v515, 64
    %v1181 = vpop.permute.xlu0 %1180
    %v1185 = vsel %vm556, %v1176, 0
    %v1188 = vsel %vm556, %v1177, 0
    %1190 = vmatpush.msra.mxu0 0.0
    %1191 = vmatpush.msra.mxu0 0.0
    %1192 = vmatpush.msra.mxu0 0.0
    %1193 = vmatpush.msra.mxu0 0.0
    %1194 = vmatpush.msra.mxu0 0.0
    %1195 = vmatpush.msra.mxu0 0.0
    %1196 = vmatpush.msra.mxu0 0.0
    %1197 = vmatpush.msra.mxu0 0.0
    %1198 = vmatpush.msra.mxu0 0.0
    %1199 = vmatpush.msra.mxu0 0.0
    %1200 = vmatpush.msra.mxu0 0.0
    %1201 = vmatpush.msra.mxu0 0.0
    %1202 = vmatpush.msra.mxu0 0.0
    %1203 = vmatpush.msra.mxu0 0.0
    %1204 = vmatpush.msra.mxu0 %v1181
    %1205 = vmatpush.msra.mxu0 %v1179
    %1206 = vmatmul.f32.gmra.mxu0 %v1185
    %v1207 = vpop.f32.mrf.mxu0
    %v1208 = vadd.f32 0.0, %v1207
    %1209 = vmatmul.f32.gmra.mxu0 %v1188
    %v1210 = vpop.f32.mrf.mxu0
    %v1211 = vadd.f32 0.0, %v1210
    %1212 = vdwg.mxu0
    %1213 = vrot.lane.b32.xlu0 %v341, 32
    %v1214 = vpop.permute.xlu0 %1213
    %1215 = vrot.lane.b32.xlu0 %v342, 32
    %v1216 = vpop.permute.xlu0 %1215
    %1217 = vrot.lane.b32.xlu0 %v426, 32
    %v1218 = vpop.permute.xlu0 %1217
    %1219 = vrot.lane.b32.xlu0 %v428, 32
    %v1220 = vpop.permute.xlu0 %1219
    %v1221 = vsel %vm520, %v1214, 0
    %v1223 = vsel %vm520, %v1216, 0
    %v1225 = vsel %vm520, %v1218, 0
    %v1227 = vsel %vm520, %v1220, 0
    %1229 = vmatpush.xpose.msra.mxu0 0.0
    %1230 = vmatpush.xpose.msra.mxu0 0.0
    %1231 = vmatpush.xpose.msra.mxu0 0.0
    %1232 = vmatpush.xpose.msra.mxu0 0.0
    %1233 = vmatpush.xpose.msra.mxu0 0.0
    %1234 = vmatpush.xpose.msra.mxu0 0.0
    %1235 = vmatpush.xpose.msra.mxu0 0.0
    %1236 = vmatpush.xpose.msra.mxu0 0.0
    %1237 = vmatpush.xpose.msra.mxu0 0.0
    %1238 = vmatpush.xpose.msra.mxu0 0.0
    %1239 = vmatpush.xpose.msra.mxu0 0.0
    %1240 = vmatpush.xpose.msra.mxu0 0.0
    %1241 = vmatpush.xpose.msra.mxu0 0.0
    %1242 = vmatpush.xpose.msra.mxu0 0.0
    %1243 = vmatpush.xpose.msra.mxu0 %v1227
    %1244 = vmatpush.xpose.msra.mxu0 %v1225
    %1245 = vmatmul.f32.gmra.mxu0 %v1221
    %v1246 = vpop.f32.mrf.mxu0
    %v1247 = vadd.f32 %v931, %v1246
    %1248 = vmatmul.f32.gmra.mxu0 %v1223
    %v1249 = vpop.f32.mrf.mxu0
    %v1250 = vadd.f32 %v931, %v1249
    %1251 = vdwg.mxu0
    %v1252 = vsel %vm556, %v1247, -inf
    %1253 = vmax.xlane.f32.xlu0 %v1252
    %v1254 = vpop.xlane.xlu0 %1253
    %v1255 = vsel %vm556, %v1250, -inf
    %1256 = vmax.xlane.f32.xlu0 %v1255
    %v1257 = vpop.xlane.xlu0 %1256
    %v1258 = vsub.f32 %v1247, %v1254
    %v1259 = vsub.f32 %v1250, %v1257
    %v1260 = vmul.f32 %v1258, 1.442695
    %v1261 = vpow.pop %v1260
    %v1262 = vmul.f32 %v1259, 1.442695
    %v1263 = vpow.pop %v1262
    %v1264 = vsel %vm556, %v1261, 0.0
    %1265 = vadd.xlane.f32.xlu0 %v1264
    %v1266 = vpop.xlane.xlu0 %1265
    %v1267 = vsel %vm556, %v1263, 0.0
    %1268 = vadd.xlane.f32.xlu0 %v1267
    %v1269 = vpop.xlane.xlu0 %1268
    %v1270 = vrcp.pop %v1266
    %v1271 = vrcp.pop %v1269
    %v1272 = vmul.f32 %v1261, %v1270
    %v1273 = vmul.f32 %v1263, %v1271
    %1274 = vrot.lane.b32.xlu0 %v513, 32
    %v1275 = vpop.permute.xlu0 %1274
    %1276 = vrot.lane.b32.xlu0 %v515, 32
    %v1277 = vpop.permute.xlu0 %1276
    %v1281 = vsel %vm556, %v1272, 0
    %v1284 = vsel %vm556, %v1273, 0
    %1286 = vmatpush.msra.mxu0 0.0
    %1287 = vmatpush.msra.mxu0 0.0
    %1288 = vmatpush.msra.mxu0 0.0
    %1289 = vmatpush.msra.mxu0 0.0
    %1290 = vmatpush.msra.mxu0 0.0
    %1291 = vmatpush.msra.mxu0 0.0
    %1292 = vmatpush.msra.mxu0 0.0
    %1293 = vmatpush.msra.mxu0 0.0
    %1294 = vmatpush.msra.mxu0 0.0
    %1295 = vmatpush.msra.mxu0 0.0
    %1296 = vmatpush.msra.mxu0 0.0
    %1297 = vmatpush.msra.mxu0 0.0
    %1298 = vmatpush.msra.mxu0 0.0
    %1299 = vmatpush.msra.mxu0 0.0
    %1300 = vmatpush.msra.mxu0 %v1277
    %1301 = vmatpush.msra.mxu0 %v1275
    %1302 = vmatmul.f32.gmra.mxu0 %v1281
    %v1303 = vpop.f32.mrf.mxu0
    %v1304 = vadd.f32 0.0, %v1303
    %1305 = vmatmul.f32.gmra.mxu0 %v1284
    %v1306 = vpop.f32.mrf.mxu0
    %v1307 = vadd.f32 0.0, %v1306
    %1308 = vdwg.mxu0
    %1311 = vrot.lane.b32.xlu0 %v1112, 32
    %v1312 = vpop.permute.xlu0 %1311
    %1313 = vrot.lane.b32.xlu0 %v1115, 32
    %v1314 = vpop.permute.xlu0 %1313
    %1319 = vrot.lane.b32.xlu0 %v1208, 64
    %v1320 = vpop.permute.xlu0 %1319
    %1321 = vrot.lane.b32.xlu0 %v1211, 64
    %v1322 = vpop.permute.xlu0 %1321
    %1327 = vrot.lane.b32.xlu0 %v1304, 96
    %v1328 = vpop.permute.xlu0 %1327
    %1329 = vrot.lane.b32.xlu0 %v1307, 96
    %v1330 = vpop.permute.xlu0 %1329
    %v1333 = vsel %vm520, %v1014, %v1312
    %v1334 = vsel %vm520, %v1017, %v1314
    %v1335 = vsel %vm924, %v1333, %v1320
    %v1336 = vsel %vm924, %v1334, %v1322
    %v1337 = vsel %vm927, %v1335, %v1328
    %v1338 = vsel %vm927, %v1336, %v1330
    %v1339 = vpack.c.bf16 %v929, %v928
    %v1340 = vpack.c.bf16 %v1338, %v1337
    %v1341 = vld [vmem:[#allocation7] sm:$0xf]
    %v1342 = vld [vmem:[#allocation7 + $0x4] sm:$0xf]
    %v1343 = vld [vmem:[#allocation7 + $0x8] sm:$0xf]
    %v1344 = vld [vmem:[#allocation7 + $0xc] sm:$0xf]
    %v1345 = vld [vmem:[#allocation7 + $0x10] sm:$0xf]
    %v1346 = vld [vmem:[#allocation7 + $0x14] sm:$0xf]
    %v1347 = vld [vmem:[#allocation7 + $0x18] sm:$0xf]
    %v1348 = vld [vmem:[#allocation7 + $0x1c] sm:$0xf]
    %v1349 = vld [vmem:[#allocation7 + $0x20] sm:$0xf]
    %v1350 = vld [vmem:[#allocation7 + $0x24] sm:$0xf]
    %v1351 = vld [vmem:[#allocation7 + $0x28] sm:$0xf]
    %v1352 = vld [vmem:[#allocation7 + $0x2c] sm:$0xf]
    %v1353 = vld [vmem:[#allocation7 + $0x30] sm:$0xf]
    %v1354 = vld [vmem:[#allocation7 + $0x34] sm:$0xf]
    %v1355 = vld [vmem:[#allocation7 + $0x38] sm:$0xf]
    %v1356 = vld [vmem:[#allocation7 + $0x3c] sm:$0xf]
    %v1357 = vld [vmem:[%s11] sm:$0x1]
    %v1359 = vperm.slane %v1357, 0
    %v1377 = vunpack.c.l.b16 %v1341
    %v1378 = vunpack.c.l.b16 %v1342
    %v1379 = vunpack.c.l.b16 %v1343
    %v1380 = vunpack.c.l.b16 %v1344
    %v1381 = vunpack.c.l.b16 %v1345
    %v1382 = vunpack.c.l.b16 %v1346
    %v1383 = vunpack.c.l.b16 %v1347
    %v1384 = vunpack.c.l.b16 %v1348
    %v1385 = vunpack.c.l.b16 %v1349
    %v1386 = vunpack.c.l.b16 %v1350
    %v1387 = vunpack.c.l.b16 %v1351
    %v1388 = vunpack.c.l.b16 %v1352
    %v1389 = vunpack.c.l.b16 %v1353
    %v1390 = vunpack.c.l.b16 %v1354
    %v1391 = vunpack.c.l.b16 %v1355
    %v1392 = vunpack.c.l.b16 %v1356
    %v1393 = vpack.c.b16 %v1378, %v1377
    %v1394 = vpack.c.b16 %v1380, %v1379
    %v1395 = vpack.c.b16 %v1382, %v1381
    %v1396 = vpack.c.b16 %v1384, %v1383
    %v1397 = vpack.c.b16 %v1386, %v1385
    %v1398 = vpack.c.b16 %v1388, %v1387
    %v1399 = vpack.c.b16 %v1390, %v1389
    %v1400 = vpack.c.b16 %v1392, %v1391
    %1409 = vmatpush.bf16.msra.mxu0 %v1400
    %1410 = vmatpush.bf16.msra.mxu0 %v1399
    %1411 = vmatpush.bf16.msra.mxu0 %v1398
    %1412 = vmatpush.bf16.msra.mxu0 %v1397
    %1413 = vmatpush.bf16.msra.mxu0 %v1396
    %1414 = vmatpush.bf16.msra.mxu0 %v1395
    %1415 = vmatpush.bf16.msra.mxu0 %v1394
    %1416 = vmatpush.bf16.msra.mxu0 %v1393
    %1417 = vmatmul.bf16.gmra.mxu0 %v1339
    %v1418 = vpop.f32.mrf.mxu0
    %v1419 = vadd.f32 %v1359, %v1418
    %v1420 = vpop.f32.mrf.mxu0
    %v1421 = vadd.f32 %v1359, %v1420
    %1422 = vmatmul.bf16.gmra.mxu0 %v1340
    %v1423 = vpop.f32.mrf.mxu0
    %v1424 = vadd.f32 %v1359, %v1423
    %v1425 = vpop.f32.mrf.mxu0
    %v1426 = vadd.f32 %v1359, %v1425
    %1427 = vdwg.mxu0
    %v1428 = vadd.f32 %v244, %v1419
    %v1429 = vadd.f32 %v245, %v1421
    %v1430 = vadd.f32 %v246, %v1424
    %v1431 = vadd.f32 %v247, %v1426
    %v1432 = vld [vmem:[%s12] sm:$0x1]
    %v1433 = vld [vmem:[%s13] sm:$0x1]
    %1434 = vadd.xlane.f32.xlu0 %v1428
    %v1435 = vpop.xlane.xlu0 %1434
    %1436 = vadd.xlane.f32.xlu0 %v1429
    %v1437 = vpop.xlane.xlu0 %1436
    %1438 = vadd.xlane.f32.xlu0 %v1430
    %v1439 = vpop.xlane.xlu0 %1438
    %1440 = vadd.xlane.f32.xlu0 %v1431
    %v1441 = vpop.xlane.xlu0 %1440
    %v1442 = vmul.f32 %v1435, %v161
    %v1443 = vmul.f32 %v1437, %v161
    %v1444 = vmul.f32 %v1439, %v161
    %v1445 = vmul.f32 %v1441, %v161
    %v1446 = vsub.f32 %v1428, %v1442
    %v1447 = vsub.f32 %v1429, %v1443
    %v1448 = vsub.f32 %v1430, %v1444
    %v1449 = vsub.f32 %v1431, %v1445
    %v1450 = vmul.f32 %v1446, %v1446
    %v1451 = vmul.f32 %v1447, %v1447
    %v1452 = vmul.f32 %v1448, %v1448
    %v1453 = vmul.f32 %v1449, %v1449
    %1454 = vadd.xlane.f32.xlu0 %v1450
    %v1455 = vpop.xlane.xlu0 %1454
    %1456 = vadd.xlane.f32.xlu0 %v1451
    %v1457 = vpop.xlane.xlu0 %1456
    %1458 = vadd.xlane.f32.xlu0 %v1452
    %v1459 = vpop.xlane.xlu0 %1458
    %1460 = vadd.xlane.f32.xlu0 %v1453
    %v1461 = vpop.xlane.xlu0 %1460
    %v1462 = vmul.f32 %v1455, %v161
    %v1463 = vmul.f32 %v1457, %v161
    %v1464 = vmul.f32 %v1459, %v161
    %v1465 = vmul.f32 %v1461, %v161
    %v1466 = vadd.f32 %v1462, 1e-12
    %v1467 = vadd.f32 %v1463, 1e-12
    %v1468 = vadd.f32 %v1464, 1e-12
    %v1469 = vadd.f32 %v1465, 1e-12
    %v1470 = vrsqrt.pop %v1466
    %v1471 = vmul.f32 %v1470, %v1466
    %v1472 = vmul.f32 %v1471, %v1470
    %v1473 = vmul.f32 0.5, %v1472
    %v1474 = vsub.f32 1.5, %v1473
    %v1475 = vmul.f32 %v1470, %v1474
    %vm1476 = vweird.f32 %v1466
    %vm1477 = vweird.f32 %v1470
    %vm1478 = vmor %vm1476, %vm1477
    %v1479 = vsel %vm1478, %v1470, %v1475
    %v1480 = vrsqrt.pop %v1467
    %v1481 = vmul.f32 %v1480, %v1467
    %v1482 = vmul.f32 %v1481, %v1480
    %v1483 = vmul.f32 0.5, %v1482
    %v1484 = vsub.f32 1.5, %v1483
    %v1485 = vmul.f32 %v1480, %v1484
    %vm1486 = vweird.f32 %v1467
    %vm1487 = vweird.f32 %v1480
    %vm1488 = vmor %vm1486, %vm1487
    %v1489 = vsel %vm1488, %v1480, %v1485
    %v1490 = vrsqrt.pop %v1468
    %v1491 = vmul.f32 %v1490, %v1468
    %v1492 = vmul.f32 %v1491, %v1490
    %v1493 = vmul.f32 0.5, %v1492
    %v1494 = vsub.f32 1.5, %v1493
    %v1495 = vmul.f32 %v1490, %v1494
    %vm1496 = vweird.f32 %v1468
    %vm1497 = vweird.f32 %v1490
    %vm1498 = vmor %vm1496, %vm1497
    %v1499 = vsel %vm1498, %v1490, %v1495
    %v1500 = vrsqrt.pop %v1469
    %v1501 = vmul.f32 %v1500, %v1469
    %v1502 = vmul.f32 %v1501, %v1500
    %v1503 = vmul.f32 0.5, %v1502
    %v1504 = vsub.f32 1.5, %v1503
    %v1505 = vmul.f32 %v1500, %v1504
    %vm1506 = vweird.f32 %v1469
    %vm1507 = vweird.f32 %v1500
    %vm1508 = vmor %vm1506, %vm1507
    %v1509 = vsel %vm1508, %v1500, %v1505
    %v1510 = vmul.f32 %v1446, %v1479
    %v1511 = vmul.f32 %v1447, %v1489
    %v1512 = vmul.f32 %v1448, %v1499
    %v1513 = vmul.f32 %v1449, %v1509
    %v1515 = vperm.slane %v1432, 0
    %v1517 = vmul.f32 %v1510, %v1515
    %v1518 = vmul.f32 %v1511, %v1515
    %v1519 = vmul.f32 %v1512, %v1515
    %v1520 = vmul.f32 %v1513, %v1515
    %v1522 = vperm.slane %v1433, 0
    %v1524 = vadd.f32 %v1517, %v1522
    %v1525 = vadd.f32 %v1518, %v1522
    %v1526 = vadd.f32 %v1519, %v1522
    %v1527 = vadd.f32 %v1520, %v1522
    %v1528 = vpack.c.bf16 %v1525, %v1524
    %v1529 = vpack.c.bf16 %v1527, %v1526
    %v1530 = vld [vmem:[%s14] sm:$0xff]
    %v1531 = vld [vmem:[%s14 + $0x8] sm:$0xff]
    %v1532 = vld [vmem:[%s14 + $0x10] sm:$0xff]
    %v1533 = vld [vmem:[%s14 + $0x18] sm:$0xff]
    %v1534 = vld [vmem:[%s14 + $0x20] sm:$0xff]
    %v1535 = vld [vmem:[%s14 + $0x28] sm:$0xff]
    %v1536 = vld [vmem:[%s14 + $0x30] sm:$0xff]
    %v1537 = vld [vmem:[%s14 + $0x38] sm:$0xff]
    %v1538 = vld [vmem:[%s14 + $0x40] sm:$0xff]
    %v1539 = vld [vmem:[%s14 + $0x48] sm:$0xff]
    %v1540 = vld [vmem:[%s14 + $0x50] sm:$0xff]
    %v1541 = vld [vmem:[%s14 + $0x58] sm:$0xff]
    %v1542 = vld [vmem:[%s14 + $0x60] sm:$0xff]
    %v1543 = vld [vmem:[%s14 + $0x68] sm:$0xff]
    %v1544 = vld [vmem:[%s14 + $0x70] sm:$0xff]
    %v1545 = vld [vmem:[%s14 + $0x78] sm:$0xff]
    %v1546 = vld [vmem:[%s15] sm:$0x3]
    %v1548 = vperm.slane %v1546, 0
    %v1549 = vperm.slane %v1546, 1
    %v1568 = vunpack.c.l.b16 %v1530
    %v1569 = vunpack.c.h.b16 %v1530
    %v1570 = vunpack.c.l.b16 %v1531
    %v1571 = vunpack.c.h.b16 %v1531
    %v1572 = vunpack.c.l.b16 %v1532
    %v1573 = vunpack.c.h.b16 %v1532
    %v1574 = vunpack.c.l.b16 %v1533
    %v1575 = vunpack.c.h.b16 %v1533
    %v1576 = vunpack.c.l.b16 %v1534
    %v1577 = vunpack.c.h.b16 %v1534
    %v1578 = vunpack.c.l.b16 %v1535
    %v1579 = vunpack.c.h.b16 %v1535
    %v1580 = vunpack.c.l.b16 %v1536
    %v1581 = vunpack.c.h.b16 %v1536
    %v1582 = vunpack.c.l.b16 %v1537
    %v1583 = vunpack.c.h.b16 %v1537
    %v1584 = vunpack.c.l.b16 %v1538
    %v1585 = vunpack.c.h.b16 %v1538
    %v1586 = vunpack.c.l.b16 %v1539
    %v1587 = vunpack.c.h.b16 %v1539
    %v1588 = vunpack.c.l.b16 %v1540
    %v1589 = vunpack.c.h.b16 %v1540
    %v1590 = vunpack.c.l.b16 %v1541
    %v1591 = vunpack.c.h.b16 %v1541
    %v1592 = vunpack.c.l.b16 %v1542
    %v1593 = vunpack.c.h.b16 %v1542
    %v1594 = vunpack.c.l.b16 %v1543
    %v1595 = vunpack.c.h.b16 %v1543
    %v1596 = vunpack.c.l.b16 %v1544
    %v1597 = vunpack.c.h.b16 %v1544
    %v1598 = vunpack.c.l.b16 %v1545
    %v1599 = vunpack.c.h.b16 %v1545
    %v1600 = vpack.c.b16 %v1570, %v1568
    %v1601 = vpack.c.b16 %v1571, %v1569
    %v1602 = vpack.c.b16 %v1574, %v1572
    %v1603 = vpack.c.b16 %v1575, %v1573
    %v1604 = vpack.c.b16 %v1578, %v1576
    %v1605 = vpack.c.b16 %v1579, %v1577
    %v1606 = vpack.c.b16 %v1582, %v1580
    %v1607 = vpack.c.b16 %v1583, %v1581
    %v1608 = vpack.c.b16 %v1586, %v1584
    %v1609 = vpack.c.b16 %v1587, %v1585
    %v1610 = vpack.c.b16 %v1590, %v1588
    %v1611 = vpack.c.b16 %v1591, %v1589
    %v1612 = vpack.c.b16 %v1594, %v1592
    %v1613 = vpack.c.b16 %v1595, %v1593
    %v1614 = vpack.c.b16 %v1598, %v1596
    %v1615 = vpack.c.b16 %v1599, %v1597
    %1632 = vmatpush.bf16.msra.mxu0 %v1614
    %1633 = vmatpush.bf16.msra.mxu0 %v1612
    %1634 = vmatpush.bf16.msra.mxu0 %v1610
    %1635 = vmatpush.bf16.msra.mxu0 %v1608
    %1636 = vmatpush.bf16.msra.mxu0 %v1606
    %1637 = vmatpush.bf16.msra.mxu0 %v1604
    %1638 = vmatpush.bf16.msra.mxu0 %v1602
    %1639 = vmatpush.bf16.msra.mxu0 %v1600
    %1640 = vmatmul.bf16.gmra.mxu0 %v1528
    %v1641 = vpop.f32.mrf.mxu0
    %v1642 = vadd.f32 %v1548, %v1641
    %v1643 = vpop.f32.mrf.mxu0
    %v1644 = vadd.f32 %v1548, %v1643
    %1645 = vmatmul.bf16.gmra.mxu0 %v1529
    %v1646 = vpop.f32.mrf.mxu0
    %v1647 = vadd.f32 %v1548, %v1646
    %v1648 = vpop.f32.mrf.mxu0
    %v1649 = vadd.f32 %v1548, %v1648
    %1650 = vdwg.mxu0
    %1651 = vmatpush.bf16.msra.mxu0 %v1615
    %1652 = vmatpush.bf16.msra.mxu0 %v1613
    %1653 = vmatpush.bf16.msra.mxu0 %v1611
    %1654 = vmatpush.bf16.msra.mxu0 %v1609
    %1655 = vmatpush.bf16.msra.mxu0 %v1607
    %1656 = vmatpush.bf16.msra.mxu0 %v1605
    %1657 = vmatpush.bf16.msra.mxu0 %v1603
    %1658 = vmatpush.bf16.msra.mxu0 %v1601
    %1659 = vmatmul.bf16.gmra.mxu0 %v1528
    %v1660 = vpop.f32.mrf.mxu0
    %v1661 = vadd.f32 %v1549, %v1660
    %v1662 = vpop.f32.mrf.mxu0
    %v1663 = vadd.f32 %v1549, %v1662
    %1664 = vmatmul.bf16.gmra.mxu0 %v1529
    %v1665 = vpop.f32.mrf.mxu0
    %v1666 = vadd.f32 %v1549, %v1665
    %v1667 = vpop.f32.mrf.mxu0
    %v1668 = vadd.f32 %v1549, %v1667
    %1669 = vdwg.mxu0
    %v1670 = vmul.f32 %v1642, 0.5
    %v1671 = vmul.f32 %v1661, 0.5
    %v1672 = vmul.f32 %v1644, 0.5
    %v1673 = vmul.f32 %v1663, 0.5
    %v1674 = vmul.f32 %v1647, 0.5
    %v1675 = vmul.f32 %v1666, 0.5
    %v1676 = vmul.f32 %v1649, 0.5
    %v1677 = vmul.f32 %v1668, 0.5
    %v1678 = vmul.f32 %v1642, 0.044715
    %v1679 = vmul.f32 %v1661, 0.044715
    %v1680 = vmul.f32 %v1644, 0.044715
    %v1681 = vmul.f32 %v1663, 0.044715
    %v1682 = vmul.f32 %v1647, 0.044715
    %v1683 = vmul.f32 %v1666, 0.044715
    %v1684 = vmul.f32 %v1649, 0.044715
    %v1685 = vmul.f32 %v1668, 0.044715
    %v1686 = vmul.f32 %v1678, %v1642
    %v1687 = vmul.f32 %v1679, %v1661
    %v1688 = vmul.f32 %v1680, %v1644
    %v1689 = vmul.f32 %v1681, %v1663
    %v1690 = vmul.f32 %v1682, %v1647
    %v1691 = vmul.f32 %v1683, %v1666
    %v1692 = vmul.f32 %v1684, %v1649
    %v1693 = vmul.f32 %v1685, %v1668
    %v1694 = vmul.f32 %v1686, %v1642
    %v1695 = vmul.f32 %v1687, %v1661
    %v1696 = vmul.f32 %v1688, %v1644
    %v1697 = vmul.f32 %v1689, %v1663
    %v1698 = vmul.f32 %v1690, %v1647
    %v1699 = vmul.f32 %v1691, %v1666
    %v1700 = vmul.f32 %v1692, %v1649
    %v1701 = vmul.f32 %v1693, %v1668
    %v1702 = vadd.f32 %v1642, %v1694
    %v1703 = vadd.f32 %v1661, %v1695
    %v1704 = vadd.f32 %v1644, %v1696
    %v1705 = vadd.f32 %v1663, %v1697
    %v1706 = vadd.f32 %v1647, %v1698
    %v1707 = vadd.f32 %v1666, %v1699
    %v1708 = vadd.f32 %v1649, %v1700
    %v1709 = vadd.f32 %v1668, %v1701
    %v1710 = vmul.f32 %v1702, 0.7978846
    %v1711 = vmul.f32 %v1703, 0.7978846
    %v1712 = vmul.f32 %v1704, 0.7978846
    %v1713 = vmul.f32 %v1705, 0.7978846
    %v1714 = vmul.f32 %v1706, 0.7978846
    %v1715 = vmul.f32 %v1707, 0.7978846
    %v1716 = vmul.f32 %v1708, 0.7978846
    %v1717 = vmul.f32 %v1709, 0.7978846
    %v1718 = vtanh.pop %v1710
    %v1719 = vtanh.pop %v1711
    %v1720 = vtanh.pop %v1712
    %v1721 = vtanh.pop %v1713
    %v1722 = vtanh.pop %v1714
    %v1723 = vtanh.pop %v1715
    %v1724 = vtanh.pop %v1716
    %v1725 = vtanh.pop %v1717
    %v1726 = vadd.f32 %v1718, 1.0
    %v1727 = vadd.f32 %v1719, 1.0
    %v1728 = vadd.f32 %v1720, 1.0
    %v1729 = vadd.f32 %v1721, 1.0
    %v1730 = vadd.f32 %v1722, 1.0
    %v1731 = vadd.f32 %v1723, 1.0
    %v1732 = vadd.f32 %v1724, 1.0
    %v1733 = vadd.f32 %v1725, 1.0
    %v1734 = vmul.f32 %v1670, %v1726
    %v1735 = vmul.f32 %v1671, %v1727
    %v1736 = vmul.f32 %v1672, %v1728
    %v1737 = vmul.f32 %v1673, %v1729
    %v1738 = vmul.f32 %v1674, %v1730
    %v1739 = vmul.f32 %v1675, %v1731
    %v1740 = vmul.f32 %v1676, %v1732
    %v1741 = vmul.f32 %v1677, %v1733
    %v1742 = vpack.c.bf16 %v1736, %v1734
    %v1743 = vpack.c.bf16 %v1737, %v1735
    %v1744 = vpack.c.bf16 %v1740, %v1738
    %v1745 = vpack.c.bf16 %v1741, %v1739
    %v1746 = vld [vmem:[%s16] sm:$0xf]
    %v1747 = vld [vmem:[%s16 + $0x4] sm:$0xf]
    %v1748 = vld [vmem:[%s16 + $0x8] sm:$0xf]
    %v1749 = vld [vmem:[%s16 + $0xc] sm:$0xf]
    %v1750 = vld [vmem:[%s16 + $0x10] sm:$0xf]
    %v1751 = vld [vmem:[%s16 + $0x14] sm:$0xf]
    %v1752 = vld [vmem:[%s16 + $0x18] sm:$0xf]
    %v1753 = vld [vmem:[%s16 + $0x1c] sm:$0xf]
    %v1754 = vld [vmem:[%s16 + $0x20] sm:$0xf]
    %v1755 = vld [vmem:[%s16 + $0x24] sm:$0xf]
    %v1756 = vld [vmem:[%s16 + $0x28] sm:$0xf]
    %v1757 = vld [vmem:[%s16 + $0x2c] sm:$0xf]
    %v1758 = vld [vmem:[%s16 + $0x30] sm:$0xf]
    %v1759 = vld [vmem:[%s16 + $0x34] sm:$0xf]
    %v1760 = vld [vmem:[%s16 + $0x38] sm:$0xf]
    %v1761 = vld [vmem:[%s16 + $0x3c] sm:$0xf]
    %v1762 = vld [vmem:[%s16 + $0x40] sm:$0xf]
    %v1763 = vld [vmem:[%s16 + $0x44] sm:$0xf]
    %v1764 = vld [vmem:[%s16 + $0x48] sm:$0xf]
    %v1765 = vld [vmem:[%s16 + $0x4c] sm:$0xf]
    %v1766 = vld [vmem:[%s16 + $0x50] sm:$0xf]
    %v1767 = vld [vmem:[%s16 + $0x54] sm:$0xf]
    %v1768 = vld [vmem:[%s16 + $0x58] sm:$0xf]
    %v1769 = vld [vmem:[%s16 + $0x5c] sm:$0xf]
    %v1770 = vld [vmem:[%s16 + $0x60] sm:$0xf]
    %v1771 = vld [vmem:[%s16 + $0x64] sm:$0xf]
    %v1772 = vld [vmem:[%s16 + $0x68] sm:$0xf]
    %v1773 = vld [vmem:[%s16 + $0x6c] sm:$0xf]
    %v1774 = vld [vmem:[%s16 + $0x70] sm:$0xf]
    %v1775 = vld [vmem:[%s16 + $0x74] sm:$0xf]
    %v1776 = vld [vmem:[%s16 + $0x78] sm:$0xf]
    %v1777 = vld [vmem:[%s16 + $0x7c] sm:$0xf]
    %v1778 = vld [vmem:[%s17] sm:$0x1]
    %v1780 = vperm.slane %v1778, 0
    %v1814 = vunpack.c.l.b16 %v1746
    %v1815 = vunpack.c.l.b16 %v1747
    %v1816 = vunpack.c.l.b16 %v1748
    %v1817 = vunpack.c.l.b16 %v1749
    %v1818 = vunpack.c.l.b16 %v1750
    %v1819 = vunpack.c.l.b16 %v1751
    %v1820 = vunpack.c.l.b16 %v1752
    %v1821 = vunpack.c.l.b16 %v1753
    %v1822 = vunpack.c.l.b16 %v1754
    %v1823 = vunpack.c.l.b16 %v1755
    %v1824 = vunpack.c.l.b16 %v1756
    %v1825 = vunpack.c.l.b16 %v1757
    %v1826 = vunpack.c.l.b16 %v1758
    %v1827 = vunpack.c.l.b16 %v1759
    %v1828 = vunpack.c.l.b16 %v1760
    %v1829 = vunpack.c.l.b16 %v1761
    %v1830 = vunpack.c.l.b16 %v1762
    %v1831 = vunpack.c.l.b16 %v1763
    %v1832 = vunpack.c.l.b16 %v1764
    %v1833 = vunpack.c.l.b16 %v1765
    %v1834 = vunpack.c.l.b16 %v1766
    %v1835 = vunpack.c.l.b16 %v1767
    %v1836 = vunpack.c.l.b16 %v1768
    %v1837 = vunpack.c.l.b16 %v1769
    %v1838 = vunpack.c.l.b16 %v1770
    %v1839 = vunpack.c.l.b16 %v1771
    %v1840 = vunpack.c.l.b16 %v1772
    %v1841 = vunpack.c.l.b16 %v1773
    %v1842 = vunpack.c.l.b16 %v1774
    %v1843 = vunpack.c.l.b16 %v1775
    %v1844 = vunpack.c.l.b16 %v1776
    %v1845 = vunpack.c.l.b16 %v1777
    %v1846 = vpack.c.b16 %v1815, %v1814
    %v1847 = vpack.c.b16 %v1817, %v1816
    %v1848 = vpack.c.b16 %v1819, %v1818
    %v1849 = vpack.c.b16 %v1821, %v1820
    %v1850 = vpack.c.b16 %v1823, %v1822
    %v1851 = vpack.c.b16 %v1825, %v1824
    %v1852 = vpack.c.b16 %v1827, %v1826
    %v1853 = vpack.c.b16 %v1829, %v1828
    %v1854 = vpack.c.b16 %v1831, %v1830
    %v1855 = vpack.c.b16 %v1833, %v1832
    %v1856 = vpack.c.b16 %v1835, %v1834
    %v1857 = vpack.c.b16 %v1837, %v1836
    %v1858 = vpack.c.b16 %v1839, %v1838
    %v1859 = vpack.c.b16 %v1841, %v1840
    %v1860 = vpack.c.b16 %v1843, %v1842
    %v1861 = vpack.c.b16 %v1845, %v1844
    %1878 = vmatpush.bf16.msra.mxu0 %v1853
    %1879 = vmatpush.bf16.msra.mxu0 %v1852
    %1880 = vmatpush.bf16.msra.mxu0 %v1851
    %1881 = vmatpush.bf16.msra.mxu0 %v1850
    %1882 = vmatpush.bf16.msra.mxu0 %v1849
    %1883 = vmatpush.bf16.msra.mxu0 %v1848
    %1884 = vmatpush.bf16.msra.mxu0 %v1847
    %1885 = vmatpush.bf16.msra.mxu0 %v1846
    %1886 = vmatmul.bf16.gmra.mxu0 %v1742
    %v1887 = vpop.f32.mrf.mxu0
    %v1888 = vadd.f32 %v1780, %v1887
    %v1889 = vpop.f32.mrf.mxu0
    %v1890 = vadd.f32 %v1780, %v1889
    %1891 = vmatmul.bf16.gmra.mxu0 %v1744
    %v1892 = vpop.f32.mrf.mxu0
    %v1893 = vadd.f32 %v1780, %v1892
    %v1894 = vpop.f32.mrf.mxu0
    %v1895 = vadd.f32 %v1780, %v1894
    %1896 = vdwg.mxu0
    %1897 = vmatpush.bf16.msra.mxu0 %v1861
    %1898 = vmatpush.bf16.msra.mxu0 %v1860
    %1899 = vmatpush.bf16.msra.mxu0 %v1859
    %1900 = vmatpush.bf16.msra.mxu0 %v1858
    %1901 = vmatpush.bf16.msra.mxu0 %v1857
    %1902 = vmatpush.bf16.msra.mxu0 %v1856
    %1903 = vmatpush.bf16.msra.mxu0 %v1855
    %1904 = vmatpush.bf16.msra.mxu0 %v1854
    %1905 = vmatmul.bf16.gmra.mxu0 %v1743
    %v1906 = vpop.f32.mrf.mxu0
    %v1907 = vadd.f32 %v1888, %v1906
    %v1908 = vpop.f32.mrf.mxu0
    %v1909 = vadd.f32 %v1890, %v1908
    %1910 = vmatmul.bf16.gmra.mxu0 %v1745
    %v1911 = vpop.f32.mrf.mxu0
    %v1912 = vadd.f32 %v1893, %v1911
    %v1913 = vpop.f32.mrf.mxu0
    %v1914 = vadd.f32 %v1895, %v1913
    %1915 = vdwg.mxu0
    %v1916 = vadd.f32 %v1524, %v1907
    %v1917 = vadd.f32 %v1525, %v1909
    %v1918 = vadd.f32 %v1526, %v1912
    %v1919 = vadd.f32 %v1527, %v1914
    %v1920 = vld [vmem:[%s18] sm:$0x1]
    %v1921 = vld [vmem:[%s19] sm:$0x1]
    %1922 = vadd.xlane.f32.xlu0 %v1916
    %v1923 = vpop.xlane.xlu0 %1922
    %1924 = vadd.xlane.f32.xlu0 %v1917
    %v1925 = vpop.xlane.xlu0 %1924
    %1926 = vadd.xlane.f32.xlu0 %v1918
    %v1927 = vpop.xlane.xlu0 %1926
    %1928 = vadd.xlane.f32.xlu0 %v1919
    %v1929 = vpop.xlane.xlu0 %1928
    %v1930 = vmul.f32 %v1923, %v161
    %v1931 = vmul.f32 %v1925, %v161
    %v1932 = vmul.f32 %v1927, %v161
    %v1933 = vmul.f32 %v1929, %v161
    %v1934 = vsub.f32 %v1916, %v1930
    %v1935 = vsub.f32 %v1917, %v1931
    %v1936 = vsub.f32 %v1918, %v1932
    %v1937 = vsub.f32 %v1919, %v1933
    %v1938 = vmul.f32 %v1934, %v1934
    %v1939 = vmul.f32 %v1935, %v1935
    %v1940 = vmul.f32 %v1936, %v1936
    %v1941 = vmul.f32 %v1937, %v1937
    %1942 = vadd.xlane.f32.xlu0 %v1938
    %v1943 = vpop.xlane.xlu0 %1942
    %1944 = vadd.xlane.f32.xlu0 %v1939
    %v1945 = vpop.xlane.xlu0 %1944
    %1946 = vadd.xlane.f32.xlu0 %v1940
    %v1947 = vpop.xlane.xlu0 %1946
    %1948 = vadd.xlane.f32.xlu0 %v1941
    %v1949 = vpop.xlane.xlu0 %1948
    %v1950 = vmul.f32 %v1943, %v161
    %v1951 = vmul.f32 %v1945, %v161
    %v1952 = vmul.f32 %v1947, %v161
    %v1953 = vmul.f32 %v1949, %v161
    %v1954 = vadd.f32 %v1950, 1e-12
    %v1955 = vadd.f32 %v1951, 1e-12
    %v1956 = vadd.f32 %v1952, 1e-12
    %v1957 = vadd.f32 %v1953, 1e-12
    %v1958 = vrsqrt.pop %v1954
    %v1959 = vmul.f32 %v1958, %v1954
    %v1960 = vmul.f32 %v1959, %v1958
    %v1961 = vmul.f32 0.5, %v1960
    %v1962 = vsub.f32 1.5, %v1961
    %v1963 = vmul.f32 %v1958, %v1962
    %vm1964 = vweird.f32 %v1954
    %vm1965 = vweird.f32 %v1958
    %vm1966 = vmor %vm1964, %vm1965
    %v1967 = vsel %vm1966, %v1958, %v1963
    %v1968 = vrsqrt.pop %v1955
    %v1969 = vmul.f32 %v1968, %v1955
    %v1970 = vmul.f32 %v1969, %v1968
    %v1971 = vmul.f32 0.5, %v1970
    %v1972 = vsub.f32 1.5, %v1971
    %v1973 = vmul.f32 %v1968, %v1972
    %vm1974 = vweird.f32 %v1955
    %vm1975 = vweird.f32 %v1968
    %vm1976 = vmor %vm1974, %vm1975
    %v1977 = vsel %vm1976, %v1968, %v1973
    %v1978 = vrsqrt.pop %v1956
    %v1979 = vmul.f32 %v1978, %v1956
    %v1980 = vmul.f32 %v1979, %v1978
    %v1981 = vmul.f32 0.5, %v1980
    %v1982 = vsub.f32 1.5, %v1981
    %v1983 = vmul.f32 %v1978, %v1982
    %vm1984 = vweird.f32 %v1956
    %vm1985 = vweird.f32 %v1978
    %vm1986 = vmor %vm1984, %vm1985
    %v1987 = vsel %vm1986, %v1978, %v1983
    %v1988 = vrsqrt.pop %v1957
    %v1989 = vmul.f32 %v1988, %v1957
    %v1990 = vmul.f32 %v1989, %v1988
    %v1991 = vmul.f32 0.5, %v1990
    %v1992 = vsub.f32 1.5, %v1991
    %v1993 = vmul.f32 %v1988, %v1992
    %vm1994 = vweird.f32 %v1957
    %vm1995 = vweird.f32 %v1988
    %vm1996 = vmor %vm1994, %vm1995
    %v1997 = vsel %vm1996, %v1988, %v1993
    %v1998 = vmul.f32 %v1934, %v1967
    %v1999 = vmul.f32 %v1935, %v1977
    %v2000 = vmul.f32 %v1936, %v1987
    %v2001 = vmul.f32 %v1937, %v1997
    %v2003 = vperm.slane %v1920, 0
    %v2005 = vmul.f32 %v1998, %v2003
    %v2006 = vmul.f32 %v1999, %v2003
    %v2007 = vmul.f32 %v2000, %v2003
    %v2008 = vmul.f32 %v2001, %v2003
    %v2010 = vperm.slane %v1921, 0
    %v2012 = vadd.f32 %v2005, %v2010
    %v2013 = vadd.f32 %v2006, %v2010
    %v2014 = vadd.f32 %v2007, %v2010
    %v2015 = vadd.f32 %v2008, %v2010
    %v2016 = vpack.c.bf16 %v2013, %v2012
    %v2017 = vpack.c.bf16 %v2015, %v2014
    %s2018 = scalar_lea.vmem %s4, 64
    %v2019 = vld [vmem:[%s2018] sm:$0xf]
    %v2020 = vld [vmem:[%s2018 + $0x4] sm:$0xf]
    %v2021 = vld [vmem:[%s2018 + $0x8] sm:$0xf]
    %v2022 = vld [vmem:[%s2018 + $0xc] sm:$0xf]
    %v2023 = vld [vmem:[%s2018 + $0x10] sm:$0xf]
    %v2024 = vld [vmem:[%s2018 + $0x14] sm:$0xf]
    %v2025 = vld [vmem:[%s2018 + $0x18] sm:$0xf]
    %v2026 = vld [vmem:[%s2018 + $0x1c] sm:$0xf]
    %v2027 = vld [vmem:[%s2018 + $0x20] sm:$0xf]
    %v2028 = vld [vmem:[%s2018 + $0x24] sm:$0xf]
    %v2029 = vld [vmem:[%s2018 + $0x28] sm:$0xf]
    %v2030 = vld [vmem:[%s2018 + $0x2c] sm:$0xf]
    %v2031 = vld [vmem:[%s2018 + $0x30] sm:$0xf]
    %v2032 = vld [vmem:[%s2018 + $0x34] sm:$0xf]
    %v2033 = vld [vmem:[%s2018 + $0x38] sm:$0xf]
    %v2034 = vld [vmem:[%s2018 + $0x3c] sm:$0xf]
    %s2035 = scalar_lea.vmem %s5, 1
    %v2036 = vld [vmem:[%s2035] sm:$0x1]
    %v2038 = vperm.slane %v2036, 0
    %v2056 = vunpack.c.l.b16 %v2019
    %v2057 = vunpack.c.l.b16 %v2020
    %v2058 = vunpack.c.l.b16 %v2021
    %v2059 = vunpack.c.l.b16 %v2022
    %v2060 = vunpack.c.l.b16 %v2023
    %v2061 = vunpack.c.l.b16 %v2024
    %v2062 = vunpack.c.l.b16 %v2025
    %v2063 = vunpack.c.l.b16 %v2026
    %v2064 = vunpack.c.l.b16 %v2027
    %v2065 = vunpack.c.l.b16 %v2028
    %v2066 = vunpack.c.l.b16 %v2029
    %v2067 = vunpack.c.l.b16 %v2030
    %v2068 = vunpack.c.l.b16 %v2031
    %v2069 = vunpack.c.l.b16 %v2032
    %v2070 = vunpack.c.l.b16 %v2033
    %v2071 = vunpack.c.l.b16 %v2034
    %v2072 = vpack.c.b16 %v2057, %v2056
    %v2073 = vpack.c.b16 %v2059, %v2058
    %v2074 = vpack.c.b16 %v2061, %v2060
    %v2075 = vpack.c.b16 %v2063, %v2062
    %v2076 = vpack.c.b16 %v2065, %v2064
    %v2077 = vpack.c.b16 %v2067, %v2066
    %v2078 = vpack.c.b16 %v2069, %v2068
    %v2079 = vpack.c.b16 %v2071, %v2070
    %2088 = vmatpush.bf16.msra.mxu0 %v2079
    %2089 = vmatpush.bf16.msra.mxu0 %v2078
    %2090 = vmatpush.bf16.msra.mxu0 %v2077
    %2091 = vmatpush.bf16.msra.mxu0 %v2076
    %2092 = vmatpush.bf16.msra.mxu0 %v2075
    %2093 = vmatpush.bf16.msra.mxu0 %v2074
    %2094 = vmatpush.bf16.msra.mxu0 %v2073
    %2095 = vmatpush.bf16.msra.mxu0 %v2072
    %2096 = vmatmul.bf16.gmra.mxu0 %v2016
    %v2097 = vpop.f32.mrf.mxu0
    %v2098 = vadd.f32 %v2038, %v2097
    %v2099 = vpop.f32.mrf.mxu0
    %v2100 = vadd.f32 %v2038, %v2099
    %2101 = vmatmul.bf16.gmra.mxu0 %v2017
    %v2102 = vpop.f32.mrf.mxu0
    %v2103 = vadd.f32 %v2038, %v2102
    %v2104 = vpop.f32.mrf.mxu0
    %v2105 = vadd.f32 %v2038, %v2104
    %2106 = vdwg.mxu0
    %v2107 = vmul.f32 %v2098, 0.17677669
    %v2108 = vmul.f32 %v2100, 0.17677669
    %v2109 = vmul.f32 %v2103, 0.17677669
    %v2110 = vmul.f32 %v2105, 0.17677669
    %s2111 = scalar_lea.vmem [#allocation2], 64
    %v2112 = vld [vmem:[%s2111] sm:$0xf]
    %v2113 = vld [vmem:[%s2111 + $0x4] sm:$0xf]
    %v2114 = vld [vmem:[%s2111 + $0x8] sm:$0xf]
    %v2115 = vld [vmem:[%s2111 + $0xc] sm:$0xf]
    %v2116 = vld [vmem:[%s2111 + $0x10] sm:$0xf]
    %v2117 = vld [vmem:[%s2111 + $0x14] sm:$0xf]
    %v2118 = vld [vmem:[%s2111 + $0x18] sm:$0xf]
    %v2119 = vld [vmem:[%s2111 + $0x1c] sm:$0xf]
    %v2120 = vld [vmem:[%s2111 + $0x20] sm:$0xf]
    %v2121 = vld [vmem:[%s2111 + $0x24] sm:$0xf]
    %v2122 = vld [vmem:[%s2111 + $0x28] sm:$0xf]
    %v2123 = vld [vmem:[%s2111 + $0x2c] sm:$0xf]
    %v2124 = vld [vmem:[%s2111 + $0x30] sm:$0xf]
    %v2125 = vld [vmem:[%s2111 + $0x34] sm:$0xf]
    %v2126 = vld [vmem:[%s2111 + $0x38] sm:$0xf]
    %v2127 = vld [vmem:[%s2111 + $0x3c] sm:$0xf]
    %s2128 = scalar_lea.vmem %s7, 1
    %v2129 = vld [vmem:[%s2128] sm:$0x1]
    %v2131 = vperm.slane %v2129, 0
    %v2149 = vunpack.c.l.b16 %v2112
    %v2150 = vunpack.c.l.b16 %v2113
    %v2151 = vunpack.c.l.b16 %v2114
    %v2152 = vunpack.c.l.b16 %v2115
    %v2153 = vunpack.c.l.b16 %v2116
    %v2154 = vunpack.c.l.b16 %v2117
    %v2155 = vunpack.c.l.b16 %v2118
    %v2156 = vunpack.c.l.b16 %v2119
    %v2157 = vunpack.c.l.b16 %v2120
    %v2158 = vunpack.c.l.b16 %v2121
    %v2159 = vunpack.c.l.b16 %v2122
    %v2160 = vunpack.c.l.b16 %v2123
    %v2161 = vunpack.c.l.b16 %v2124
    %v2162 = vunpack.c.l.b16 %v2125
    %v2163 = vunpack.c.l.b16 %v2126
    %v2164 = vunpack.c.l.b16 %v2127
    %v2165 = vpack.c.b16 %v2150, %v2149
    %v2166 = vpack.c.b16 %v2152, %v2151
    %v2167 = vpack.c.b16 %v2154, %v2153
    %v2168 = vpack.c.b16 %v2156, %v2155
    %v2169 = vpack.c.b16 %v2158, %v2157
    %v2170 = vpack.c.b16 %v2160, %v2159
    %v2171 = vpack.c.b16 %v2162, %v2161
    %v2172 = vpack.c.b16 %v2164, %v2163
    %2181 = vmatpush.bf16.msra.mxu0 %v2172
    %2182 = vmatpush.bf16.msra.mxu0 %v2171
    %2183 = vmatpush.bf16.msra.mxu0 %v2170
    %2184 = vmatpush.bf16.msra.mxu0 %v2169
    %2185 = vmatpush.bf16.msra.mxu0 %v2168
    %2186 = vmatpush.bf16.msra.mxu0 %v2167
    %2187 = vmatpush.bf16.msra.mxu0 %v2166
    %2188 = vmatpush.bf16.msra.mxu0 %v2165
    %2189 = vmatmul.bf16.gmra.mxu0 %v2016
    %v2190 = vpop.f32.mrf.mxu0
    %v2191 = vadd.f32 %v2131, %v2190
    %v2192 = vpop.f32.mrf.mxu0
    %v2193 = vadd.f32 %v2131, %v2192
    %2194 = vmatmul.bf16.gmra.mxu0 %v2017
    %v2195 = vpop.f32.mrf.mxu0
    %v2196 = vadd.f32 %v2131, %v2195
    %v2197 = vpop.f32.mrf.mxu0
    %v2198 = vadd.f32 %v2131, %v2197
    %2199 = vdwg.mxu0
    %s2200 = scalar_lea.vmem [#allocation5], 64
    %v2201 = vld [vmem:[%s2200] sm:$0xf]
    %v2202 = vld [vmem:[%s2200 + $0x4] sm:$0xf]
    %v2203 = vld [vmem:[%s2200 + $0x8] sm:$0xf]
    %v2204 = vld [vmem:[%s2200 + $0xc] sm:$0xf]
    %v2205 = vld [vmem:[%s2200 + $0x10] sm:$0xf]
    %v2206 = vld [vmem:[%s2200 + $0x14] sm:$0xf]
    %v2207 = vld [vmem:[%s2200 + $0x18] sm:$0xf]
    %v2208 = vld [vmem:[%s2200 + $0x1c] sm:$0xf]
    %v2209 = vld [vmem:[%s2200 + $0x20] sm:$0xf]
    %v2210 = vld [vmem:[%s2200 + $0x24] sm:$0xf]
    %v2211 = vld [vmem:[%s2200 + $0x28] sm:$0xf]
    %v2212 = vld [vmem:[%s2200 + $0x2c] sm:$0xf]
    %v2213 = vld [vmem:[%s2200 + $0x30] sm:$0xf]
    %v2214 = vld [vmem:[%s2200 + $0x34] sm:$0xf]
    %v2215 = vld [vmem:[%s2200 + $0x38] sm:$0xf]
    %v2216 = vld [vmem:[%s2200 + $0x3c] sm:$0xf]
    %s2217 = scalar_lea.vmem %s9, 1
    %v2218 = vld [vmem:[%s2217] sm:$0x1]
    %v2220 = vperm.slane %v2218, 0
    %v2238 = vunpack.c.l.b16 %v2201
    %v2239 = vunpack.c.l.b16 %v2202
    %v2240 = vunpack.c.l.b16 %v2203
    %v2241 = vunpack.c.l.b16 %v2204
    %v2242 = vunpack.c.l.b16 %v2205
    %v2243 = vunpack.c.l.b16 %v2206
    %v2244 = vunpack.c.l.b16 %v2207
    %v2245 = vunpack.c.l.b16 %v2208
    %v2246 = vunpack.c.l.b16 %v2209
    %v2247 = vunpack.c.l.b16 %v2210
    %v2248 = vunpack.c.l.b16 %v2211
    %v2249 = vunpack.c.l.b16 %v2212
    %v2250 = vunpack.c.l.b16 %v2213
    %v2251 = vunpack.c.l.b16 %v2214
    %v2252 = vunpack.c.l.b16 %v2215
    %v2253 = vunpack.c.l.b16 %v2216
    %v2254 = vpack.c.b16 %v2239, %v2238
    %v2255 = vpack.c.b16 %v2241, %v2240
    %v2256 = vpack.c.b16 %v2243, %v2242
    %v2257 = vpack.c.b16 %v2245, %v2244
    %v2258 = vpack.c.b16 %v2247, %v2246
    %v2259 = vpack.c.b16 %v2249, %v2248
    %v2260 = vpack.c.b16 %v2251, %v2250
    %v2261 = vpack.c.b16 %v2253, %v2252
    %2270 = vmatpush.bf16.msra.mxu0 %v2261
    %2271 = vmatpush.bf16.msra.mxu0 %v2260
    %2272 = vmatpush.bf16.msra.mxu0 %v2259
    %2273 = vmatpush.bf16.msra.mxu0 %v2258
    %2274 = vmatpush.bf16.msra.mxu0 %v2257
    %2275 = vmatpush.bf16.msra.mxu0 %v2256
    %2276 = vmatpush.bf16.msra.mxu0 %v2255
    %2277 = vmatpush.bf16.msra.mxu0 %v2254
    %2278 = vmatmul.bf16.gmra.mxu0 %v2016
    %v2279 = vpop.f32.mrf.mxu0
    %v2280 = vadd.f32 %v2220, %v2279
    %v2281 = vpop.f32.mrf.mxu0
    %v2282 = vadd.f32 %v2220, %v2281
    %2283 = vmatmul.bf16.gmra.mxu0 %v2017
    %v2284 = vpop.f32.mrf.mxu0
    %v2285 = vadd.f32 %v2220, %v2284
    %v2286 = vpop.f32.mrf.mxu0
    %v2287 = vadd.f32 %v2220, %v2286
    %2288 = vdwg.mxu0
    %v2290 = vsel %vm520, %v2107, 0
    %v2293 = vsel %vm520, %v2108, 0
    %v2296 = vsel %vm520, %v2191, 0
    %v2299 = vsel %vm520, %v2193, 0
    %2301 = vmatpush.xpose.msra.mxu0 0.0
    %2302 = vmatpush.xpose.msra.mxu0 0.0
    %2303 = vmatpush.xpose.msra.mxu0 0.0
    %2304 = vmatpush.xpose.msra.mxu0 0.0
    %2305 = vmatpush.xpose.msra.mxu0 0.0
    %2306 = vmatpush.xpose.msra.mxu0 0.0
    %2307 = vmatpush.xpose.msra.mxu0 0.0
    %2308 = vmatpush.xpose.msra.mxu0 0.0
    %2309 = vmatpush.xpose.msra.mxu0 0.0
    %2310 = vmatpush.xpose.msra.mxu0 0.0
    %2311 = vmatpush.xpose.msra.mxu0 0.0
    %2312 = vmatpush.xpose.msra.mxu0 0.0
    %2313 = vmatpush.xpose.msra.mxu0 0.0
    %2314 = vmatpush.xpose.msra.mxu0 0.0
    %2315 = vmatpush.xpose.msra.mxu0 %v2299
    %2316 = vmatpush.xpose.msra.mxu0 %v2296
    %2317 = vmatmul.f32.gmra.mxu0 %v2290
    %v2318 = vpop.f32.mrf.mxu0
    %v2319 = vadd.f32 %v518, %v2318
    %2320 = vmatmul.f32.gmra.mxu0 %v2293
    %v2321 = vpop.f32.mrf.mxu0
    %v2322 = vadd.f32 %v518, %v2321
    %2323 = vdwg.mxu0
    %v2324 = vsel %vm556, %v2319, -inf
    %2325 = vmax.xlane.f32.xlu0 %v2324
    %v2326 = vpop.xlane.xlu0 %2325
    %v2327 = vsel %vm556, %v2322, -inf
    %2328 = vmax.xlane.f32.xlu0 %v2327
    %v2329 = vpop.xlane.xlu0 %2328
    %v2330 = vsub.f32 %v2319, %v2326
    %v2331 = vsub.f32 %v2322, %v2329
    %v2332 = vmul.f32 %v2330, 1.442695
    %v2333 = vpow.pop %v2332
    %v2334 = vmul.f32 %v2331, 1.442695
    %v2335 = vpow.pop %v2334
    %v2336 = vsel %vm556, %v2333, 0.0
    %2337 = vadd.xlane.f32.xlu0 %v2336
    %v2338 = vpop.xlane.xlu0 %2337
    %v2339 = vsel %vm556, %v2335, 0.0
    %2340 = vadd.xlane.f32.xlu0 %v2339
    %v2341 = vpop.xlane.xlu0 %2340
    %v2342 = vrcp.pop %v2338
    %v2343 = vrcp.pop %v2341
    %v2344 = vmul.f32 %v2333, %v2342
    %v2345 = vmul.f32 %v2335, %v2343
    %v2347 = vsel %vm556, %v2344, 0
    %v2350 = vsel %vm556, %v2345, 0
    %2352 = vmatpush.msra.mxu0 0.0
    %2353 = vmatpush.msra.mxu0 0.0
    %2354 = vmatpush.msra.mxu0 0.0
    %2355 = vmatpush.msra.mxu0 0.0
    %2356 = vmatpush.msra.mxu0 0.0
    %2357 = vmatpush.msra.mxu0 0.0
    %2358 = vmatpush.msra.mxu0 0.0
    %2359 = vmatpush.msra.mxu0 0.0
    %2360 = vmatpush.msra.mxu0 0.0
    %2361 = vmatpush.msra.mxu0 0.0
    %2362 = vmatpush.msra.mxu0 0.0
    %2363 = vmatpush.msra.mxu0 0.0
    %2364 = vmatpush.msra.mxu0 0.0
    %2365 = vmatpush.msra.mxu0 0.0
    %2366 = vmatpush.msra.mxu0 %v2282
    %2367 = vmatpush.msra.mxu0 %v2280
    %2368 = vmatmul.f32.gmra.mxu0 %v2347
    %v2369 = vpop.f32.mrf.mxu0
    %v2370 = vadd.f32 0.0, %v2369
    %2371 = vmatmul.f32.gmra.mxu0 %v2350
    %v2372 = vpop.f32.mrf.mxu0
    %v2373 = vadd.f32 0.0, %v2372
    %2374 = vdwg.mxu0
    %2375 = vrot.lane.b32.xlu0 %v2107, 96
    %v2376 = vpop.permute.xlu0 %2375
    %2377 = vrot.lane.b32.xlu0 %v2108, 96
    %v2378 = vpop.permute.xlu0 %2377
    %2379 = vrot.lane.b32.xlu0 %v2191, 96
    %v2380 = vpop.permute.xlu0 %2379
    %2381 = vrot.lane.b32.xlu0 %v2193, 96
    %v2382 = vpop.permute.xlu0 %2381
    %v2383 = vsel %vm520, %v2376, 0
    %v2385 = vsel %vm520, %v2378, 0
    %v2387 = vsel %vm520, %v2380, 0
    %v2389 = vsel %vm520, %v2382, 0
    %2391 = vmatpush.xpose.msra.mxu0 0.0
    %2392 = vmatpush.xpose.msra.mxu0 0.0
    %2393 = vmatpush.xpose.msra.mxu0 0.0
    %2394 = vmatpush.xpose.msra.mxu0 0.0
    %2395 = vmatpush.xpose.msra.mxu0 0.0
    %2396 = vmatpush.xpose.msra.mxu0 0.0
    %2397 = vmatpush.xpose.msra.mxu0 0.0
    %2398 = vmatpush.xpose.msra.mxu0 0.0
    %2399 = vmatpush.xpose.msra.mxu0 0.0
    %2400 = vmatpush.xpose.msra.mxu0 0.0
    %2401 = vmatpush.xpose.msra.mxu0 0.0
    %2402 = vmatpush.xpose.msra.mxu0 0.0
    %2403 = vmatpush.xpose.msra.mxu0 0.0
    %2404 = vmatpush.xpose.msra.mxu0 0.0
    %2405 = vmatpush.xpose.msra.mxu0 %v2389
    %2406 = vmatpush.xpose.msra.mxu0 %v2387
    %2407 = vmatmul.f32.gmra.mxu0 %v2383
    %v2408 = vpop.f32.mrf.mxu0
    %v2409 = vadd.f32 %v518, %v2408
    %2410 = vmatmul.f32.gmra.mxu0 %v2385
    %v2411 = vpop.f32.mrf.mxu0
    %v2412 = vadd.f32 %v518, %v2411
    %2413 = vdwg.mxu0
    %v2414 = vsel %vm556, %v2409, -inf
    %2415 = vmax.xlane.f32.xlu0 %v2414
    %v2416 = vpop.xlane.xlu0 %2415
    %v2417 = vsel %vm556, %v2412, -inf
    %2418 = vmax.xlane.f32.xlu0 %v2417
    %v2419 = vpop.xlane.xlu0 %2418
    %v2420 = vsub.f32 %v2409, %v2416
    %v2421 = vsub.f32 %v2412, %v2419
    %v2422 = vmul.f32 %v2420, 1.442695
    %v2423 = vpow.pop %v2422
    %v2424 = vmul.f32 %v2421, 1.442695
    %v2425 = vpow.pop %v2424
    %v2426 = vsel %vm556, %v2423, 0.0
    %2427 = vadd.xlane.f32.xlu0 %v2426
    %v2428 = vpop.xlane.xlu0 %2427
    %v2429 = vsel %vm556, %v2425, 0.0
    %2430 = vadd.xlane.f32.xlu0 %v2429
    %v2431 = vpop.xlane.xlu0 %2430
    %v2432 = vrcp.pop %v2428
    %v2433 = vrcp.pop %v2431
    %v2434 = vmul.f32 %v2423, %v2432
    %v2435 = vmul.f32 %v2425, %v2433
    %2438 = vrot.lane.b32.xlu0 %v2280, 96
    %v2439 = vpop.permute.xlu0 %2438
    %2440 = vrot.lane.b32.xlu0 %v2282, 96
    %v2441 = vpop.permute.xlu0 %2440
    %v2445 = vsel %vm556, %v2434, 0
    %v2448 = vsel %vm556, %v2435, 0
    %2450 = vmatpush.msra.mxu0 0.0
    %2451 = vmatpush.msra.mxu0 0.0
    %2452 = vmatpush.msra.mxu0 0.0
    %2453 = vmatpush.msra.mxu0 0.0
    %2454 = vmatpush.msra.mxu0 0.0
    %2455 = vmatpush.msra.mxu0 0.0
    %2456 = vmatpush.msra.mxu0 0.0
    %2457 = vmatpush.msra.mxu0 0.0
    %2458 = vmatpush.msra.mxu0 0.0
    %2459 = vmatpush.msra.mxu0 0.0
    %2460 = vmatpush.msra.mxu0 0.0
    %2461 = vmatpush.msra.mxu0 0.0
    %2462 = vmatpush.msra.mxu0 0.0
    %2463 = vmatpush.msra.mxu0 0.0
    %2464 = vmatpush.msra.mxu0 %v2441
    %2465 = vmatpush.msra.mxu0 %v2439
    %2466 = vmatmul.f32.gmra.mxu0 %v2445
    %v2467 = vpop.f32.mrf.mxu0
    %v2468 = vadd.f32 0.0, %v2467
    %2469 = vmatmul.f32.gmra.mxu0 %v2448
    %v2470 = vpop.f32.mrf.mxu0
    %v2471 = vadd.f32 0.0, %v2470
    %2472 = vdwg.mxu0
    %2473 = vrot.lane.b32.xlu0 %v2107, 64
    %v2474 = vpop.permute.xlu0 %2473
    %2475 = vrot.lane.b32.xlu0 %v2108, 64
    %v2476 = vpop.permute.xlu0 %2475
    %2477 = vrot.lane.b32.xlu0 %v2191, 64
    %v2478 = vpop.permute.xlu0 %2477
    %2479 = vrot.lane.b32.xlu0 %v2193, 64
    %v2480 = vpop.permute.xlu0 %2479
    %v2481 = vsel %vm520, %v2474, 0
    %v2483 = vsel %vm520, %v2476, 0
    %v2485 = vsel %vm520, %v2478, 0
    %v2487 = vsel %vm520, %v2480, 0
    %2489 = vmatpush.xpose.msra.mxu0 0.0
    %2490 = vmatpush.xpose.msra.mxu0 0.0
    %2491 = vmatpush.xpose.msra.mxu0 0.0
    %2492 = vmatpush.xpose.msra.mxu0 0.0
    %2493 = vmatpush.xpose.msra.mxu0 0.0
    %2494 = vmatpush.xpose.msra.mxu0 0.0
    %2495 = vmatpush.xpose.msra.mxu0 0.0
    %2496 = vmatpush.xpose.msra.mxu0 0.0
    %2497 = vmatpush.xpose.msra.mxu0 0.0
    %2498 = vmatpush.xpose.msra.mxu0 0.0
    %2499 = vmatpush.xpose.msra.mxu0 0.0
    %2500 = vmatpush.xpose.msra.mxu0 0.0
    %2501 = vmatpush.xpose.msra.mxu0 0.0
    %2502 = vmatpush.xpose.msra.mxu0 0.0
    %2503 = vmatpush.xpose.msra.mxu0 %v2487
    %2504 = vmatpush.xpose.msra.mxu0 %v2485
    %2505 = vmatmul.f32.gmra.mxu0 %v2481
    %v2506 = vpop.f32.mrf.mxu0
    %v2507 = vadd.f32 %v518, %v2506
    %2508 = vmatmul.f32.gmra.mxu0 %v2483
    %v2509 = vpop.f32.mrf.mxu0
    %v2510 = vadd.f32 %v518, %v2509
    %2511 = vdwg.mxu0
    %v2512 = vsel %vm556, %v2507, -inf
    %2513 = vmax.xlane.f32.xlu0 %v2512
    %v2514 = vpop.xlane.xlu0 %2513
    %v2515 = vsel %vm556, %v2510, -inf
    %2516 = vmax.xlane.f32.xlu0 %v2515
    %v2517 = vpop.xlane.xlu0 %2516
    %v2518 = vsub.f32 %v2507, %v2514
    %v2519 = vsub.f32 %v2510, %v2517
    %v2520 = vmul.f32 %v2518, 1.442695
    %v2521 = vpow.pop %v2520
    %v2522 = vmul.f32 %v2519, 1.442695
    %v2523 = vpow.pop %v2522
    %v2524 = vsel %vm556, %v2521, 0.0
    %2525 = vadd.xlane.f32.xlu0 %v2524
    %v2526 = vpop.xlane.xlu0 %2525
    %v2527 = vsel %vm556, %v2523, 0.0
    %2528 = vadd.xlane.f32.xlu0 %v2527
    %v2529 = vpop.xlane.xlu0 %2528
    %v2530 = vrcp.pop %v2526
    %v2531 = vrcp.pop %v2529
    %v2532 = vmul.f32 %v2521, %v2530
    %v2533 = vmul.f32 %v2523, %v2531
    %2534 = vrot.lane.b32.xlu0 %v2280, 64
    %v2535 = vpop.permute.xlu0 %2534
    %2536 = vrot.lane.b32.xlu0 %v2282, 64
    %v2537 = vpop.permute.xlu0 %2536
    %v2541 = vsel %vm556, %v2532, 0
    %v2544 = vsel %vm556, %v2533, 0
    %2546 = vmatpush.msra.mxu0 0.0
    %2547 = vmatpush.msra.mxu0 0.0
    %2548 = vmatpush.msra.mxu0 0.0
    %2549 = vmatpush.msra.mxu0 0.0
    %2550 = vmatpush.msra.mxu0 0.0
    %2551 = vmatpush.msra.mxu0 0.0
    %2552 = vmatpush.msra.mxu0 0.0
    %2553 = vmatpush.msra.mxu0 0.0
    %2554 = vmatpush.msra.mxu0 0.0
    %2555 = vmatpush.msra.mxu0 0.0
    %2556 = vmatpush.msra.mxu0 0.0
    %2557 = vmatpush.msra.mxu0 0.0
    %2558 = vmatpush.msra.mxu0 0.0
    %2559 = vmatpush.msra.mxu0 0.0
    %2560 = vmatpush.msra.mxu0 %v2537
    %2561 = vmatpush.msra.mxu0 %v2535
    %2562 = vmatmul.f32.gmra.mxu0 %v2541
    %v2563 = vpop.f32.mrf.mxu0
    %v2564 = vadd.f32 0.0, %v2563
    %2565 = vmatmul.f32.gmra.mxu0 %v2544
    %v2566 = vpop.f32.mrf.mxu0
    %v2567 = vadd.f32 0.0, %v2566
    %2568 = vdwg.mxu0
    %2569 = vrot.lane.b32.xlu0 %v2107, 32
    %v2570 = vpop.permute.xlu0 %2569
    %2571 = vrot.lane.b32.xlu0 %v2108, 32
    %v2572 = vpop.permute.xlu0 %2571
    %2573 = vrot.lane.b32.xlu0 %v2191, 32
    %v2574 = vpop.permute.xlu0 %2573
    %2575 = vrot.lane.b32.xlu0 %v2193, 32
    %v2576 = vpop.permute.xlu0 %2575
    %v2577 = vsel %vm520, %v2570, 0
    %v2579 = vsel %vm520, %v2572, 0
    %v2581 = vsel %vm520, %v2574, 0
    %v2583 = vsel %vm520, %v2576, 0
    %2585 = vmatpush.xpose.msra.mxu0 0.0
    %2586 = vmatpush.xpose.msra.mxu0 0.0
    %2587 = vmatpush.xpose.msra.mxu0 0.0
    %2588 = vmatpush.xpose.msra.mxu0 0.0
    %2589 = vmatpush.xpose.msra.mxu0 0.0
    %2590 = vmatpush.xpose.msra.mxu0 0.0
    %2591 = vmatpush.xpose.msra.mxu0 0.0
    %2592 = vmatpush.xpose.msra.mxu0 0.0
    %2593 = vmatpush.xpose.msra.mxu0 0.0
    %2594 = vmatpush.xpose.msra.mxu0 0.0
    %2595 = vmatpush.xpose.msra.mxu0 0.0
    %2596 = vmatpush.xpose.msra.mxu0 0.0
    %2597 = vmatpush.xpose.msra.mxu0 0.0
    %2598 = vmatpush.xpose.msra.mxu0 0.0
    %2599 = vmatpush.xpose.msra.mxu0 %v2583
    %2600 = vmatpush.xpose.msra.mxu0 %v2581
    %2601 = vmatmul.f32.gmra.mxu0 %v2577
    %v2602 = vpop.f32.mrf.mxu0
    %v2603 = vadd.f32 %v518, %v2602
    %2604 = vmatmul.f32.gmra.mxu0 %v2579
    %v2605 = vpop.f32.mrf.mxu0
    %v2606 = vadd.f32 %v518, %v2605
    %2607 = vdwg.mxu0
    %v2608 = vsel %vm556, %v2603, -inf
    %2609 = vmax.xlane.f32.xlu0 %v2608
    %v2610 = vpop.xlane.xlu0 %2609
    %v2611 = vsel %vm556, %v2606, -inf
    %2612 = vmax.xlane.f32.xlu0 %v2611
    %v2613 = vpop.xlane.xlu0 %2612
    %v2614 = vsub.f32 %v2603, %v2610
    %v2615 = vsub.f32 %v2606, %v2613
    %v2616 = vmul.f32 %v2614, 1.442695
    %v2617 = vpow.pop %v2616
    %v2618 = vmul.f32 %v2615, 1.442695
    %v2619 = vpow.pop %v2618
    %v2620 = vsel %vm556, %v2617, 0.0
    %2621 = vadd.xlane.f32.xlu0 %v2620
    %v2622 = vpop.xlane.xlu0 %2621
    %v2623 = vsel %vm556, %v2619, 0.0
    %2624 = vadd.xlane.f32.xlu0 %v2623
    %v2625 = vpop.xlane.xlu0 %2624
    %v2626 = vrcp.pop %v2622
    %v2627 = vrcp.pop %v2625
    %v2628 = vmul.f32 %v2617, %v2626
    %v2629 = vmul.f32 %v2619, %v2627
    %2630 = vrot.lane.b32.xlu0 %v2280, 32
    %v2631 = vpop.permute.xlu0 %2630
    %2632 = vrot.lane.b32.xlu0 %v2282, 32
    %v2633 = vpop.permute.xlu0 %2632
    %v2637 = vsel %vm556, %v2628, 0
    %v2640 = vsel %vm556, %v2629, 0
    %2642 = vmatpush.msra.mxu0 0.0
    %2643 = vmatpush.msra.mxu0 0.0
    %2644 = vmatpush.msra.mxu0 0.0
    %2645 = vmatpush.msra.mxu0 0.0
    %2646 = vmatpush.msra.mxu0 0.0
    %2647 = vmatpush.msra.mxu0 0.0
    %2648 = vmatpush.msra.mxu0 0.0
    %2649 = vmatpush.msra.mxu0 0.0
    %2650 = vmatpush.msra.mxu0 0.0
    %2651 = vmatpush.msra.mxu0 0.0
    %2652 = vmatpush.msra.mxu0 0.0
    %2653 = vmatpush.msra.mxu0 0.0
    %2654 = vmatpush.msra.mxu0 0.0
    %2655 = vmatpush.msra.mxu0 0.0
    %2656 = vmatpush.msra.mxu0 %v2633
    %2657 = vmatpush.msra.mxu0 %v2631
    %2658 = vmatmul.f32.gmra.mxu0 %v2637
    %v2659 = vpop.f32.mrf.mxu0
    %v2660 = vadd.f32 0.0, %v2659
    %2661 = vmatmul.f32.gmra.mxu0 %v2640
    %v2662 = vpop.f32.mrf.mxu0
    %v2663 = vadd.f32 0.0, %v2662
    %2664 = vdwg.mxu0
    %2667 = vrot.lane.b32.xlu0 %v2468, 32
    %v2668 = vpop.permute.xlu0 %2667
    %2669 = vrot.lane.b32.xlu0 %v2471, 32
    %v2670 = vpop.permute.xlu0 %2669
    %2675 = vrot.lane.b32.xlu0 %v2564, 64
    %v2676 = vpop.permute.xlu0 %2675
    %2677 = vrot.lane.b32.xlu0 %v2567, 64
    %v2678 = vpop.permute.xlu0 %2677
    %2683 = vrot.lane.b32.xlu0 %v2660, 96
    %v2684 = vpop.permute.xlu0 %2683
    %2685 = vrot.lane.b32.xlu0 %v2663, 96
    %v2686 = vpop.permute.xlu0 %2685
    %v2689 = vsel %vm520, %v2370, %v2668
    %v2690 = vsel %vm520, %v2373, %v2670
    %v2691 = vsel %vm924, %v2689, %v2676
    %v2692 = vsel %vm924, %v2690, %v2678
    %v2693 = vsel %vm927, %v2691, %v2684
    %v2694 = vsel %vm927, %v2692, %v2686
    %v2696 = vsel %vm520, %v2109, 0
    %v2699 = vsel %vm520, %v2110, 0
    %v2702 = vsel %vm520, %v2196, 0
    %v2705 = vsel %vm520, %v2198, 0
    %2707 = vmatpush.xpose.msra.mxu0 0.0
    %2708 = vmatpush.xpose.msra.mxu0 0.0
    %2709 = vmatpush.xpose.msra.mxu0 0.0
    %2710 = vmatpush.xpose.msra.mxu0 0.0
    %2711 = vmatpush.xpose.msra.mxu0 0.0
    %2712 = vmatpush.xpose.msra.mxu0 0.0
    %2713 = vmatpush.xpose.msra.mxu0 0.0
    %2714 = vmatpush.xpose.msra.mxu0 0.0
    %2715 = vmatpush.xpose.msra.mxu0 0.0
    %2716 = vmatpush.xpose.msra.mxu0 0.0
    %2717 = vmatpush.xpose.msra.mxu0 0.0
    %2718 = vmatpush.xpose.msra.mxu0 0.0
    %2719 = vmatpush.xpose.msra.mxu0 0.0
    %2720 = vmatpush.xpose.msra.mxu0 0.0
    %2721 = vmatpush.xpose.msra.mxu0 %v2705
    %2722 = vmatpush.xpose.msra.mxu0 %v2702
    %2723 = vmatmul.f32.gmra.mxu0 %v2696
    %v2724 = vpop.f32.mrf.mxu0
    %v2725 = vadd.f32 %v931, %v2724
    %2726 = vmatmul.f32.gmra.mxu0 %v2699
    %v2727 = vpop.f32.mrf.mxu0
    %v2728 = vadd.f32 %v931, %v2727
    %2729 = vdwg.mxu0
    %v2730 = vsel %vm556, %v2725, -inf
    %2731 = vmax.xlane.f32.xlu0 %v2730
    %v2732 = vpop.xlane.xlu0 %2731
    %v2733 = vsel %vm556, %v2728, -inf
    %2734 = vmax.xlane.f32.xlu0 %v2733
    %v2735 = vpop.xlane.xlu0 %2734
    %v2736 = vsub.f32 %v2725, %v2732
    %v2737 = vsub.f32 %v2728, %v2735
    %v2738 = vmul.f32 %v2736, 1.442695
    %v2739 = vpow.pop %v2738
    %v2740 = vmul.f32 %v2737, 1.442695
    %v2741 = vpow.pop %v2740
    %v2742 = vsel %vm556, %v2739, 0.0
    %2743 = vadd.xlane.f32.xlu0 %v2742
    %v2744 = vpop.xlane.xlu0 %2743
    %v2745 = vsel %vm556, %v2741, 0.0
    %2746 = vadd.xlane.f32.xlu0 %v2745
    %v2747 = vpop.xlane.xlu0 %2746
    %v2748 = vrcp.pop %v2744
    %v2749 = vrcp.pop %v2747
    %v2750 = vmul.f32 %v2739, %v2748
    %v2751 = vmul.f32 %v2741, %v2749
    %v2753 = vsel %vm556, %v2750, 0
    %v2756 = vsel %vm556, %v2751, 0
    %2758 = vmatpush.msra.mxu0 0.0
    %2759 = vmatpush.msra.mxu0 0.0
    %2760 = vmatpush.msra.mxu0 0.0
    %2761 = vmatpush.msra.mxu0 0.0
    %2762 = vmatpush.msra.mxu0 0.0
    %2763 = vmatpush.msra.mxu0 0.0
    %2764 = vmatpush.msra.mxu0 0.0
    %2765 = vmatpush.msra.mxu0 0.0
    %2766 = vmatpush.msra.mxu0 0.0
    %2767 = vmatpush.msra.mxu0 0.0
    %2768 = vmatpush.msra.mxu0 0.0
    %2769 = vmatpush.msra.mxu0 0.0
    %2770 = vmatpush.msra.mxu0 0.0
    %2771 = vmatpush.msra.mxu0 0.0
    %2772 = vmatpush.msra.mxu0 %v2287
    %2773 = vmatpush.msra.mxu0 %v2285
    %2774 = vmatmul.f32.gmra.mxu0 %v2753
    %v2775 = vpop.f32.mrf.mxu0
    %v2776 = vadd.f32 0.0, %v2775
    %2777 = vmatmul.f32.gmra.mxu0 %v2756
    %v2778 = vpop.f32.mrf.mxu0
    %v2779 = vadd.f32 0.0, %v2778
    %2780 = vdwg.mxu0
    %2781 = vrot.lane.b32.xlu0 %v2109, 96
    %v2782 = vpop.permute.xlu0 %2781
    %2783 = vrot.lane.b32.xlu0 %v2110, 96
    %v2784 = vpop.permute.xlu0 %2783
    %2785 = vrot.lane.b32.xlu0 %v2196, 96
    %v2786 = vpop.permute.xlu0 %2785
    %2787 = vrot.lane.b32.xlu0 %v2198, 96
    %v2788 = vpop.permute.xlu0 %2787
    %v2789 = vsel %vm520, %v2782, 0
    %v2791 = vsel %vm520, %v2784, 0
    %v2793 = vsel %vm520, %v2786, 0
    %v2795 = vsel %vm520, %v2788, 0
    %2797 = vmatpush.xpose.msra.mxu0 0.0
    %2798 = vmatpush.xpose.msra.mxu0 0.0
    %2799 = vmatpush.xpose.msra.mxu0 0.0
    %2800 = vmatpush.xpose.msra.mxu0 0.0
    %2801 = vmatpush.xpose.msra.mxu0 0.0
    %2802 = vmatpush.xpose.msra.mxu0 0.0
    %2803 = vmatpush.xpose.msra.mxu0 0.0
    %2804 = vmatpush.xpose.msra.mxu0 0.0
    %2805 = vmatpush.xpose.msra.mxu0 0.0
    %2806 = vmatpush.xpose.msra.mxu0 0.0
    %2807 = vmatpush.xpose.msra.mxu0 0.0
    %2808 = vmatpush.xpose.msra.mxu0 0.0
    %2809 = vmatpush.xpose.msra.mxu0 0.0
    %2810 = vmatpush.xpose.msra.mxu0 0.0
    %2811 = vmatpush.xpose.msra.mxu0 %v2795
    %2812 = vmatpush.xpose.msra.mxu0 %v2793
    %2813 = vmatmul.f32.gmra.mxu0 %v2789
    %v2814 = vpop.f32.mrf.mxu0
    %v2815 = vadd.f32 %v931, %v2814
    %2816 = vmatmul.f32.gmra.mxu0 %v2791
    %v2817 = vpop.f32.mrf.mxu0
    %v2818 = vadd.f32 %v931, %v2817
    %2819 = vdwg.mxu0
    %v2820 = vsel %vm556, %v2815, -inf
    %2821 = vmax.xlane.f32.xlu0 %v2820
    %v2822 = vpop.xlane.xlu0 %2821
    %v2823 = vsel %vm556, %v2818, -inf
    %2824 = vmax.xlane.f32.xlu0 %v2823
    %v2825 = vpop.xlane.xlu0 %2824
    %v2826 = vsub.f32 %v2815, %v2822
    %v2827 = vsub.f32 %v2818, %v2825
    %v2828 = vmul.f32 %v2826, 1.442695
    %v2829 = vpow.pop %v2828
    %v2830 = vmul.f32 %v2827, 1.442695
    %v2831 = vpow.pop %v2830
    %v2832 = vsel %vm556, %v2829, 0.0
    %2833 = vadd.xlane.f32.xlu0 %v2832
    %v2834 = vpop.xlane.xlu0 %2833
    %v2835 = vsel %vm556, %v2831, 0.0
    %2836 = vadd.xlane.f32.xlu0 %v2835
    %v2837 = vpop.xlane.xlu0 %2836
    %v2838 = vrcp.pop %v2834
    %v2839 = vrcp.pop %v2837
    %v2840 = vmul.f32 %v2829, %v2838
    %v2841 = vmul.f32 %v2831, %v2839
    %2844 = vrot.lane.b32.xlu0 %v2285, 96
    %v2845 = vpop.permute.xlu0 %2844
    %2846 = vrot.lane.b32.xlu0 %v2287, 96
    %v2847 = vpop.permute.xlu0 %2846
    %v2851 = vsel %vm556, %v2840, 0
    %v2854 = vsel %vm556, %v2841, 0
    %2856 = vmatpush.msra.mxu0 0.0
    %2857 = vmatpush.msra.mxu0 0.0
    %2858 = vmatpush.msra.mxu0 0.0
    %2859 = vmatpush.msra.mxu0 0.0
    %2860 = vmatpush.msra.mxu0 0.0
    %2861 = vmatpush.msra.mxu0 0.0
    %2862 = vmatpush.msra.mxu0 0.0
    %2863 = vmatpush.msra.mxu0 0.0
    %2864 = vmatpush.msra.mxu0 0.0
    %2865 = vmatpush.msra.mxu0 0.0
    %2866 = vmatpush.msra.mxu0 0.0
    %2867 = vmatpush.msra.mxu0 0.0
    %2868 = vmatpush.msra.mxu0 0.0
    %2869 = vmatpush.msra.mxu0 0.0
    %2870 = vmatpush.msra.mxu0 %v2847
    %2871 = vmatpush.msra.mxu0 %v2845
    %2872 = vmatmul.f32.gmra.mxu0 %v2851
    %v2873 = vpop.f32.mrf.mxu0
    %v2874 = vadd.f32 0.0, %v2873
    %2875 = vmatmul.f32.gmra.mxu0 %v2854
    %v2876 = vpop.f32.mrf.mxu0
    %v2877 = vadd.f32 0.0, %v2876
    %2878 = vdwg.mxu0
    %2879 = vrot.lane.b32.xlu0 %v2109, 64
    %v2880 = vpop.permute.xlu0 %2879
    %2881 = vrot.lane.b32.xlu0 %v2110, 64
    %v2882 = vpop.permute.xlu0 %2881
    %2883 = vrot.lane.b32.xlu0 %v2196, 64
    %v2884 = vpop.permute.xlu0 %2883
    %2885 = vrot.lane.b32.xlu0 %v2198, 64
    %v2886 = vpop.permute.xlu0 %2885
    %v2887 = vsel %vm520, %v2880, 0
    %v2889 = vsel %vm520, %v2882, 0
    %v2891 = vsel %vm520, %v2884, 0
    %v2893 = vsel %vm520, %v2886, 0
    %2895 = vmatpush.xpose.msra.mxu0 0.0
    %2896 = vmatpush.xpose.msra.mxu0 0.0
    %2897 = vmatpush.xpose.msra.mxu0 0.0
    %2898 = vmatpush.xpose.msra.mxu0 0.0
    %2899 = vmatpush.xpose.msra.mxu0 0.0
    %2900 = vmatpush.xpose.msra.mxu0 0.0
    %2901 = vmatpush.xpose.msra.mxu0 0.0
    %2902 = vmatpush.xpose.msra.mxu0 0.0
    %2903 = vmatpush.xpose.msra.mxu0 0.0
    %2904 = vmatpush.xpose.msra.mxu0 0.0
    %2905 = vmatpush.xpose.msra.mxu0 0.0
    %2906 = vmatpush.xpose.msra.mxu0 0.0
    %2907 = vmatpush.xpose.msra.mxu0 0.0
    %2908 = vmatpush.xpose.msra.mxu0 0.0
    %2909 = vmatpush.xpose.msra.mxu0 %v2893
    %2910 = vmatpush.xpose.msra.mxu0 %v2891
    %2911 = vmatmul.f32.gmra.mxu0 %v2887
    %v2912 = vpop.f32.mrf.mxu0
    %v2913 = vadd.f32 %v931, %v2912
    %2914 = vmatmul.f32.gmra.mxu0 %v2889
    %v2915 = vpop.f32.mrf.mxu0
    %v2916 = vadd.f32 %v931, %v2915
    %2917 = vdwg.mxu0
    %v2918 = vsel %vm556, %v2913, -inf
    %2919 = vmax.xlane.f32.xlu0 %v2918
    %v2920 = vpop.xlane.xlu0 %2919
    %v2921 = vsel %vm556, %v2916, -inf
    %2922 = vmax.xlane.f32.xlu0 %v2921
    %v2923 = vpop.xlane.xlu0 %2922
    %v2924 = vsub.f32 %v2913, %v2920
    %v2925 = vsub.f32 %v2916, %v2923
    %v2926 = vmul.f32 %v2924, 1.442695
    %v2927 = vpow.pop %v2926
    %v2928 = vmul.f32 %v2925, 1.442695
    %v2929 = vpow.pop %v2928
    %v2930 = vsel %vm556, %v2927, 0.0
    %2931 = vadd.xlane.f32.xlu0 %v2930
    %v2932 = vpop.xlane.xlu0 %2931
    %v2933 = vsel %vm556, %v2929, 0.0
    %2934 = vadd.xlane.f32.xlu0 %v2933
    %v2935 = vpop.xlane.xlu0 %2934
    %v2936 = vrcp.pop %v2932
    %v2937 = vrcp.pop %v2935
    %v2938 = vmul.f32 %v2927, %v2936
    %v2939 = vmul.f32 %v2929, %v2937
    %2940 = vrot.lane.b32.xlu0 %v2285, 64
    %v2941 = vpop.permute.xlu0 %2940
    %2942 = vrot.lane.b32.xlu0 %v2287, 64
    %v2943 = vpop.permute.xlu0 %2942
    %v2947 = vsel %vm556, %v2938, 0
    %v2950 = vsel %vm556, %v2939, 0
    %2952 = vmatpush.msra.mxu0 0.0
    %2953 = vmatpush.msra.mxu0 0.0
    %2954 = vmatpush.msra.mxu0 0.0
    %2955 = vmatpush.msra.mxu0 0.0
    %2956 = vmatpush.msra.mxu0 0.0
    %2957 = vmatpush.msra.mxu0 0.0
    %2958 = vmatpush.msra.mxu0 0.0
    %2959 = vmatpush.msra.mxu0 0.0
    %2960 = vmatpush.msra.mxu0 0.0
    %2961 = vmatpush.msra.mxu0 0.0
    %2962 = vmatpush.msra.mxu0 0.0
    %2963 = vmatpush.msra.mxu0 0.0
    %2964 = vmatpush.msra.mxu0 0.0
    %2965 = vmatpush.msra.mxu0 0.0
    %2966 = vmatpush.msra.mxu0 %v2943
    %2967 = vmatpush.msra.mxu0 %v2941
    %2968 = vmatmul.f32.gmra.mxu0 %v2947
    %v2969 = vpop.f32.mrf.mxu0
    %v2970 = vadd.f32 0.0, %v2969
    %2971 = vmatmul.f32.gmra.mxu0 %v2950
    %v2972 = vpop.f32.mrf.mxu0
    %v2973 = vadd.f32 0.0, %v2972
    %2974 = vdwg.mxu0
    %2975 = vrot.lane.b32.xlu0 %v2109, 32
    %v2976 = vpop.permute.xlu0 %2975
    %2977 = vrot.lane.b32.xlu0 %v2110, 32
    %v2978 = vpop.permute.xlu0 %2977
    %2979 = vrot.lane.b32.xlu0 %v2196, 32
    %v2980 = vpop.permute.xlu0 %2979
    %2981 = vrot.lane.b32.xlu0 %v2198, 32
    %v2982 = vpop.permute.xlu0 %2981
    %v2983 = vsel %vm520, %v2976, 0
    %v2985 = vsel %vm520, %v2978, 0
    %v2987 = vsel %vm520, %v2980, 0
    %v2989 = vsel %vm520, %v2982, 0
    %2991 = vmatpush.xpose.msra.mxu0 0.0
    %2992 = vmatpush.xpose.msra.mxu0 0.0
    %2993 = vmatpush.xpose.msra.mxu0 0.0
    %2994 = vmatpush.xpose.msra.mxu0 0.0
    %2995 = vmatpush.xpose.msra.mxu0 0.0
    %2996 = vmatpush.xpose.msra.mxu0 0.0
    %2997 = vmatpush.xpose.msra.mxu0 0.0
    %2998 = vmatpush.xpose.msra.mxu0 0.0
    %2999 = vmatpush.xpose.msra.mxu0 0.0
    %3000 = vmatpush.xpose.msra.mxu0 0.0
    %3001 = vmatpush.xpose.msra.mxu0 0.0
    %3002 = vmatpush.xpose.msra.mxu0 0.0
    %3003 = vmatpush.xpose.msra.mxu0 0.0
    %3004 = vmatpush.xpose.msra.mxu0 0.0
    %3005 = vmatpush.xpose.msra.mxu0 %v2989
    %3006 = vmatpush.xpose.msra.mxu0 %v2987
    %3007 = vmatmul.f32.gmra.mxu0 %v2983
    %v3008 = vpop.f32.mrf.mxu0
    %v3009 = vadd.f32 %v931, %v3008
    %3010 = vmatmul.f32.gmra.mxu0 %v2985
    %v3011 = vpop.f32.mrf.mxu0
    %v3012 = vadd.f32 %v931, %v3011
    %3013 = vdwg.mxu0
    %v3014 = vsel %vm556, %v3009, -inf
    %3015 = vmax.xlane.f32.xlu0 %v3014
    %v3016 = vpop.xlane.xlu0 %3015
    %v3017 = vsel %vm556, %v3012, -inf
    %3018 = vmax.xlane.f32.xlu0 %v3017
    %v3019 = vpop.xlane.xlu0 %3018
    %v3020 = vsub.f32 %v3009, %v3016
    %v3021 = vsub.f32 %v3012, %v3019
    %v3022 = vmul.f32 %v3020, 1.442695
    %v3023 = vpow.pop %v3022
    %v3024 = vmul.f32 %v3021, 1.442695
    %v3025 = vpow.pop %v3024
    %v3026 = vsel %vm556, %v3023, 0.0
    %3027 = vadd.xlane.f32.xlu0 %v3026
    %v3028 = vpop.xlane.xlu0 %3027
    %v3029 = vsel %vm556, %v3025, 0.0
    %3030 = vadd.xlane.f32.xlu0 %v3029
    %v3031 = vpop.xlane.xlu0 %3030
    %v3032 = vrcp.pop %v3028
    %v3033 = vrcp.pop %v3031
    %v3034 = vmul.f32 %v3023, %v3032
    %v3035 = vmul.f32 %v3025, %v3033
    %3036 = vrot.lane.b32.xlu0 %v2285, 32
    %v3037 = vpop.permute.xlu0 %3036
    %3038 = vrot.lane.b32.xlu0 %v2287, 32
    %v3039 = vpop.permute.xlu0 %3038
    %v3043 = vsel %vm556, %v3034, 0
    %v3046 = vsel %vm556, %v3035, 0
    %3048 = vmatpush.msra.mxu0 0.0
    %3049 = vmatpush.msra.mxu0 0.0
    %3050 = vmatpush.msra.mxu0 0.0
    %3051 = vmatpush.msra.mxu0 0.0
    %3052 = vmatpush.msra.mxu0 0.0
    %3053 = vmatpush.msra.mxu0 0.0
    %3054 = vmatpush.msra.mxu0 0.0
    %3055 = vmatpush.msra.mxu0 0.0
    %3056 = vmatpush.msra.mxu0 0.0
    %3057 = vmatpush.msra.mxu0 0.0
    %3058 = vmatpush.msra.mxu0 0.0
    %3059 = vmatpush.msra.mxu0 0.0
    %3060 = vmatpush.msra.mxu0 0.0
    %3061 = vmatpush.msra.mxu0 0.0
    %3062 = vmatpush.msra.mxu0 %v3039
    %3063 = vmatpush.msra.mxu0 %v3037
    %3064 = vmatmul.f32.gmra.mxu0 %v3043
    %v3065 = vpop.f32.mrf.mxu0
    %v3066 = vadd.f32 0.0, %v3065
    %3067 = vmatmul.f32.gmra.mxu0 %v3046
    %v3068 = vpop.f32.mrf.mxu0
    %v3069 = vadd.f32 0.0, %v3068
    %3070 = vdwg.mxu0
    %3073 = vrot.lane.b32.xlu0 %v2874, 32
    %v3074 = vpop.permute.xlu0 %3073
    %3075 = vrot.lane.b32.xlu0 %v2877, 32
    %v3076 = vpop.permute.xlu0 %3075
    %3081 = vrot.lane.b32.xlu0 %v2970, 64
    %v3082 = vpop.permute.xlu0 %3081
    %3083 = vrot.lane.b32.xlu0 %v2973, 64
    %v3084 = vpop.permute.xlu0 %3083
    %3089 = vrot.lane.b32.xlu0 %v3066, 96
    %v3090 = vpop.permute.xlu0 %3089
    %3091 = vrot.lane.b32.xlu0 %v3069, 96
    %v3092 = vpop.permute.xlu0 %3091
    %v3095 = vsel %vm520, %v2776, %v3074
    %v3096 = vsel %vm520, %v2779, %v3076
    %v3097 = vsel %vm924, %v3095, %v3082
    %v3098 = vsel %vm924, %v3096, %v3084
    %v3099 = vsel %vm927, %v3097, %v3090
    %v3100 = vsel %vm927, %v3098, %v3092
    %v3101 = vpack.c.bf16 %v2694, %v2693
    %v3102 = vpack.c.bf16 %v3100, %v3099
    %s3103 = scalar_lea.vmem [#allocation7], 64
    %v3104 = vld [vmem:[%s3103] sm:$0xf]
    %v3105 = vld [vmem:[%s3103 + $0x4] sm:$0xf]
    %v3106 = vld [vmem:[%s3103 + $0x8] sm:$0xf]
    %v3107 = vld [vmem:[%s3103 + $0xc] sm:$0xf]
    %v3108 = vld [vmem:[%s3103 + $0x10] sm:$0xf]
    %v3109 = vld [vmem:[%s3103 + $0x14] sm:$0xf]
    %v3110 = vld [vmem:[%s3103 + $0x18] sm:$0xf]
    %v3111 = vld [vmem:[%s3103 + $0x1c] sm:$0xf]
    %v3112 = vld [vmem:[%s3103 + $0x20] sm:$0xf]
    %v3113 = vld [vmem:[%s3103 + $0x24] sm:$0xf]
    %v3114 = vld [vmem:[%s3103 + $0x28] sm:$0xf]
    %v3115 = vld [vmem:[%s3103 + $0x2c] sm:$0xf]
    %v3116 = vld [vmem:[%s3103 + $0x30] sm:$0xf]
    %v3117 = vld [vmem:[%s3103 + $0x34] sm:$0xf]
    %v3118 = vld [vmem:[%s3103 + $0x38] sm:$0xf]
    %v3119 = vld [vmem:[%s3103 + $0x3c] sm:$0xf]
    %s3120 = scalar_lea.vmem %s11, 1
    %v3121 = vld [vmem:[%s3120] sm:$0x1]
    %v3123 = vperm.slane %v3121, 0
    %v3141 = vunpack.c.l.b16 %v3104
    %v3142 = vunpack.c.l.b16 %v3105
    %v3143 = vunpack.c.l.b16 %v3106
    %v3144 = vunpack.c.l.b16 %v3107
    %v3145 = vunpack.c.l.b16 %v3108
    %v3146 = vunpack.c.l.b16 %v3109
    %v3147 = vunpack.c.l.b16 %v3110
    %v3148 = vunpack.c.l.b16 %v3111
    %v3149 = vunpack.c.l.b16 %v3112
    %v3150 = vunpack.c.l.b16 %v3113
    %v3151 = vunpack.c.l.b16 %v3114
    %v3152 = vunpack.c.l.b16 %v3115
    %v3153 = vunpack.c.l.b16 %v3116
    %v3154 = vunpack.c.l.b16 %v3117
    %v3155 = vunpack.c.l.b16 %v3118
    %v3156 = vunpack.c.l.b16 %v3119
    %v3157 = vpack.c.b16 %v3142, %v3141
    %v3158 = vpack.c.b16 %v3144, %v3143
    %v3159 = vpack.c.b16 %v3146, %v3145
    %v3160 = vpack.c.b16 %v3148, %v3147
    %v3161 = vpack.c.b16 %v3150, %v3149
    %v3162 = vpack.c.b16 %v3152, %v3151
    %v3163 = vpack.c.b16 %v3154, %v3153
    %v3164 = vpack.c.b16 %v3156, %v3155
    %3173 = vmatpush.bf16.msra.mxu0 %v3164
    %3174 = vmatpush.bf16.msra.mxu0 %v3163
    %3175 = vmatpush.bf16.msra.mxu0 %v3162
    %3176 = vmatpush.bf16.msra.mxu0 %v3161
    %3177 = vmatpush.bf16.msra.mxu0 %v3160
    %3178 = vmatpush.bf16.msra.mxu0 %v3159
    %3179 = vmatpush.bf16.msra.mxu0 %v3158
    %3180 = vmatpush.bf16.msra.mxu0 %v3157
    %3181 = vmatmul.bf16.gmra.mxu0 %v3101
    %v3182 = vpop.f32.mrf.mxu0
    %v3183 = vadd.f32 %v3123, %v3182
    %v3184 = vpop.f32.mrf.mxu0
    %v3185 = vadd.f32 %v3123, %v3184
    %3186 = vmatmul.bf16.gmra.mxu0 %v3102
    %v3187 = vpop.f32.mrf.mxu0
    %v3188 = vadd.f32 %v3123, %v3187
    %v3189 = vpop.f32.mrf.mxu0
    %v3190 = vadd.f32 %v3123, %v3189
    %3191 = vdwg.mxu0
    %v3192 = vadd.f32 %v2012, %v3183
    %v3193 = vadd.f32 %v2013, %v3185
    %v3194 = vadd.f32 %v2014, %v3188
    %v3195 = vadd.f32 %v2015, %v3190
    %s3196 = scalar_lea.vmem %s12, 1
    %v3197 = vld [vmem:[%s3196] sm:$0x1]
    %s3198 = scalar_lea.vmem %s13, 1
    %v3199 = vld [vmem:[%s3198] sm:$0x1]
    %3200 = vadd.xlane.f32.xlu0 %v3192
    %v3201 = vpop.xlane.xlu0 %3200
    %3202 = vadd.xlane.f32.xlu0 %v3193
    %v3203 = vpop.xlane.xlu0 %3202
    %3204 = vadd.xlane.f32.xlu0 %v3194
    %v3205 = vpop.xlane.xlu0 %3204
    %3206 = vadd.xlane.f32.xlu0 %v3195
    %v3207 = vpop.xlane.xlu0 %3206
    %v3208 = vmul.f32 %v3201, %v161
    %v3209 = vmul.f32 %v3203, %v161
    %v3210 = vmul.f32 %v3205, %v161
    %v3211 = vmul.f32 %v3207, %v161
    %v3212 = vsub.f32 %v3192, %v3208
    %v3213 = vsub.f32 %v3193, %v3209
    %v3214 = vsub.f32 %v3194, %v3210
    %v3215 = vsub.f32 %v3195, %v3211
    %v3216 = vmul.f32 %v3212, %v3212
    %v3217 = vmul.f32 %v3213, %v3213
    %v3218 = vmul.f32 %v3214, %v3214
    %v3219 = vmul.f32 %v3215, %v3215
    %3220 = vadd.xlane.f32.xlu0 %v3216
    %v3221 = vpop.xlane.xlu0 %3220
    %3222 = vadd.xlane.f32.xlu0 %v3217
    %v3223 = vpop.xlane.xlu0 %3222
    %3224 = vadd.xlane.f32.xlu0 %v3218
    %v3225 = vpop.xlane.xlu0 %3224
    %3226 = vadd.xlane.f32.xlu0 %v3219
    %v3227 = vpop.xlane.xlu0 %3226
    %v3228 = vmul.f32 %v3221, %v161
    %v3229 = vmul.f32 %v3223, %v161
    %v3230 = vmul.f32 %v3225, %v161
    %v3231 = vmul.f32 %v3227, %v161
    %v3232 = vadd.f32 %v3228, 1e-12
    %v3233 = vadd.f32 %v3229, 1e-12
    %v3234 = vadd.f32 %v3230, 1e-12
    %v3235 = vadd.f32 %v3231, 1e-12
    %v3236 = vrsqrt.pop %v3232
    %v3237 = vmul.f32 %v3236, %v3232
    %v3238 = vmul.f32 %v3237, %v3236
    %v3239 = vmul.f32 0.5, %v3238
    %v3240 = vsub.f32 1.5, %v3239
    %v3241 = vmul.f32 %v3236, %v3240
    %vm3242 = vweird.f32 %v3232
    %vm3243 = vweird.f32 %v3236
    %vm3244 = vmor %vm3242, %vm3243
    %v3245 = vsel %vm3244, %v3236, %v3241
    %v3246 = vrsqrt.pop %v3233
    %v3247 = vmul.f32 %v3246, %v3233
    %v3248 = vmul.f32 %v3247, %v3246
    %v3249 = vmul.f32 0.5, %v3248
    %v3250 = vsub.f32 1.5, %v3249
    %v3251 = vmul.f32 %v3246, %v3250
    %vm3252 = vweird.f32 %v3233
    %vm3253 = vweird.f32 %v3246
    %vm3254 = vmor %vm3252, %vm3253
    %v3255 = vsel %vm3254, %v3246, %v3251
    %v3256 = vrsqrt.pop %v3234
    %v3257 = vmul.f32 %v3256, %v3234
    %v3258 = vmul.f32 %v3257, %v3256
    %v3259 = vmul.f32 0.5, %v3258
    %v3260 = vsub.f32 1.5, %v3259
    %v3261 = vmul.f32 %v3256, %v3260
    %vm3262 = vweird.f32 %v3234
    %vm3263 = vweird.f32 %v3256
    %vm3264 = vmor %vm3262, %vm3263
    %v3265 = vsel %vm3264, %v3256, %v3261
    %v3266 = vrsqrt.pop %v3235
    %v3267 = vmul.f32 %v3266, %v3235
    %v3268 = vmul.f32 %v3267, %v3266
    %v3269 = vmul.f32 0.5, %v3268
    %v3270 = vsub.f32 1.5, %v3269
    %v3271 = vmul.f32 %v3266, %v3270
    %vm3272 = vweird.f32 %v3235
    %vm3273 = vweird.f32 %v3266
    %vm3274 = vmor %vm3272, %vm3273
    %v3275 = vsel %vm3274, %v3266, %v3271
    %v3276 = vmul.f32 %v3212, %v3245
    %v3277 = vmul.f32 %v3213, %v3255
    %v3278 = vmul.f32 %v3214, %v3265
    %v3279 = vmul.f32 %v3215, %v3275
    %v3281 = vperm.slane %v3197, 0
    %v3283 = vmul.f32 %v3276, %v3281
    %v3284 = vmul.f32 %v3277, %v3281
    %v3285 = vmul.f32 %v3278, %v3281
    %v3286 = vmul.f32 %v3279, %v3281
    %v3288 = vperm.slane %v3199, 0
    %v3290 = vadd.f32 %v3283, %v3288
    %v3291 = vadd.f32 %v3284, %v3288
    %v3292 = vadd.f32 %v3285, %v3288
    %v3293 = vadd.f32 %v3286, %v3288
    %v3294 = vpack.c.bf16 %v3291, %v3290
    %v3295 = vpack.c.bf16 %v3293, %v3292
    %s3296 = scalar_lea.vmem %s14, 128
    %v3297 = vld [vmem:[%s3296] sm:$0xff]
    %v3298 = vld [vmem:[%s3296 + $0x8] sm:$0xff]
    %v3299 = vld [vmem:[%s3296 + $0x10] sm:$0xff]
    %v3300 = vld [vmem:[%s3296 + $0x18] sm:$0xff]
    %v3301 = vld [vmem:[%s3296 + $0x20] sm:$0xff]
    %v3302 = vld [vmem:[%s3296 + $0x28] sm:$0xff]
    %v3303 = vld [vmem:[%s3296 + $0x30] sm:$0xff]
    %v3304 = vld [vmem:[%s3296 + $0x38] sm:$0xff]
    %v3305 = vld [vmem:[%s3296 + $0x40] sm:$0xff]
    %v3306 = vld [vmem:[%s3296 + $0x48] sm:$0xff]
    %v3307 = vld [vmem:[%s3296 + $0x50] sm:$0xff]
    %v3308 = vld [vmem:[%s3296 + $0x58] sm:$0xff]
    %v3309 = vld [vmem:[%s3296 + $0x60] sm:$0xff]
    %v3310 = vld [vmem:[%s3296 + $0x68] sm:$0xff]
    %v3311 = vld [vmem:[%s3296 + $0x70] sm:$0xff]
    %v3312 = vld [vmem:[%s3296 + $0x78] sm:$0xff]
    %s3313 = scalar_lea.vmem %s15, 2
    %v3314 = vld [vmem:[%s3313] sm:$0x3]
    %v3316 = vperm.slane %v3314, 0
    %v3317 = vperm.slane %v3314, 1
    %v3336 = vunpack.c.l.b16 %v3297
    %v3337 = vunpack.c.h.b16 %v3297
    %v3338 = vunpack.c.l.b16 %v3298
    %v3339 = vunpack.c.h.b16 %v3298
    %v3340 = vunpack.c.l.b16 %v3299
    %v3341 = vunpack.c.h.b16 %v3299
    %v3342 = vunpack.c.l.b16 %v3300
    %v3343 = vunpack.c.h.b16 %v3300
    %v3344 = vunpack.c.l.b16 %v3301
    %v3345 = vunpack.c.h.b16 %v3301
    %v3346 = vunpack.c.l.b16 %v3302
    %v3347 = vunpack.c.h.b16 %v3302
    %v3348 = vunpack.c.l.b16 %v3303
    %v3349 = vunpack.c.h.b16 %v3303
    %v3350 = vunpack.c.l.b16 %v3304
    %v3351 = vunpack.c.h.b16 %v3304
    %v3352 = vunpack.c.l.b16 %v3305
    %v3353 = vunpack.c.h.b16 %v3305
    %v3354 = vunpack.c.l.b16 %v3306
    %v3355 = vunpack.c.h.b16 %v3306
    %v3356 = vunpack.c.l.b16 %v3307
    %v3357 = vunpack.c.h.b16 %v3307
    %v3358 = vunpack.c.l.b16 %v3308
    %v3359 = vunpack.c.h.b16 %v3308
    %v3360 = vunpack.c.l.b16 %v3309
    %v3361 = vunpack.c.h.b16 %v3309
    %v3362 = vunpack.c.l.b16 %v3310
    %v3363 = vunpack.c.h.b16 %v3310
    %v3364 = vunpack.c.l.b16 %v3311
    %v3365 = vunpack.c.h.b16 %v3311
    %v3366 = vunpack.c.l.b16 %v3312
    %v3367 = vunpack.c.h.b16 %v3312
    %v3368 = vpack.c.b16 %v3338, %v3336
    %v3369 = vpack.c.b16 %v3339, %v3337
    %v3370 = vpack.c.b16 %v3342, %v3340
    %v3371 = vpack.c.b16 %v3343, %v3341
    %v3372 = vpack.c.b16 %v3346, %v3344
    %v3373 = vpack.c.b16 %v3347, %v3345
    %v3374 = vpack.c.b16 %v3350, %v3348
    %v3375 = vpack.c.b16 %v3351, %v3349
    %v3376 = vpack.c.b16 %v3354, %v3352
    %v3377 = vpack.c.b16 %v3355, %v3353
    %v3378 = vpack.c.b16 %v3358, %v3356
    %v3379 = vpack.c.b16 %v3359, %v3357
    %v3380 = vpack.c.b16 %v3362, %v3360
    %v3381 = vpack.c.b16 %v3363, %v3361
    %v3382 = vpack.c.b16 %v3366, %v3364
    %v3383 = vpack.c.b16 %v3367, %v3365
    %3400 = vmatpush.bf16.msra.mxu0 %v3382
    %3401 = vmatpush.bf16.msra.mxu0 %v3380
    %3402 = vmatpush.bf16.msra.mxu0 %v3378
    %3403 = vmatpush.bf16.msra.mxu0 %v3376
    %3404 = vmatpush.bf16.msra.mxu0 %v3374
    %3405 = vmatpush.bf16.msra.mxu0 %v3372
    %3406 = vmatpush.bf16.msra.mxu0 %v3370
    %3407 = vmatpush.bf16.msra.mxu0 %v3368
    %3408 = vmatmul.bf16.gmra.mxu0 %v3294
    %v3409 = vpop.f32.mrf.mxu0
    %v3410 = vadd.f32 %v3316, %v3409
    %v3411 = vpop.f32.mrf.mxu0
    %v3412 = vadd.f32 %v3316, %v3411
    %3413 = vmatmul.bf16.gmra.mxu0 %v3295
    %v3414 = vpop.f32.mrf.mxu0
    %v3415 = vadd.f32 %v3316, %v3414
    %v3416 = vpop.f32.mrf.mxu0
    %v3417 = vadd.f32 %v3316, %v3416
    %3418 = vdwg.mxu0
    %3419 = vmatpush.bf16.msra.mxu0 %v3383
    %3420 = vmatpush.bf16.msra.mxu0 %v3381
    %3421 = vmatpush.bf16.msra.mxu0 %v3379
    %3422 = vmatpush.bf16.msra.mxu0 %v3377
    %3423 = vmatpush.bf16.msra.mxu0 %v3375
    %3424 = vmatpush.bf16.msra.mxu0 %v3373
    %3425 = vmatpush.bf16.msra.mxu0 %v3371
    %3426 = vmatpush.bf16.msra.mxu0 %v3369
    %3427 = vmatmul.bf16.gmra.mxu0 %v3294
    %v3428 = vpop.f32.mrf.mxu0
    %v3429 = vadd.f32 %v3317, %v3428
    %v3430 = vpop.f32.mrf.mxu0
    %v3431 = vadd.f32 %v3317, %v3430
    %3432 = vmatmul.bf16.gmra.mxu0 %v3295
    %v3433 = vpop.f32.mrf.mxu0
    %v3434 = vadd.f32 %v3317, %v3433
    %v3435 = vpop.f32.mrf.mxu0
    %v3436 = vadd.f32 %v3317, %v3435
    %3437 = vdwg.mxu0
    %v3438 = vmul.f32 %v3410, 0.5
    %v3439 = vmul.f32 %v3429, 0.5
    %v3440 = vmul.f32 %v3412, 0.5
    %v3441 = vmul.f32 %v3431, 0.5
    %v3442 = vmul.f32 %v3415, 0.5
    %v3443 = vmul.f32 %v3434, 0.5
    %v3444 = vmul.f32 %v3417, 0.5
    %v3445 = vmul.f32 %v3436, 0.5
    %v3446 = vmul.f32 %v3410, 0.044715
    %v3447 = vmul.f32 %v3429, 0.044715
    %v3448 = vmul.f32 %v3412, 0.044715
    %v3449 = vmul.f32 %v3431, 0.044715
    %v3450 = vmul.f32 %v3415, 0.044715
    %v3451 = vmul.f32 %v3434, 0.044715
    %v3452 = vmul.f32 %v3417, 0.044715
    %v3453 = vmul.f32 %v3436, 0.044715
    %v3454 = vmul.f32 %v3446, %v3410
    %v3455 = vmul.f32 %v3447, %v3429
    %v3456 = vmul.f32 %v3448, %v3412
    %v3457 = vmul.f32 %v3449, %v3431
    %v3458 = vmul.f32 %v3450, %v3415
    %v3459 = vmul.f32 %v3451, %v3434
    %v3460 = vmul.f32 %v3452, %v3417
    %v3461 = vmul.f32 %v3453, %v3436
    %v3462 = vmul.f32 %v3454, %v3410
    %v3463 = vmul.f32 %v3455, %v3429
    %v3464 = vmul.f32 %v3456, %v3412
    %v3465 = vmul.f32 %v3457, %v3431
    %v3466 = vmul.f32 %v3458, %v3415
    %v3467 = vmul.f32 %v3459, %v3434
    %v3468 = vmul.f32 %v3460, %v3417
    %v3469 = vmul.f32 %v3461, %v3436
    %v3470 = vadd.f32 %v3410, %v3462
    %v3471 = vadd.f32 %v3429, %v3463
    %v3472 = vadd.f32 %v3412, %v3464
    %v3473 = vadd.f32 %v3431, %v3465
    %v3474 = vadd.f32 %v3415, %v3466
    %v3475 = vadd.f32 %v3434, %v3467
    %v3476 = vadd.f32 %v3417, %v3468
    %v3477 = vadd.f32 %v3436, %v3469
    %v3478 = vmul.f32 %v3470, 0.7978846
    %v3479 = vmul.f32 %v3471, 0.7978846
    %v3480 = vmul.f32 %v3472, 0.7978846
    %v3481 = vmul.f32 %v3473, 0.7978846
    %v3482 = vmul.f32 %v3474, 0.7978846
    %v3483 = vmul.f32 %v3475, 0.7978846
    %v3484 = vmul.f32 %v3476, 0.7978846
    %v3485 = vmul.f32 %v3477, 0.7978846
    %v3486 = vtanh.pop %v3478
    %v3487 = vtanh.pop %v3479
    %v3488 = vtanh.pop %v3480
    %v3489 = vtanh.pop %v3481
    %v3490 = vtanh.pop %v3482
    %v3491 = vtanh.pop %v3483
    %v3492 = vtanh.pop %v3484
    %v3493 = vtanh.pop %v3485
    %v3494 = vadd.f32 %v3486, 1.0
    %v3495 = vadd.f32 %v3487, 1.0
    %v3496 = vadd.f32 %v3488, 1.0
    %v3497 = vadd.f32 %v3489, 1.0
    %v3498 = vadd.f32 %v3490, 1.0
    %v3499 = vadd.f32 %v3491, 1.0
    %v3500 = vadd.f32 %v3492, 1.0
    %v3501 = vadd.f32 %v3493, 1.0
    %v3502 = vmul.f32 %v3438, %v3494
    %v3503 = vmul.f32 %v3439, %v3495
    %v3504 = vmul.f32 %v3440, %v3496
    %v3505 = vmul.f32 %v3441, %v3497
    %v3506 = vmul.f32 %v3442, %v3498
    %v3507 = vmul.f32 %v3443, %v3499
    %v3508 = vmul.f32 %v3444, %v3500
    %v3509 = vmul.f32 %v3445, %v3501
    %v3510 = vpack.c.bf16 %v3504, %v3502
    %v3511 = vpack.c.bf16 %v3505, %v3503
    %v3512 = vpack.c.bf16 %v3508, %v3506
    %v3513 = vpack.c.bf16 %v3509, %v3507
    %s3514 = scalar_lea.vmem %s16, 128
    %v3515 = vld [vmem:[%s3514] sm:$0xf]
    %v3516 = vld [vmem:[%s3514 + $0x4] sm:$0xf]
    %v3517 = vld [vmem:[%s3514 + $0x8] sm:$0xf]
    %v3518 = vld [vmem:[%s3514 + $0xc] sm:$0xf]
    %v3519 = vld [vmem:[%s3514 + $0x10] sm:$0xf]
    %v3520 = vld [vmem:[%s3514 + $0x14] sm:$0xf]
    %v3521 = vld [vmem:[%s3514 + $0x18] sm:$0xf]
    %v3522 = vld [vmem:[%s3514 + $0x1c] sm:$0xf]
    %v3523 = vld [vmem:[%s3514 + $0x20] sm:$0xf]
    %v3524 = vld [vmem:[%s3514 + $0x24] sm:$0xf]
    %v3525 = vld [vmem:[%s3514 + $0x28] sm:$0xf]
    %v3526 = vld [vmem:[%s3514 + $0x2c] sm:$0xf]
    %v3527 = vld [vmem:[%s3514 + $0x30] sm:$0xf]
    %v3528 = vld [vmem:[%s3514 + $0x34] sm:$0xf]
    %v3529 = vld [vmem:[%s3514 + $0x38] sm:$0xf]
    %v3530 = vld [vmem:[%s3514 + $0x3c] sm:$0xf]
    %v3531 = vld [vmem:[%s3514 + $0x40] sm:$0xf]
    %v3532 = vld [vmem:[%s3514 + $0x44] sm:$0xf]
    %v3533 = vld [vmem:[%s3514 + $0x48] sm:$0xf]
    %v3534 = vld [vmem:[%s3514 + $0x4c] sm:$0xf]
    %v3535 = vld [vmem:[%s3514 + $0x50] sm:$0xf]
    %v3536 = vld [vmem:[%s3514 + $0x54] sm:$0xf]
    %v3537 = vld [vmem:[%s3514 + $0x58] sm:$0xf]
    %v3538 = vld [vmem:[%s3514 + $0x5c] sm:$0xf]
    %v3539 = vld [vmem:[%s3514 + $0x60] sm:$0xf]
    %v3540 = vld [vmem:[%s3514 + $0x64] sm:$0xf]
    %v3541 = vld [vmem:[%s3514 + $0x68] sm:$0xf]
    %v3542 = vld [vmem:[%s3514 + $0x6c] sm:$0xf]
    %v3543 = vld [vmem:[%s3514 + $0x70] sm:$0xf]
    %v3544 = vld [vmem:[%s3514 + $0x74] sm:$0xf]
    %v3545 = vld [vmem:[%s3514 + $0x78] sm:$0xf]
    %v3546 = vld [vmem:[%s3514 + $0x7c] sm:$0xf]
    %s3547 = scalar_lea.vmem %s17, 1
    %v3548 = vld [vmem:[%s3547] sm:$0x1]
    %v3550 = vperm.slane %v3548, 0
    %v3584 = vunpack.c.l.b16 %v3515
    %v3585 = vunpack.c.l.b16 %v3516
    %v3586 = vunpack.c.l.b16 %v3517
    %v3587 = vunpack.c.l.b16 %v3518
    %v3588 = vunpack.c.l.b16 %v3519
    %v3589 = vunpack.c.l.b16 %v3520
    %v3590 = vunpack.c.l.b16 %v3521
    %v3591 = vunpack.c.l.b16 %v3522
    %v3592 = vunpack.c.l.b16 %v3523
    %v3593 = vunpack.c.l.b16 %v3524
    %v3594 = vunpack.c.l.b16 %v3525
    %v3595 = vunpack.c.l.b16 %v3526
    %v3596 = vunpack.c.l.b16 %v3527
    %v3597 = vunpack.c.l.b16 %v3528
    %v3598 = vunpack.c.l.b16 %v3529
    %v3599 = vunpack.c.l.b16 %v3530
    %v3600 = vunpack.c.l.b16 %v3531
    %v3601 = vunpack.c.l.b16 %v3532
    %v3602 = vunpack.c.l.b16 %v3533
    %v3603 = vunpack.c.l.b16 %v3534
    %v3604 = vunpack.c.l.b16 %v3535
    %v3605 = vunpack.c.l.b16 %v3536
    %v3606 = vunpack.c.l.b16 %v3537
    %v3607 = vunpack.c.l.b16 %v3538
    %v3608 = vunpack.c.l.b16 %v3539
    %v3609 = vunpack.c.l.b16 %v3540
    %v3610 = vunpack.c.l.b16 %v3541
    %v3611 = vunpack.c.l.b16 %v3542
    %v3612 = vunpack.c.l.b16 %v3543
    %v3613 = vunpack.c.l.b16 %v3544
    %v3614 = vunpack.c.l.b16 %v3545
    %v3615 = vunpack.c.l.b16 %v3546
    %v3616 = vpack.c.b16 %v3585, %v3584
    %v3617 = vpack.c.b16 %v3587, %v3586
    %v3618 = vpack.c.b16 %v3589, %v3588
    %v3619 = vpack.c.b16 %v3591, %v3590
    %v3620 = vpack.c.b16 %v3593, %v3592
    %v3621 = vpack.c.b16 %v3595, %v3594
    %v3622 = vpack.c.b16 %v3597, %v3596
    %v3623 = vpack.c.b16 %v3599, %v3598
    %v3624 = vpack.c.b16 %v3601, %v3600
    %v3625 = vpack.c.b16 %v3603, %v3602
    %v3626 = vpack.c.b16 %v3605, %v3604
    %v3627 = vpack.c.b16 %v3607, %v3606
    %v3628 = vpack.c.b16 %v3609, %v3608
    %v3629 = vpack.c.b16 %v3611, %v3610
    %v3630 = vpack.c.b16 %v3613, %v3612
    %v3631 = vpack.c.b16 %v3615, %v3614
    %3648 = vmatpush.bf16.msra.mxu0 %v3623
    %3649 = vmatpush.bf16.msra.mxu0 %v3622
    %3650 = vmatpush.bf16.msra.mxu0 %v3621
    %3651 = vmatpush.bf16.msra.mxu0 %v3620
    %3652 = vmatpush.bf16.msra.mxu0 %v3619
    %3653 = vmatpush.bf16.msra.mxu0 %v3618
    %3654 = vmatpush.bf16.msra.mxu0 %v3617
    %3655 = vmatpush.bf16.msra.mxu0 %v3616
    %3656 = vmatmul.bf16.gmra.mxu0 %v3510
    %v3657 = vpop.f32.mrf.mxu0
    %v3658 = vadd.f32 %v3550, %v3657
    %v3659 = vpop.f32.mrf.mxu0
    %3660 = vmatmul.bf16.gmra.mxu0 %v3512
    %v3661 = vpop.f32.mrf.mxu0
    %v3662 = vadd.f32 %v3550, %v3661
    %v3663 = vpop.f32.mrf.mxu0
    %3664 = vdwg.mxu0
    %3665 = vmatpush.bf16.msra.mxu0 %v3631
    %3666 = vmatpush.bf16.msra.mxu0 %v3630
    %3667 = vmatpush.bf16.msra.mxu0 %v3629
    %3668 = vmatpush.bf16.msra.mxu0 %v3628
    %3669 = vmatpush.bf16.msra.mxu0 %v3627
    %3670 = vmatpush.bf16.msra.mxu0 %v3626
    %3671 = vmatpush.bf16.msra.mxu0 %v3625
    %3672 = vmatpush.bf16.msra.mxu0 %v3624
    %3673 = vmatmul.bf16.gmra.mxu0 %v3511
    %v3674 = vpop.f32.mrf.mxu0
    %v3675 = vadd.f32 %v3658, %v3674
    %v3676 = vpop.f32.mrf.mxu0
    %3677 = vmatmul.bf16.gmra.mxu0 %v3513
    %v3678 = vpop.f32.mrf.mxu0
    %v3679 = vadd.f32 %v3662, %v3678
    %v3680 = vpop.f32.mrf.mxu0
    %3681 = vdwg.mxu0
    %v3682 = vadd.f32 %v3290, %v3675
    %v3683 = vadd.f32 %v3292, %v3679
    %s3684 = scalar_lea.vmem %s18, 1
    %v3685 = vld [vmem:[%s3684] sm:$0x1]
    %s3686 = scalar_lea.vmem %s19, 1
    %v3687 = vld [vmem:[%s3686] sm:$0x1]
    %3688 = vadd.xlane.f32.xlu0 %v3682
    %v3689 = vpop.xlane.xlu0 %3688
    %3690 = vadd.xlane.f32.xlu0 %v3683
    %v3691 = vpop.xlane.xlu0 %3690
    %v3692 = vmul.f32 %v3689, %v161
    %v3693 = vmul.f32 %v3691, %v161
    %v3694 = vsub.f32 %v3682, %v3692
    %v3695 = vsub.f32 %v3683, %v3693
    %v3696 = vmul.f32 %v3694, %v3694
    %v3697 = vmul.f32 %v3695, %v3695
    %3698 = vadd.xlane.f32.xlu0 %v3696
    %v3699 = vpop.xlane.xlu0 %3698
    %3700 = vadd.xlane.f32.xlu0 %v3697
    %v3701 = vpop.xlane.xlu0 %3700
    %v3702 = vmul.f32 %v3699, %v161
    %v3703 = vmul.f32 %v3701, %v161
    %v3704 = vadd.f32 %v3702, 1e-12
    %v3705 = vadd.f32 %v3703, 1e-12
    %v3706 = vrsqrt.pop %v3704
    %v3707 = vmul.f32 %v3706, %v3704
    %v3708 = vmul.f32 %v3707, %v3706
    %v3709 = vmul.f32 0.5, %v3708
    %v3710 = vsub.f32 1.5, %v3709
    %v3711 = vmul.f32 %v3706, %v3710
    %vm3712 = vweird.f32 %v3704
    %vm3713 = vweird.f32 %v3706
    %vm3714 = vmor %vm3712, %vm3713
    %v3715 = vsel %vm3714, %v3706, %v3711
    %v3716 = vrsqrt.pop %v3705
    %v3717 = vmul.f32 %v3716, %v3705
    %v3718 = vmul.f32 %v3717, %v3716
    %v3719 = vmul.f32 0.5, %v3718
    %v3720 = vsub.f32 1.5, %v3719
    %v3721 = vmul.f32 %v3716, %v3720
    %vm3722 = vweird.f32 %v3705
    %vm3723 = vweird.f32 %v3716
    %vm3724 = vmor %vm3722, %vm3723
    %v3725 = vsel %vm3724, %v3716, %v3721
    %v3726 = vmul.f32 %v3694, %v3715
    %v3727 = vmul.f32 %v3695, %v3725
    %v3729 = vperm.slane %v3685, 0
    %v3731 = vmul.f32 %v3726, %v3729
    %v3732 = vmul.f32 %v3727, %v3729
    %v3734 = vperm.slane %v3687, 0
    %v3736 = vadd.f32 %v3731, %v3734
    %v3737 = vadd.f32 %v3732, %v3734
    %v3739 = vrot.slane %v3737, 7
    %vm3741 = vcmask 1040384
    %v3742 = vsel %vm3741, %v3736, %v3739
    %v3743 = vpack.c.bf16 %v3742, %v3742
    %v3744 = vld [vmem:[#allocation8] sm:$0xf]
    %v3745 = vld [vmem:[#allocation8 + $0x4] sm:$0xf]
    %v3746 = vld [vmem:[#allocation8 + $0x8] sm:$0xf]
    %v3747 = vld [vmem:[#allocation8 + $0xc] sm:$0xf]
    %v3748 = vld [vmem:[#allocation8 + $0x10] sm:$0xf]
    %v3749 = vld [vmem:[#allocation8 + $0x14] sm:$0xf]
    %v3750 = vld [vmem:[#allocation8 + $0x18] sm:$0xf]
    %v3751 = vld [vmem:[#allocation8 + $0x1c] sm:$0xf]
    %v3752 = vld [vmem:[#allocation8 + $0x20] sm:$0xf]
    %v3753 = vld [vmem:[#allocation8 + $0x24] sm:$0xf]
    %v3754 = vld [vmem:[#allocation8 + $0x28] sm:$0xf]
    %v3755 = vld [vmem:[#allocation8 + $0x2c] sm:$0xf]
    %v3756 = vld [vmem:[#allocation8 + $0x30] sm:$0xf]
    %v3757 = vld [vmem:[#allocation8 + $0x34] sm:$0xf]
    %v3758 = vld [vmem:[#allocation8 + $0x38] sm:$0xf]
    %v3759 = vld [vmem:[#allocation8 + $0x3c] sm:$0xf]
    %v3760 = vld [vmem:[%s21] sm:$0x1]
    %v3762 = vperm.slane %v3760, 0
    %v3780 = vunpack.c.l.b16 %v3744
    %v3781 = vunpack.c.l.b16 %v3745
    %v3782 = vunpack.c.l.b16 %v3746
    %v3783 = vunpack.c.l.b16 %v3747
    %v3784 = vunpack.c.l.b16 %v3748
    %v3785 = vunpack.c.l.b16 %v3749
    %v3786 = vunpack.c.l.b16 %v3750
    %v3787 = vunpack.c.l.b16 %v3751
    %v3788 = vunpack.c.l.b16 %v3752
    %v3789 = vunpack.c.l.b16 %v3753
    %v3790 = vunpack.c.l.b16 %v3754
    %v3791 = vunpack.c.l.b16 %v3755
    %v3792 = vunpack.c.l.b16 %v3756
    %v3793 = vunpack.c.l.b16 %v3757
    %v3794 = vunpack.c.l.b16 %v3758
    %v3795 = vunpack.c.l.b16 %v3759
    %v3796 = vpack.c.b16 %v3781, %v3780
    %v3797 = vpack.c.b16 %v3783, %v3782
    %v3798 = vpack.c.b16 %v3785, %v3784
    %v3799 = vpack.c.b16 %v3787, %v3786
    %v3800 = vpack.c.b16 %v3789, %v3788
    %v3801 = vpack.c.b16 %v3791, %v3790
    %v3802 = vpack.c.b16 %v3793, %v3792
    %v3803 = vpack.c.b16 %v3795, %v3794
    %3812 = vmatpush.bf16.msra.mxu0 %v3803
    %3813 = vmatpush.bf16.msra.mxu0 %v3802
    %3814 = vmatpush.bf16.msra.mxu0 %v3801
    %3815 = vmatpush.bf16.msra.mxu0 %v3800
    %3816 = vmatpush.bf16.msra.mxu0 %v3799
    %3817 = vmatpush.bf16.msra.mxu0 %v3798
    %3818 = vmatpush.bf16.msra.mxu0 %v3797
    %3819 = vmatpush.bf16.msra.mxu0 %v3796
    %3820 = vmatmul.bf16.gmra.mxu0 %v3743
    %v3821 = vpop.f32.mrf.mxu0
    %v3822 = vadd.f32 %v3762, %v3821
    %v3823 = vpop.f32.mrf.mxu0
    %3824 = vdwg.mxu0
    %v3825 = vtanh.pop %v3822
    %v3826 = vpack.c.bf16 %v3825, %v3825
    %v3827 = vld [vmem:[%s22] sm:$0xf]
    %v3828 = vld [vmem:[%s22 + $0x4] sm:$0xf]
    %v3829 = vld [vmem:[%s22 + $0x8] sm:$0xf]
    %v3830 = vld [vmem:[%s22 + $0xc] sm:$0xf]
    %v3831 = vld [vmem:[%s22 + $0x10] sm:$0xf]
    %v3832 = vld [vmem:[%s22 + $0x14] sm:$0xf]
    %v3833 = vld [vmem:[%s22 + $0x18] sm:$0xf]
    %v3834 = vld [vmem:[%s22 + $0x1c] sm:$0xf]
    %v3835 = vld [vmem:[%s22 + $0x20] sm:$0xf]
    %v3836 = vld [vmem:[%s22 + $0x24] sm:$0xf]
    %v3837 = vld [vmem:[%s22 + $0x28] sm:$0xf]
    %v3838 = vld [vmem:[%s22 + $0x2c] sm:$0xf]
    %v3839 = vld [vmem:[%s22 + $0x30] sm:$0xf]
    %v3840 = vld [vmem:[%s22 + $0x34] sm:$0xf]
    %v3841 = vld [vmem:[%s22 + $0x38] sm:$0xf]
    %v3842 = vld [vmem:[%s22 + $0x3c] sm:$0xf]
    %v3843 = vld [vmem:[%s23] sm:$0x1]
    %v3845 = vperm.slane %v3843, 0
    %v3863 = vunpack.c.l.b16 %v3827
    %v3864 = vunpack.c.l.b16 %v3828
    %v3865 = vunpack.c.l.b16 %v3829
    %v3866 = vunpack.c.l.b16 %v3830
    %v3867 = vunpack.c.l.b16 %v3831
    %v3868 = vunpack.c.l.b16 %v3832
    %v3869 = vunpack.c.l.b16 %v3833
    %v3870 = vunpack.c.l.b16 %v3834
    %v3871 = vunpack.c.l.b16 %v3835
    %v3872 = vunpack.c.l.b16 %v3836
    %v3873 = vunpack.c.l.b16 %v3837
    %v3874 = vunpack.c.l.b16 %v3838
    %v3875 = vunpack.c.l.b16 %v3839
    %v3876 = vunpack.c.l.b16 %v3840
    %v3877 = vunpack.c.l.b16 %v3841
    %v3878 = vunpack.c.l.b16 %v3842
    %v3879 = vpack.c.b16 %v3864, %v3863
    %v3880 = vpack.c.b16 %v3866, %v3865
    %v3881 = vpack.c.b16 %v3868, %v3867
    %v3882 = vpack.c.b16 %v3870, %v3869
    %v3883 = vpack.c.b16 %v3872, %v3871
    %v3884 = vpack.c.b16 %v3874, %v3873
    %v3885 = vpack.c.b16 %v3876, %v3875
    %v3886 = vpack.c.b16 %v3878, %v3877
    %3895 = vmatpush.bf16.msra.mxu0 %v3886
    %3896 = vmatpush.bf16.msra.mxu0 %v3885
    %3897 = vmatpush.bf16.msra.mxu0 %v3884
    %3898 = vmatpush.bf16.msra.mxu0 %v3883
    %3899 = vmatpush.bf16.msra.mxu0 %v3882
    %3900 = vmatpush.bf16.msra.mxu0 %v3881
    %3901 = vmatpush.bf16.msra.mxu0 %v3880
    %3902 = vmatpush.bf16.msra.mxu0 %v3879
    %3903 = vmatmul.bf16.gmra.mxu0 %v3826
    %v3904 = vpop.f32.mrf.mxu0
    %v3905 = vadd.f32 %v3845, %v3904
    %v3906 = vpop.f32.mrf.mxu0
    %3907 = vdwg.mxu0
    %vm3908 = vcmask 9216
    %3909 = vst.msk [vmem:[#allocation10] sm:$0x3] %vm3908, %v3905
    // Predicated region
    $region114: #{bert_classifier_forward.1} parent=1 // pred_check
      _
    $region115: #{bert_classifier_forward.1} parent=1 // pred_check_branch
      %3911 = sbr.rel (0) target = $region117
    $region116: #{bert_classifier_forward.1} parent=1 // pred_region
      %3913 = vsyncadd [#allocation4], 0
      %s3915 = sshll.u32 [#allocation10], 4
      %s3916 = int_to_ptr.vmem [resolvable:$true] %s3915
      %s3917 = sshll.u32 %s24, 4
      %s3918 = int_to_ptr.hbm [resolvable:$true] %s3917
      %3920 = dma.vmem_to_hbm [thread:$0]  %s3916, 32, %s3918, [#allocation4]
    $region117: #{bert_classifier_forward.1} parent=1 // pred_fallthru
      _
    // Predicated region
    $region118: #{bert_classifier_forward.1} parent=1 // pred_check
      _
    $region119: #{bert_classifier_forward.1} parent=1 // pred_check_branch
      %3922 = sbr.rel (0) target = $region121
    $region120: #{bert_classifier_forward.1} parent=1 // pred_region
      %3924 = dma.done [#allocation4], 32
    $region121: #{bert_classifier_forward.1} parent=1 // pred_fallthru
      _
    %3925 = vsyncpa [#allocation3], 1
    %3926 = vsyncpa [#allocation6], 1
    %3927 = vsyncpa [#allocation9], 1
    %3928 = vsyncpa [#allocation4], 1

</llo_original>
